<compile_context>
chip_gen: v7x
topology: tpu7x:2x2x1
jax: 0.10.0
libtpu: 0.0.40
codegen_flags: <defaults>
</compile_context>

<pallas_src>
import math

import jax
import jax.numpy as jnp
from jax.experimental import pallas as pl
from jax.experimental.pallas import tpu as pltpu

NUM_FEATURES = 784
HIDDEN_1 = 412
HIDDEN_2 = 512
NUM_CLASSES = 10

HIDDEN_1_PAD = 512   # 412 padded up to a lane multiple (128)
CLASSES_PAD = 128    # 10 padded up to a full lane group for a lane-dense output store
NEG_BIG = -1e30      # finite "minus infinity" for padded class logits (avoids inf-inf=NaN)


def _round_up(n, m):
    return ((n + m - 1) // m) * m


def _mlp_kernel(x_ref, w1_ref, b1_ref, w2_ref, b2_ref, w3_ref, b3_ref, o_ref):
    # x tile and weights arrive as bf16; all accumulation / elementwise math in f32.
    x = x_ref[...]                                                        # (TB, 784) bf16

    # fc1 + bias + ReLU   (dropout -> identity in eval mode)
    h1 = jnp.dot(x, w1_ref[...], preferred_element_type=jnp.float32)     # (TB, 512) f32
    h1 = jnp.maximum(h1 + b1_ref[...], 0.0)

    # fc2 + bias + ReLU   (dropout -> identity in eval mode)
    h2 = jnp.dot(h1.astype(jnp.bfloat16), w2_ref[...],
                 preferred_element_type=jnp.float32)                     # (TB, 512) f32
    h2 = jnp.maximum(h2 + b2_ref[...], 0.0)

    # fc3 (class dim padded to 128; padded lanes get bias = -1e30)
    logits = jnp.dot(h2.astype(jnp.bfloat16), w3_ref[...],
                     preferred_element_type=jnp.float32)                 # (TB, 128) f32
    logits = logits + b3_ref[...]

    # Numerically stable LogSoftmax over the (padded) class dimension.
    m = jnp.max(logits, axis=-1, keepdims=True)
    shifted = logits - m
    lse = jnp.log(jnp.sum(jnp.exp(shifted), axis=-1, keepdims=True))
    o_ref[...] = shifted - lse


@jax.jit
def mlp_forward(x, w1, b1, w2, b2, w3, b3):
    # Flatten arbitrary leading/spatial dims to (-1, NUM_FEATURES), like x.view(-1, 784).
    x2d = x.reshape(-1, NUM_FEATURES).astype(jnp.float32)
    batch = x2d.shape[0]

    # Batch tiling: small batches get one 128/256-row tile; large batches use
    # TB=256 tiles (good M occupancy on the 256-wide v6e/v7x MXU) pipelined over a grid.
    if batch <= 256:
        tb = _round_up(max(batch, 1), 128)
        batch_pad = tb
    else:
        tb = 256
        batch_pad = _round_up(batch, tb)
    num_tiles = batch_pad // tb

    # Pad + cast matmul operands to bf16; keep biases in f32.
    x_p = jnp.pad(x2d, ((0, batch_pad - batch), (0, 0))).astype(jnp.bfloat16)

    w1_p = jnp.pad(w1, ((0, 0), (0, HIDDEN_1_PAD - HIDDEN_1))).astype(jnp.bfloat16)
    b1_p = jnp.pad(b1.astype(jnp.float32),
                   (0, HIDDEN_1_PAD - HIDDEN_1)).reshape(1, HIDDEN_1_PAD)
    w2_p = jnp.pad(w2, ((0, HIDDEN_1_PAD - HIDDEN_1), (0, 0))).astype(jnp.bfloat16)
    b2_p = b2.astype(jnp.float32).reshape(1, HIDDEN_2)
    w3_p = jnp.pad(w3, ((0, 0), (0, CLASSES_PAD - NUM_CLASSES))).astype(jnp.bfloat16)
    b3_p = jnp.concatenate(
        [b3.astype(jnp.float32),
         jnp.full((CLASSES_PAD - NUM_CLASSES,), NEG_BIG, jnp.float32)]
    ).reshape(1, CLASSES_PAD)

    out = pl.pallas_call(
        _mlp_kernel,
        out_shape=jax.ShapeDtypeStruct((batch_pad, CLASSES_PAD), jnp.float32),
        grid_spec=pltpu.PrefetchScalarGridSpec(
            num_scalar_prefetch=0,
            grid=(num_tiles,),
            in_specs=[
                # x: tiled over the batch grid axis (pipelined HBM<->VMEM DMA).
                pl.BlockSpec((tb, NUM_FEATURES), lambda i: (i, 0)),
                # Weights / biases: constant index_map -> resident in VMEM, DMA'd once.
                pl.BlockSpec((NUM_FEATURES, HIDDEN_1_PAD), lambda i: (0, 0)),
                pl.BlockSpec((1, HIDDEN_1_PAD), lambda i: (0, 0)),
                pl.BlockSpec((HIDDEN_1_PAD, HIDDEN_2), lambda i: (0, 0)),
                pl.BlockSpec((1, HIDDEN_2), lambda i: (0, 0)),
                pl.BlockSpec((HIDDEN_2, CLASSES_PAD), lambda i: (0, 0)),
                pl.BlockSpec((1, CLASSES_PAD), lambda i: (0, 0)),
            ],
            out_specs=pl.BlockSpec((tb, CLASSES_PAD), lambda i: (i, 0)),
        ),
        compiler_params=pltpu.CompilerParams(
            dimension_semantics=("parallel",),
        ),
    )(x_p, w1_p, b1_p, w2_p, b2_p, w3_p, b3_p)

    # Strip batch padding and the padded class lanes.
    return out[:batch, :NUM_CLASSES]


def init_linear_params(key, in_features, out_features):
    """Deterministic init mimicking PyTorch nn.Linear: U(-1/sqrt(in), 1/sqrt(in)).

    Weight is returned as (in_features, out_features) — transposed vs PyTorch.
    """
    kw, kb = jax.random.split(key)
    bound = 1.0 / math.sqrt(in_features)
    w = jax.random.uniform(kw, (in_features, out_features), jnp.float32, -bound, bound)
    b = jax.random.uniform(kb, (out_features,), jnp.float32, -bound, bound)
    return w, b


def reference_forward(x, w1, b1, w2, b2, w3, b3):
    """Plain-JAX reference with the same bf16-operand / f32-accumulate matmuls."""
    x2d = x.reshape(-1, NUM_FEATURES).astype(jnp.float32)

    def bdot(a, b):
        return jnp.dot(a.astype(jnp.bfloat16), b.astype(jnp.bfloat16),
                       preferred_element_type=jnp.float32)

    h1 = jnp.maximum(bdot(x2d, w1) + b1, 0.0)
    h2 = jnp.maximum(bdot(h1, w2) + b2, 0.0)
    logits = bdot(h2, w3) + b3
    return jax.nn.log_softmax(logits, axis=-1)


if __name__ == "__main__":
    key = jax.random.PRNGKey(0)
    k_x, k1, k2, k3 = jax.random.split(key, 4)

    # Small MNIST-like batch: (batch=4, C=1, H=28, W=28) -> flattened to (4, 784).
    x = jax.random.normal(k_x, (4, 1, 28, 28), jnp.float32)

    w1, b1 = init_linear_params(k1, NUM_FEATURES, HIDDEN_1)
    w2, b2 = init_linear_params(k2, HIDDEN_1, HIDDEN_2)
    w3, b3 = init_linear_params(k3, HIDDEN_2, NUM_CLASSES)

    out = mlp_forward(x, w1, b1, w2, b2, w3, b3)
    out = jax.block_until_ready(out)

    ref = reference_forward(x, w1, b1, w2, b2, w3, b3)
    assert out.shape == (4, NUM_CLASSES), out.shape
    assert bool(jnp.allclose(out, ref, atol=1e-3, rtol=1e-3)), (
        "Pallas output mismatch vs reference"
    )

    print("KERNEL_OK")
</pallas_src>

<mosaic_0001>
module attributes {stable_mosaic.version = 11 : i64} {
  func.func @_mlp_kernel(%arg0: i32, %arg1: memref<128x784xbf16, #tpu.memory_space<vmem>>, %arg2: memref<784x512xbf16, #tpu.memory_space<vmem>>, %arg3: memref<1x512xf32, #tpu.memory_space<vmem>>, %arg4: memref<512x512xbf16, #tpu.memory_space<vmem>>, %arg5: memref<1x512xf32, #tpu.memory_space<vmem>>, %arg6: memref<512x128xbf16, #tpu.memory_space<vmem>>, %arg7: memref<1x128xf32, #tpu.memory_space<vmem>>, %arg8: memref<128x128xf32, #tpu.memory_space<vmem>>) attributes {dimension_semantics = [#tpu.dimension_semantics<parallel>], iteration_bounds = array<i64: 1>, scalar_prefetch = 0 : i64, scratch_operands = 0 : i64, tpu.core_type = #tpu.core_type<tc>, window_params = [{transform_indices = @transform_0, window_bounds = array<i64: 128, 784>}, {pipeline_mode = #tpu.pipeline_mode<synchronous>, transform_indices = @transform_1, window_bounds = array<i64: 784, 512>}, {pipeline_mode = #tpu.pipeline_mode<synchronous>, transform_indices = @transform_2, window_bounds = array<i64: 1, 512>}, {pipeline_mode = #tpu.pipeline_mode<synchronous>, transform_indices = @transform_3, window_bounds = array<i64: 512, 512>}, {pipeline_mode = #tpu.pipeline_mode<synchronous>, transform_indices = @transform_4, window_bounds = array<i64: 1, 512>}, {pipeline_mode = #tpu.pipeline_mode<synchronous>, transform_indices = @transform_5, window_bounds = array<i64: 512, 128>}, {pipeline_mode = #tpu.pipeline_mode<synchronous>, transform_indices = @transform_6, window_bounds = array<i64: 1, 128>}, {transform_indices = @transform_7, window_bounds = array<i64: 128, 128>}]} {
    %c0 = arith.constant 0 : index
    %c0_0 = arith.constant 0 : index
    %0 = vector.load %arg1[%c0, %c0_0] : memref<128x784xbf16, #tpu.memory_space<vmem>>, vector<128x784xbf16>
    %c0_1 = arith.constant 0 : index
    %c0_2 = arith.constant 0 : index
    %1 = vector.load %arg2[%c0_1, %c0_2] : memref<784x512xbf16, #tpu.memory_space<vmem>>, vector<784x512xbf16>
    %cst = arith.constant dense<0.000000e+00> : vector<128x512xf32>
    %2 = tpu.matmul %0, %1, %cst {dimension_numbers = #tpu.dot_dimension_numbers<[1], [0], [0], [1], [0, 0, 1, 1], [], []>} : vector<128x784xbf16>, vector<784x512xbf16>, vector<128x512xf32> -> vector<128x512xf32>
    %c0_3 = arith.constant 0 : index
    %c0_4 = arith.constant 0 : index
    %3 = vector.load %arg3[%c0_3, %c0_4] : memref<1x512xf32, #tpu.memory_space<vmem>>, vector<1x512xf32>
    %4 = vector.broadcast %3 : vector<1x512xf32> to vector<128x512xf32>
    %5 = arith.addf %2, %4 : vector<128x512xf32>
    %cst_5 = arith.constant 0.000000e+00 : f32
    %6 = vector.broadcast %cst_5 : f32 to vector<128x512xf32>
    %7 = arith.maximumf %5, %6 : vector<128x512xf32>
    %8 = arith.truncf %7 : vector<128x512xf32> to vector<128x512xbf16>
    %c0_6 = arith.constant 0 : index
    %c0_7 = arith.constant 0 : index
    %9 = vector.load %arg4[%c0_6, %c0_7] : memref<512x512xbf16, #tpu.memory_space<vmem>>, vector<512x512xbf16>
    %cst_8 = arith.constant dense<0.000000e+00> : vector<128x512xf32>
    %10 = tpu.matmul %8, %9, %cst_8 {dimension_numbers = #tpu.dot_dimension_numbers<[1], [0], [0], [1], [0, 0, 1, 1], [], []>} : vector<128x512xbf16>, vector<512x512xbf16>, vector<128x512xf32> -> vector<128x512xf32>
    %c0_9 = arith.constant 0 : index
    %c0_10 = arith.constant 0 : index
    %11 = vector.load %arg5[%c0_9, %c0_10] : memref<1x512xf32, #tpu.memory_space<vmem>>, vector<1x512xf32>
    %12 = vector.broadcast %11 : vector<1x512xf32> to vector<128x512xf32>
    %13 = arith.addf %10, %12 : vector<128x512xf32>
    %cst_11 = arith.constant 0.000000e+00 : f32
    %14 = vector.broadcast %cst_11 : f32 to vector<128x512xf32>
    %15 = arith.maximumf %13, %14 : vector<128x512xf32>
    %16 = arith.truncf %15 : vector<128x512xf32> to vector<128x512xbf16>
    %c0_12 = arith.constant 0 : index
    %c0_13 = arith.constant 0 : index
    %17 = vector.load %arg6[%c0_12, %c0_13] : memref<512x128xbf16, #tpu.memory_space<vmem>>, vector<512x128xbf16>
    %cst_14 = arith.constant dense<0.000000e+00> : vector<128x128xf32>
    %18 = tpu.matmul %16, %17, %cst_14 {dimension_numbers = #tpu.dot_dimension_numbers<[1], [0], [0], [1], [0, 0, 1, 1], [], []>} : vector<128x512xbf16>, vector<512x128xbf16>, vector<128x128xf32> -> vector<128x128xf32>
    %c0_15 = arith.constant 0 : index
    %c0_16 = arith.constant 0 : index
    %19 = vector.load %arg7[%c0_15, %c0_16] : memref<1x128xf32, #tpu.memory_space<vmem>>, vector<1x128xf32>
    %20 = vector.broadcast %19 : vector<1x128xf32> to vector<128x128xf32>
    %21 = arith.addf %18, %20 : vector<128x128xf32>
    %cst_17 = arith.constant dense<0xFF800000> : vector<128xf32>
    %22 = vector.multi_reduction <maximumf>, %21, %cst_17 [1] : vector<128x128xf32> to vector<128xf32>
    %23 = vector.shape_cast %22 : vector<128xf32> to vector<128x1xf32>
    %24 = vector.broadcast %23 : vector<128x1xf32> to vector<128x128xf32>
    %25 = arith.subf %21, %24 : vector<128x128xf32>
    %26 = math.exp %25 : vector<128x128xf32>
    %cst_18 = arith.constant dense<0.000000e+00> : vector<128xf32>
    %27 = vector.multi_reduction <add>, %26, %cst_18 [1] : vector<128x128xf32> to vector<128xf32>
    %28 = vector.shape_cast %27 : vector<128xf32> to vector<128x1xf32>
    %29 = math.log %28 : vector<128x1xf32>
    %30 = vector.broadcast %29 : vector<128x1xf32> to vector<128x128xf32>
    %31 = arith.subf %25, %30 : vector<128x128xf32>
    %c0_19 = arith.constant 0 : index
    %c0_20 = arith.constant 0 : index
    %32 = vector.load %arg8[%c0_19, %c0_20] : memref<128x128xf32, #tpu.memory_space<vmem>>, vector<128x128xf32>
    tpu.vector_store %arg8[%c0_19, %c0_20], %31 {strides = array<i32>} : memref<128x128xf32, #tpu.memory_space<vmem>>, vector<128x128xf32>,
    return
  }
  func.func @transform_0(%arg0: i32) -> (i32, i32) {
    %c0_i32 = arith.constant 0 : i32
    %c0_i32_0 = arith.constant 0 : i32
    return %arg0, %c0_i32 : i32, i32
  }
  func.func @transform_1(%arg0: i32) -> (i32, i32) {
    %c0_i32 = arith.constant 0 : i32
    %c0_i32_0 = arith.constant 0 : i32
    %c0_i32_1 = arith.constant 0 : i32
    return %c0_i32, %c0_i32_0 : i32, i32
  }
  func.func @transform_2(%arg0: i32) -> (i32, i32) {
    %c0_i32 = arith.constant 0 : i32
    %c0_i32_0 = arith.constant 0 : i32
    %c0_i32_1 = arith.constant 0 : i32
    return %c0_i32, %c0_i32_0 : i32, i32
  }
  func.func @transform_3(%arg0: i32) -> (i32, i32) {
    %c0_i32 = arith.constant 0 : i32
    %c0_i32_0 = arith.constant 0 : i32
    %c0_i32_1 = arith.constant 0 : i32
    return %c0_i32, %c0_i32_0 : i32, i32
  }
  func.func @transform_4(%arg0: i32) -> (i32, i32) {
    %c0_i32 = arith.constant 0 : i32
    %c0_i32_0 = arith.constant 0 : i32
    %c0_i32_1 = arith.constant 0 : i32
    return %c0_i32, %c0_i32_0 : i32, i32
  }
  func.func @transform_5(%arg0: i32) -> (i32, i32) {
    %c0_i32 = arith.constant 0 : i32
    %c0_i32_0 = arith.constant 0 : i32
    %c0_i32_1 = arith.constant 0 : i32
    return %c0_i32, %c0_i32_0 : i32, i32
  }
  func.func @transform_6(%arg0: i32) -> (i32, i32) {
    %c0_i32 = arith.constant 0 : i32
    %c0_i32_0 = arith.constant 0 : i32
    %c0_i32_1 = arith.constant 0 : i32
    return %c0_i32, %c0_i32_0 : i32, i32
  }
  func.func @transform_7(%arg0: i32) -> (i32, i32) {
    %c0_i32 = arith.constant 0 : i32
    %c0_i32_0 = arith.constant 0 : i32
    return %arg0, %c0_i32 : i32, i32
  }
}

</mosaic_0001>

<llo_original>
// kernel: mlp_forward.1
$region0: #{mlp_forward.1}
  #allocation0 [shape = 'u32[]', space=smem, size = 0x4, offset = 0x4, fixed_abs, tag = 'smem constant byte address 0x4 - core index']
  #allocation1 [shape = 'u32[144,128]{1,0:T(1,128)}', space=vmem, size = 0x12000, scoped, tag = 'internal scratch']
  %s0 = inlined_call_operand.vmem [shape: bf16[128,784], index: 0, kind: input, shape index: {}]
  %s1 = inlined_call_operand.vmem [shape: bf16[784,512], index: 1, kind: input, shape index: {}]
  %s2 = inlined_call_operand.vmem [shape: f32[1,512], index: 2, kind: input, shape index: {}]
  %s3 = inlined_call_operand.vmem [shape: bf16[512,512], index: 3, kind: input, shape index: {}]
  %s4 = inlined_call_operand.vmem [shape: f32[1,512], index: 4, kind: input, shape index: {}]
  %s5 = inlined_call_operand.vmem [shape: bf16[512,128], index: 5, kind: input, shape index: {}]
  %s6 = inlined_call_operand.vmem [shape: f32[1,128], index: 6, kind: input, shape index: {}]
  %s7 = inlined_call_operand.vmem [shape: f32[128,128], index: 7, kind: output, shape index: {}]
  %s8 = sld [smem:[#allocation0]]
  $region38: #{mlp_forward.1} parent=0
    _
  %s10 = ssub.s32 1, %s8
  %s11 = scalar_select 0, %s10, %s8
  // Predicated region
  $region2: #{mlp_forward.1} parent=0 // pred_check
    _
  $region3: #{mlp_forward.1} parent=0 // pred_check_branch
    %13 = sbr.rel (0) target = $region5
  $region4: #{mlp_forward.1} parent=0 // pred_region
    _
  $region5: #{mlp_forward.1} parent=0 // pred_fallthru
    _
  // Predicated region
  $region6: #{mlp_forward.1} parent=0 // pred_check
    _
  $region7: #{mlp_forward.1} parent=0 // pred_check_branch
    %15 = sbr.rel (0) target = $region9
  $region8: #{mlp_forward.1} parent=0 // pred_region
    _
  $region9: #{mlp_forward.1} parent=0 // pred_fallthru
    _
  // Predicated region
  $region10: #{mlp_forward.1} parent=0 // pred_check
    _
  $region11: #{mlp_forward.1} parent=0 // pred_check_branch
    %17 = sbr.rel (0) target = $region13
  $region12: #{mlp_forward.1} parent=0 // pred_region
    _
  $region13: #{mlp_forward.1} parent=0 // pred_fallthru
    _
  // Predicated region
  $region14: #{mlp_forward.1} parent=0 // pred_check
    _
  $region15: #{mlp_forward.1} parent=0 // pred_check_branch
    %19 = sbr.rel (0) target = $region17
  $region16: #{mlp_forward.1} parent=0 // pred_region
    _
  $region17: #{mlp_forward.1} parent=0 // pred_fallthru
    _
  // Predicated region
  $region18: #{mlp_forward.1} parent=0 // pred_check
    _
  $region19: #{mlp_forward.1} parent=0 // pred_check_branch
    %21 = sbr.rel (0) target = $region21
  $region20: #{mlp_forward.1} parent=0 // pred_region
    _
  $region21: #{mlp_forward.1} parent=0 // pred_fallthru
    _
  // Predicated region
  $region22: #{mlp_forward.1} parent=0 // pred_check
    _
  $region23: #{mlp_forward.1} parent=0 // pred_check_branch
    %23 = sbr.rel (0) target = $region25
  $region24: #{mlp_forward.1} parent=0 // pred_region
    _
  $region25: #{mlp_forward.1} parent=0 // pred_fallthru
    _
  // Predicated region
  $region26: #{mlp_forward.1} parent=0 // pred_check
    _
  $region27: #{mlp_forward.1} parent=0 // pred_check_branch
    %25 = sbr.rel (0) target = $region29
  $region28: #{mlp_forward.1} parent=0 // pred_region
    _
  $region29: #{mlp_forward.1} parent=0 // pred_fallthru
    _
  %v27 = vld [vmem:[%s0] sm:$0xff]
  %v28 = vld [vmem:[%s0 + $0x8] sm:$0xff]
  %v29 = vld [vmem:[%s0 + $0x10] sm:$0xff]
  %v30 = vld [vmem:[%s0 + $0x18] sm:$0xf]
  %v31 = vld [vmem:[%s0 + $0x1c] sm:$0xff]
  %v32 = vld [vmem:[%s0 + $0x24] sm:$0xff]
  %v33 = vld [vmem:[%s0 + $0x2c] sm:$0xff]
  %v34 = vld [vmem:[%s0 + $0x34] sm:$0xf]
  %v35 = vld [vmem:[%s0 + $0x38] sm:$0xff]
  %v36 = vld [vmem:[%s0 + $0x40] sm:$0xff]
  %v37 = vld [vmem:[%s0 + $0x48] sm:$0xff]
  %v38 = vld [vmem:[%s0 + $0x50] sm:$0xf]
  %v39 = vld [vmem:[%s0 + $0x54] sm:$0xff]
  %v40 = vld [vmem:[%s0 + $0x5c] sm:$0xff]
  %v41 = vld [vmem:[%s0 + $0x64] sm:$0xff]
  %v42 = vld [vmem:[%s0 + $0x6c] sm:$0xf]
  %v43 = vld [vmem:[%s0 + $0x70] sm:$0xff]
  %v44 = vld [vmem:[%s0 + $0x78] sm:$0xff]
  %v45 = vld [vmem:[%s0 + $0x80] sm:$0xff]
  %v46 = vld [vmem:[%s0 + $0x88] sm:$0xf]
  %v47 = vld [vmem:[%s0 + $0x8c] sm:$0xff]
  %v48 = vld [vmem:[%s0 + $0x94] sm:$0xff]
  %v49 = vld [vmem:[%s0 + $0x9c] sm:$0xff]
  %v50 = vld [vmem:[%s0 + $0xa4] sm:$0xf]
  %v51 = vld [vmem:[%s0 + $0xa8] sm:$0xff]
  %v52 = vld [vmem:[%s0 + $0xb0] sm:$0xff]
  %v53 = vld [vmem:[%s0 + $0xb8] sm:$0xff]
  %v54 = vld [vmem:[%s0 + $0xc0] sm:$0xf]
  %v55 = vld [vmem:[%s0 + $0xc4] sm:$0xff]
  %v56 = vld [vmem:[%s0 + $0xcc] sm:$0xff]
  %v57 = vld [vmem:[%s0 + $0xd4] sm:$0xff]
  %v58 = vld [vmem:[%s0 + $0xdc] sm:$0xf]
  %v59 = vld [vmem:[%s0 + $0xe0] sm:$0xff]
  %v60 = vld [vmem:[%s0 + $0xe8] sm:$0xff]
  %v61 = vld [vmem:[%s0 + $0xf0] sm:$0xff]
  %v62 = vld [vmem:[%s0 + $0xf8] sm:$0xf]
  %v63 = vld [vmem:[%s0 + $0xfc] sm:$0xff]
  %v64 = vld [vmem:[%s0 + $0x104] sm:$0xff]
  %v65 = vld [vmem:[%s0 + $0x10c] sm:$0xff]
  %v66 = vld [vmem:[%s0 + $0x114] sm:$0xf]
  %v67 = vld [vmem:[%s0 + $0x118] sm:$0xff]
  %v68 = vld [vmem:[%s0 + $0x120] sm:$0xff]
  %v69 = vld [vmem:[%s0 + $0x128] sm:$0xff]
  %v70 = vld [vmem:[%s0 + $0x130] sm:$0xf]
  %v71 = vld [vmem:[%s0 + $0x134] sm:$0xff]
  %v72 = vld [vmem:[%s0 + $0x13c] sm:$0xff]
  %v73 = vld [vmem:[%s0 + $0x144] sm:$0xff]
  %v74 = vld [vmem:[%s0 + $0x14c] sm:$0xf]
  %v75 = vld [vmem:[%s0 + $0x150] sm:$0xff]
  %v76 = vld [vmem:[%s0 + $0x158] sm:$0xff]
  %v77 = vld [vmem:[%s0 + $0x160] sm:$0xff]
  %v78 = vld [vmem:[%s0 + $0x168] sm:$0xf]
  %v79 = vld [vmem:[%s0 + $0x16c] sm:$0xff]
  %v80 = vld [vmem:[%s0 + $0x174] sm:$0xff]
  %v81 = vld [vmem:[%s0 + $0x17c] sm:$0xff]
  %v82 = vld [vmem:[%s0 + $0x184] sm:$0xf]
  %v83 = vld [vmem:[%s0 + $0x188] sm:$0xff]
  %v84 = vld [vmem:[%s0 + $0x190] sm:$0xff]
  %v85 = vld [vmem:[%s0 + $0x198] sm:$0xff]
  %v86 = vld [vmem:[%s0 + $0x1a0] sm:$0xf]
  %v87 = vld [vmem:[%s0 + $0x1a4] sm:$0xff]
  %v88 = vld [vmem:[%s0 + $0x1ac] sm:$0xff]
  %v89 = vld [vmem:[%s0 + $0x1b4] sm:$0xff]
  %v90 = vld [vmem:[%s0 + $0x1bc] sm:$0xf]
  %v91 = vld [vmem:[%s1] sm:$0xff]
  %v92 = vld [vmem:[%s1 + $0x8] sm:$0xff]
  %v93 = vld [vmem:[%s1 + $0x10] sm:$0xff]
  %v94 = vld [vmem:[%s1 + $0x18] sm:$0xff]
  %v95 = vld [vmem:[%s1 + $0x20] sm:$0xff]
  %v96 = vld [vmem:[%s1 + $0x28] sm:$0xff]
  %v97 = vld [vmem:[%s1 + $0x30] sm:$0xff]
  %v98 = vld [vmem:[%s1 + $0x38] sm:$0xff]
  %v99 = vld [vmem:[%s1 + $0x40] sm:$0xff]
  %v100 = vld [vmem:[%s1 + $0x48] sm:$0xff]
  %v101 = vld [vmem:[%s1 + $0x50] sm:$0xff]
  %v102 = vld [vmem:[%s1 + $0x58] sm:$0xff]
  %v103 = vld [vmem:[%s1 + $0x60] sm:$0xff]
  %v104 = vld [vmem:[%s1 + $0x68] sm:$0xff]
  %v105 = vld [vmem:[%s1 + $0x70] sm:$0xff]
  %v106 = vld [vmem:[%s1 + $0x78] sm:$0xff]
  %v107 = vld [vmem:[%s1 + $0x80] sm:$0xff]
  %v108 = vld [vmem:[%s1 + $0x88] sm:$0xff]
  %v109 = vld [vmem:[%s1 + $0x90] sm:$0xff]
  %v110 = vld [vmem:[%s1 + $0x98] sm:$0xff]
  %v111 = vld [vmem:[%s1 + $0xa0] sm:$0xff]
  %v112 = vld [vmem:[%s1 + $0xa8] sm:$0xff]
  %v113 = vld [vmem:[%s1 + $0xb0] sm:$0xff]
  %v114 = vld [vmem:[%s1 + $0xb8] sm:$0xff]
  %v115 = vld [vmem:[%s1 + $0xc0] sm:$0xff]
  %v116 = vld [vmem:[%s1 + $0xc8] sm:$0xff]
  %v117 = vld [vmem:[%s1 + $0xd0] sm:$0xff]
  %v118 = vld [vmem:[%s1 + $0xd8] sm:$0xff]
  %v119 = vld [vmem:[%s1 + $0xe0] sm:$0xff]
  %v120 = vld [vmem:[%s1 + $0xe8] sm:$0xff]
  %v121 = vld [vmem:[%s1 + $0xf0] sm:$0xff]
  %v122 = vld [vmem:[%s1 + $0xf8] sm:$0xff]
  %v123 = vld [vmem:[%s1 + $0x100] sm:$0xff]
  %v124 = vld [vmem:[%s1 + $0x108] sm:$0xff]
  %v125 = vld [vmem:[%s1 + $0x110] sm:$0xff]
  %v126 = vld [vmem:[%s1 + $0x118] sm:$0xff]
  %v127 = vld [vmem:[%s1 + $0x120] sm:$0xff]
  %v128 = vld [vmem:[%s1 + $0x128] sm:$0xff]
  %v129 = vld [vmem:[%s1 + $0x130] sm:$0xff]
  %v130 = vld [vmem:[%s1 + $0x138] sm:$0xff]
  %v131 = vld [vmem:[%s1 + $0x140] sm:$0xff]
  %v132 = vld [vmem:[%s1 + $0x148] sm:$0xff]
  %v133 = vld [vmem:[%s1 + $0x150] sm:$0xff]
  %v134 = vld [vmem:[%s1 + $0x158] sm:$0xff]
  %v135 = vld [vmem:[%s1 + $0x160] sm:$0xff]
  %v136 = vld [vmem:[%s1 + $0x168] sm:$0xff]
  %v137 = vld [vmem:[%s1 + $0x170] sm:$0xff]
  %v138 = vld [vmem:[%s1 + $0x178] sm:$0xff]
  %v139 = vld [vmem:[%s1 + $0x180] sm:$0xff]
  %v140 = vld [vmem:[%s1 + $0x188] sm:$0xff]
  %v141 = vld [vmem:[%s1 + $0x190] sm:$0xff]
  %v142 = vld [vmem:[%s1 + $0x198] sm:$0xff]
  %v143 = vld [vmem:[%s1 + $0x1a0] sm:$0xff]
  %v144 = vld [vmem:[%s1 + $0x1a8] sm:$0xff]
  %v145 = vld [vmem:[%s1 + $0x1b0] sm:$0xff]
  %v146 = vld [vmem:[%s1 + $0x1b8] sm:$0xff]
  %v147 = vld [vmem:[%s1 + $0x1c0] sm:$0xff]
  %v148 = vld [vmem:[%s1 + $0x1c8] sm:$0xff]
  %v149 = vld [vmem:[%s1 + $0x1d0] sm:$0xff]
  %v150 = vld [vmem:[%s1 + $0x1d8] sm:$0xff]
  %v151 = vld [vmem:[%s1 + $0x1e0] sm:$0xff]
  %v152 = vld [vmem:[%s1 + $0x1e8] sm:$0xff]
  %v153 = vld [vmem:[%s1 + $0x1f0] sm:$0xff]
  %v154 = vld [vmem:[%s1 + $0x1f8] sm:$0xff]
  %v155 = vld [vmem:[%s1 + $0x200] sm:$0xff]
  %v156 = vld [vmem:[%s1 + $0x208] sm:$0xff]
  %v157 = vld [vmem:[%s1 + $0x210] sm:$0xff]
  %v158 = vld [vmem:[%s1 + $0x218] sm:$0xff]
  %v159 = vld [vmem:[%s1 + $0x220] sm:$0xff]
  %v160 = vld [vmem:[%s1 + $0x228] sm:$0xff]
  %v161 = vld [vmem:[%s1 + $0x230] sm:$0xff]
  %v162 = vld [vmem:[%s1 + $0x238] sm:$0xff]
  %v163 = vld [vmem:[%s1 + $0x240] sm:$0xff]
  %v164 = vld [vmem:[%s1 + $0x248] sm:$0xff]
  %v165 = vld [vmem:[%s1 + $0x250] sm:$0xff]
  %v166 = vld [vmem:[%s1 + $0x258] sm:$0xff]
  %v167 = vld [vmem:[%s1 + $0x260] sm:$0xff]
  %v168 = vld [vmem:[%s1 + $0x268] sm:$0xff]
  %v169 = vld [vmem:[%s1 + $0x270] sm:$0xff]
  %v170 = vld [vmem:[%s1 + $0x278] sm:$0xff]
  %v171 = vld [vmem:[%s1 + $0x280] sm:$0xff]
  %v172 = vld [vmem:[%s1 + $0x288] sm:$0xff]
  %v173 = vld [vmem:[%s1 + $0x290] sm:$0xff]
  %v174 = vld [vmem:[%s1 + $0x298] sm:$0xff]
  %v175 = vld [vmem:[%s1 + $0x2a0] sm:$0xff]
  %v176 = vld [vmem:[%s1 + $0x2a8] sm:$0xff]
  %v177 = vld [vmem:[%s1 + $0x2b0] sm:$0xff]
  %v178 = vld [vmem:[%s1 + $0x2b8] sm:$0xff]
  %v179 = vld [vmem:[%s1 + $0x2c0] sm:$0xff]
  %v180 = vld [vmem:[%s1 + $0x2c8] sm:$0xff]
  %v181 = vld [vmem:[%s1 + $0x2d0] sm:$0xff]
  %v182 = vld [vmem:[%s1 + $0x2d8] sm:$0xff]
  %v183 = vld [vmem:[%s1 + $0x2e0] sm:$0xff]
  %v184 = vld [vmem:[%s1 + $0x2e8] sm:$0xff]
  %v185 = vld [vmem:[%s1 + $0x2f0] sm:$0xff]
  %v186 = vld [vmem:[%s1 + $0x2f8] sm:$0xff]
  %v187 = vld [vmem:[%s1 + $0x300] sm:$0xff]
  %v188 = vld [vmem:[%s1 + $0x308] sm:$0xff]
  %v189 = vld [vmem:[%s1 + $0x310] sm:$0xff]
  %v190 = vld [vmem:[%s1 + $0x318] sm:$0xff]
  %v191 = vld [vmem:[%s1 + $0x320] sm:$0xff]
  %v192 = vld [vmem:[%s1 + $0x328] sm:$0xff]
  %v193 = vld [vmem:[%s1 + $0x330] sm:$0xff]
  %v194 = vld [vmem:[%s1 + $0x338] sm:$0xff]
  %v195 = vld [vmem:[%s1 + $0x340] sm:$0xff]
  %v196 = vld [vmem:[%s1 + $0x348] sm:$0xff]
  %v197 = vld [vmem:[%s1 + $0x350] sm:$0xff]
  %v198 = vld [vmem:[%s1 + $0x358] sm:$0xff]
  %v199 = vld [vmem:[%s1 + $0x360] sm:$0xff]
  %v200 = vld [vmem:[%s1 + $0x368] sm:$0xff]
  %v201 = vld [vmem:[%s1 + $0x370] sm:$0xff]
  %v202 = vld [vmem:[%s1 + $0x378] sm:$0xff]
  %v203 = vld [vmem:[%s1 + $0x380] sm:$0xff]
  %v204 = vld [vmem:[%s1 + $0x388] sm:$0xff]
  %v205 = vld [vmem:[%s1 + $0x390] sm:$0xff]
  %v206 = vld [vmem:[%s1 + $0x398] sm:$0xff]
  %v207 = vld [vmem:[%s1 + $0x3a0] sm:$0xff]
  %v208 = vld [vmem:[%s1 + $0x3a8] sm:$0xff]
  %v209 = vld [vmem:[%s1 + $0x3b0] sm:$0xff]
  %v210 = vld [vmem:[%s1 + $0x3b8] sm:$0xff]
  %v211 = vld [vmem:[%s1 + $0x3c0] sm:$0xff]
  %v212 = vld [vmem:[%s1 + $0x3c8] sm:$0xff]
  %v213 = vld [vmem:[%s1 + $0x3d0] sm:$0xff]
  %v214 = vld [vmem:[%s1 + $0x3d8] sm:$0xff]
  %v215 = vld [vmem:[%s1 + $0x3e0] sm:$0xff]
  %v216 = vld [vmem:[%s1 + $0x3e8] sm:$0xff]
  %v217 = vld [vmem:[%s1 + $0x3f0] sm:$0xff]
  %v218 = vld [vmem:[%s1 + $0x3f8] sm:$0xff]
  %v219 = vld [vmem:[%s1 + $0x400] sm:$0xff]
  %v220 = vld [vmem:[%s1 + $0x408] sm:$0xff]
  %v221 = vld [vmem:[%s1 + $0x410] sm:$0xff]
  %v222 = vld [vmem:[%s1 + $0x418] sm:$0xff]
  %v223 = vld [vmem:[%s1 + $0x420] sm:$0xff]
  %v224 = vld [vmem:[%s1 + $0x428] sm:$0xff]
  %v225 = vld [vmem:[%s1 + $0x430] sm:$0xff]
  %v226 = vld [vmem:[%s1 + $0x438] sm:$0xff]
  %v227 = vld [vmem:[%s1 + $0x440] sm:$0xff]
  %v228 = vld [vmem:[%s1 + $0x448] sm:$0xff]
  %v229 = vld [vmem:[%s1 + $0x450] sm:$0xff]
  %v230 = vld [vmem:[%s1 + $0x458] sm:$0xff]
  %v231 = vld [vmem:[%s1 + $0x460] sm:$0xff]
  %v232 = vld [vmem:[%s1 + $0x468] sm:$0xff]
  %v233 = vld [vmem:[%s1 + $0x470] sm:$0xff]
  %v234 = vld [vmem:[%s1 + $0x478] sm:$0xff]
  %v235 = vld [vmem:[%s1 + $0x480] sm:$0xff]
  %v236 = vld [vmem:[%s1 + $0x488] sm:$0xff]
  %v237 = vld [vmem:[%s1 + $0x490] sm:$0xff]
  %v238 = vld [vmem:[%s1 + $0x498] sm:$0xff]
  %v239 = vld [vmem:[%s1 + $0x4a0] sm:$0xff]
  %v240 = vld [vmem:[%s1 + $0x4a8] sm:$0xff]
  %v241 = vld [vmem:[%s1 + $0x4b0] sm:$0xff]
  %v242 = vld [vmem:[%s1 + $0x4b8] sm:$0xff]
  %v243 = vld [vmem:[%s1 + $0x4c0] sm:$0xff]
  %v244 = vld [vmem:[%s1 + $0x4c8] sm:$0xff]
  %v245 = vld [vmem:[%s1 + $0x4d0] sm:$0xff]
  %v246 = vld [vmem:[%s1 + $0x4d8] sm:$0xff]
  %v247 = vld [vmem:[%s1 + $0x4e0] sm:$0xff]
  %v248 = vld [vmem:[%s1 + $0x4e8] sm:$0xff]
  %v249 = vld [vmem:[%s1 + $0x4f0] sm:$0xff]
  %v250 = vld [vmem:[%s1 + $0x4f8] sm:$0xff]
  %v251 = vld [vmem:[%s1 + $0x500] sm:$0xff]
  %v252 = vld [vmem:[%s1 + $0x508] sm:$0xff]
  %v253 = vld [vmem:[%s1 + $0x510] sm:$0xff]
  %v254 = vld [vmem:[%s1 + $0x518] sm:$0xff]
  %v255 = vld [vmem:[%s1 + $0x520] sm:$0xff]
  %v256 = vld [vmem:[%s1 + $0x528] sm:$0xff]
  %v257 = vld [vmem:[%s1 + $0x530] sm:$0xff]
  %v258 = vld [vmem:[%s1 + $0x538] sm:$0xff]
  %v259 = vld [vmem:[%s1 + $0x540] sm:$0xff]
  %v260 = vld [vmem:[%s1 + $0x548] sm:$0xff]
  %v261 = vld [vmem:[%s1 + $0x550] sm:$0xff]
  %v262 = vld [vmem:[%s1 + $0x558] sm:$0xff]
  %v263 = vld [vmem:[%s1 + $0x560] sm:$0xff]
  %v264 = vld [vmem:[%s1 + $0x568] sm:$0xff]
  %v265 = vld [vmem:[%s1 + $0x570] sm:$0xff]
  %v266 = vld [vmem:[%s1 + $0x578] sm:$0xff]
  %v267 = vld [vmem:[%s1 + $0x580] sm:$0xff]
  %v268 = vld [vmem:[%s1 + $0x588] sm:$0xff]
  %v269 = vld [vmem:[%s1 + $0x590] sm:$0xff]
  %v270 = vld [vmem:[%s1 + $0x598] sm:$0xff]
  %v271 = vld [vmem:[%s1 + $0x5a0] sm:$0xff]
  %v272 = vld [vmem:[%s1 + $0x5a8] sm:$0xff]
  %v273 = vld [vmem:[%s1 + $0x5b0] sm:$0xff]
  %v274 = vld [vmem:[%s1 + $0x5b8] sm:$0xff]
  %v275 = vld [vmem:[%s1 + $0x5c0] sm:$0xff]
  %v276 = vld [vmem:[%s1 + $0x5c8] sm:$0xff]
  %v277 = vld [vmem:[%s1 + $0x5d0] sm:$0xff]
  %v278 = vld [vmem:[%s1 + $0x5d8] sm:$0xff]
  %v279 = vld [vmem:[%s1 + $0x5e0] sm:$0xff]
  %v280 = vld [vmem:[%s1 + $0x5e8] sm:$0xff]
  %v281 = vld [vmem:[%s1 + $0x5f0] sm:$0xff]
  %v282 = vld [vmem:[%s1 + $0x5f8] sm:$0xff]
  %v283 = vld [vmem:[%s1 + $0x600] sm:$0xff]
  %v284 = vld [vmem:[%s1 + $0x608] sm:$0xff]
  %v285 = vld [vmem:[%s1 + $0x610] sm:$0xff]
  %v286 = vld [vmem:[%s1 + $0x618] sm:$0xff]
  %v287 = vld [vmem:[%s2] sm:$0xf]
  %v289 = vlaneseq
  %v290 = vshrl.u32 %v289, 7
  %v291 = vsub.s32 0, %v290
  %v292 = vrot.slane %v287, %v291
  %v293 = vlaneseq
  %v294 = vshrl.u32 %v293, 7
  %v295 = vsub.s32 1, %v294
  %v296 = vrot.slane %v287, %v295
  %v297 = vlaneseq
  %v298 = vshrl.u32 %v297, 7
  %v299 = vsub.s32 2, %v298
  %v300 = vrot.slane %v287, %v299
  %v301 = vlaneseq
  %v302 = vshrl.u32 %v301, 7
  %v303 = vsub.s32 3, %v302
  %v304 = vrot.slane %v287, %v303
  %v373 = vunpack.c.l.b16 %v27
  %v374 = vunpack.c.h.b16 %v27
  %v375 = vunpack.c.l.b16 %v28
  %v376 = vunpack.c.h.b16 %v28
  %v377 = vunpack.c.l.b16 %v29
  %v378 = vunpack.c.h.b16 %v29
  %v379 = vunpack.c.l.b16 %v30
  %v380 = vunpack.c.l.b16 %v31
  %v381 = vunpack.c.h.b16 %v31
  %v382 = vunpack.c.l.b16 %v32
  %v383 = vunpack.c.h.b16 %v32
  %v384 = vunpack.c.l.b16 %v33
  %v385 = vunpack.c.h.b16 %v33
  %v386 = vunpack.c.l.b16 %v34
  %v387 = vunpack.c.l.b16 %v35
  %v388 = vunpack.c.h.b16 %v35
  %v389 = vunpack.c.l.b16 %v36
  %v390 = vunpack.c.h.b16 %v36
  %v391 = vunpack.c.l.b16 %v37
  %v392 = vunpack.c.h.b16 %v37
  %v393 = vunpack.c.l.b16 %v38
  %v394 = vunpack.c.l.b16 %v39
  %v395 = vunpack.c.h.b16 %v39
  %v396 = vunpack.c.l.b16 %v40
  %v397 = vunpack.c.h.b16 %v40
  %v398 = vunpack.c.l.b16 %v41
  %v399 = vunpack.c.h.b16 %v41
  %v400 = vunpack.c.l.b16 %v42
  %v401 = vunpack.c.l.b16 %v43
  %v402 = vunpack.c.h.b16 %v43
  %v403 = vunpack.c.l.b16 %v44
  %v404 = vunpack.c.h.b16 %v44
  %v405 = vunpack.c.l.b16 %v45
  %v406 = vunpack.c.h.b16 %v45
  %v407 = vunpack.c.l.b16 %v46
  %v408 = vunpack.c.l.b16 %v47
  %v409 = vunpack.c.h.b16 %v47
  %v410 = vunpack.c.l.b16 %v48
  %v411 = vunpack.c.h.b16 %v48
  %v412 = vunpack.c.l.b16 %v49
  %v413 = vunpack.c.h.b16 %v49
  %v414 = vunpack.c.l.b16 %v50
  %v415 = vunpack.c.l.b16 %v51
  %v416 = vunpack.c.h.b16 %v51
  %v417 = vunpack.c.l.b16 %v52
  %v418 = vunpack.c.h.b16 %v52
  %v419 = vunpack.c.l.b16 %v53
  %v420 = vunpack.c.h.b16 %v53
  %v421 = vunpack.c.l.b16 %v54
  %v422 = vunpack.c.l.b16 %v55
  %v423 = vunpack.c.h.b16 %v55
  %v424 = vunpack.c.l.b16 %v56
  %v425 = vunpack.c.h.b16 %v56
  %v426 = vunpack.c.l.b16 %v57
  %v427 = vunpack.c.h.b16 %v57
  %v428 = vunpack.c.l.b16 %v58
  %v429 = vunpack.c.l.b16 %v59
  %v430 = vunpack.c.h.b16 %v59
  %v431 = vunpack.c.l.b16 %v60
  %v432 = vunpack.c.h.b16 %v60
  %v433 = vunpack.c.l.b16 %v61
  %v434 = vunpack.c.h.b16 %v61
  %v435 = vunpack.c.l.b16 %v62
  %v436 = vunpack.c.l.b16 %v63
  %v437 = vunpack.c.h.b16 %v63
  %v438 = vunpack.c.l.b16 %v64
  %v439 = vunpack.c.h.b16 %v64
  %v440 = vunpack.c.l.b16 %v65
  %v441 = vunpack.c.h.b16 %v65
  %v442 = vunpack.c.l.b16 %v66
  %v443 = vunpack.c.l.b16 %v67
  %v444 = vunpack.c.h.b16 %v67
  %v445 = vunpack.c.l.b16 %v68
  %v446 = vunpack.c.h.b16 %v68
  %v447 = vunpack.c.l.b16 %v69
  %v448 = vunpack.c.h.b16 %v69
  %v449 = vunpack.c.l.b16 %v70
  %v450 = vunpack.c.l.b16 %v71
  %v451 = vunpack.c.h.b16 %v71
  %v452 = vunpack.c.l.b16 %v72
  %v453 = vunpack.c.h.b16 %v72
  %v454 = vunpack.c.l.b16 %v73
  %v455 = vunpack.c.h.b16 %v73
  %v456 = vunpack.c.l.b16 %v74
  %v457 = vunpack.c.l.b16 %v75
  %v458 = vunpack.c.h.b16 %v75
  %v459 = vunpack.c.l.b16 %v76
  %v460 = vunpack.c.h.b16 %v76
  %v461 = vunpack.c.l.b16 %v77
  %v462 = vunpack.c.h.b16 %v77
  %v463 = vunpack.c.l.b16 %v78
  %v464 = vunpack.c.l.b16 %v79
  %v465 = vunpack.c.h.b16 %v79
  %v466 = vunpack.c.l.b16 %v80
  %v467 = vunpack.c.h.b16 %v80
  %v468 = vunpack.c.l.b16 %v81
  %v469 = vunpack.c.h.b16 %v81
  %v470 = vunpack.c.l.b16 %v82
  %v471 = vunpack.c.l.b16 %v83
  %v472 = vunpack.c.h.b16 %v83
  %v473 = vunpack.c.l.b16 %v84
  %v474 = vunpack.c.h.b16 %v84
  %v475 = vunpack.c.l.b16 %v85
  %v476 = vunpack.c.h.b16 %v85
  %v477 = vunpack.c.l.b16 %v86
  %v478 = vunpack.c.l.b16 %v87
  %v479 = vunpack.c.h.b16 %v87
  %v480 = vunpack.c.l.b16 %v88
  %v481 = vunpack.c.h.b16 %v88
  %v482 = vunpack.c.l.b16 %v89
  %v483 = vunpack.c.h.b16 %v89
  %v484 = vunpack.c.l.b16 %v90
  %v485 = vpack.c.b16 %v380, %v373
  %v486 = vpack.c.b16 %v381, %v374
  %v487 = vpack.c.b16 %v382, %v375
  %v488 = vpack.c.b16 %v383, %v376
  %v489 = vpack.c.b16 %v384, %v377
  %v490 = vpack.c.b16 %v385, %v378
  %v491 = vpack.c.b16 %v386, %v379
  %v492 = vpack.c.b16 %v394, %v387
  %v493 = vpack.c.b16 %v395, %v388
  %v494 = vpack.c.b16 %v396, %v389
  %v495 = vpack.c.b16 %v397, %v390
  %v496 = vpack.c.b16 %v398, %v391
  %v497 = vpack.c.b16 %v399, %v392
  %v498 = vpack.c.b16 %v400, %v393
  %v499 = vpack.c.b16 %v408, %v401
  %v500 = vpack.c.b16 %v409, %v402
  %v501 = vpack.c.b16 %v410, %v403
  %v502 = vpack.c.b16 %v411, %v404
  %v503 = vpack.c.b16 %v412, %v405
  %v504 = vpack.c.b16 %v413, %v406
  %v505 = vpack.c.b16 %v414, %v407
  %v506 = vpack.c.b16 %v422, %v415
  %v507 = vpack.c.b16 %v423, %v416
  %v508 = vpack.c.b16 %v424, %v417
  %v509 = vpack.c.b16 %v425, %v418
  %v510 = vpack.c.b16 %v426, %v419
  %v511 = vpack.c.b16 %v427, %v420
  %v512 = vpack.c.b16 %v428, %v421
  %v513 = vpack.c.b16 %v436, %v429
  %v514 = vpack.c.b16 %v437, %v430
  %v515 = vpack.c.b16 %v438, %v431
  %v516 = vpack.c.b16 %v439, %v432
  %v517 = vpack.c.b16 %v440, %v433
  %v518 = vpack.c.b16 %v441, %v434
  %v519 = vpack.c.b16 %v442, %v435
  %v520 = vpack.c.b16 %v450, %v443
  %v521 = vpack.c.b16 %v451, %v444
  %v522 = vpack.c.b16 %v452, %v445
  %v523 = vpack.c.b16 %v453, %v446
  %v524 = vpack.c.b16 %v454, %v447
  %v525 = vpack.c.b16 %v455, %v448
  %v526 = vpack.c.b16 %v456, %v449
  %v527 = vpack.c.b16 %v464, %v457
  %v528 = vpack.c.b16 %v465, %v458
  %v529 = vpack.c.b16 %v466, %v459
  %v530 = vpack.c.b16 %v467, %v460
  %v531 = vpack.c.b16 %v468, %v461
  %v532 = vpack.c.b16 %v469, %v462
  %v533 = vpack.c.b16 %v470, %v463
  %v534 = vpack.c.b16 %v478, %v471
  %v535 = vpack.c.b16 %v479, %v472
  %v536 = vpack.c.b16 %v480, %v473
  %v537 = vpack.c.b16 %v481, %v474
  %v538 = vpack.c.b16 %v482, %v475
  %v539 = vpack.c.b16 %v483, %v476
  %v540 = vpack.c.b16 %v484, %v477
  %v785 = vunpack.c.l.b16 %v91
  %v786 = vunpack.c.h.b16 %v91
  %v787 = vunpack.c.l.b16 %v92
  %v788 = vunpack.c.h.b16 %v92
  %v789 = vunpack.c.l.b16 %v93
  %v790 = vunpack.c.h.b16 %v93
  %v791 = vunpack.c.l.b16 %v94
  %v792 = vunpack.c.h.b16 %v94
  %v793 = vunpack.c.l.b16 %v95
  %v794 = vunpack.c.h.b16 %v95
  %v795 = vunpack.c.l.b16 %v96
  %v796 = vunpack.c.h.b16 %v96
  %v797 = vunpack.c.l.b16 %v97
  %v798 = vunpack.c.h.b16 %v97
  %v799 = vunpack.c.l.b16 %v98
  %v800 = vunpack.c.h.b16 %v98
  %v801 = vunpack.c.l.b16 %v99
  %v802 = vunpack.c.h.b16 %v99
  %v803 = vunpack.c.l.b16 %v100
  %v804 = vunpack.c.h.b16 %v100
  %v805 = vunpack.c.l.b16 %v101
  %v806 = vunpack.c.h.b16 %v101
  %v807 = vunpack.c.l.b16 %v102
  %v808 = vunpack.c.h.b16 %v102
  %v809 = vunpack.c.l.b16 %v103
  %v810 = vunpack.c.h.b16 %v103
  %v811 = vunpack.c.l.b16 %v104
  %v812 = vunpack.c.h.b16 %v104
  %v813 = vunpack.c.l.b16 %v105
  %v814 = vunpack.c.h.b16 %v105
  %v815 = vunpack.c.l.b16 %v106
  %v816 = vunpack.c.h.b16 %v106
  %v817 = vunpack.c.l.b16 %v107
  %v818 = vunpack.c.h.b16 %v107
  %v819 = vunpack.c.l.b16 %v108
  %v820 = vunpack.c.h.b16 %v108
  %v821 = vunpack.c.l.b16 %v109
  %v822 = vunpack.c.h.b16 %v109
  %v823 = vunpack.c.l.b16 %v110
  %v824 = vunpack.c.h.b16 %v110
  %v825 = vunpack.c.l.b16 %v111
  %v826 = vunpack.c.h.b16 %v111
  %v827 = vunpack.c.l.b16 %v112
  %v828 = vunpack.c.h.b16 %v112
  %v829 = vunpack.c.l.b16 %v113
  %v830 = vunpack.c.h.b16 %v113
  %v831 = vunpack.c.l.b16 %v114
  %v832 = vunpack.c.h.b16 %v114
  %v833 = vunpack.c.l.b16 %v115
  %v834 = vunpack.c.h.b16 %v115
  %v835 = vunpack.c.l.b16 %v116
  %v836 = vunpack.c.h.b16 %v116
  %v837 = vunpack.c.l.b16 %v117
  %v838 = vunpack.c.h.b16 %v117
  %v839 = vunpack.c.l.b16 %v118
  %v840 = vunpack.c.h.b16 %v118
  %v841 = vunpack.c.l.b16 %v119
  %v842 = vunpack.c.h.b16 %v119
  %v843 = vunpack.c.l.b16 %v120
  %v844 = vunpack.c.h.b16 %v120
  %v845 = vunpack.c.l.b16 %v121
  %v846 = vunpack.c.h.b16 %v121
  %v847 = vunpack.c.l.b16 %v122
  %v848 = vunpack.c.h.b16 %v122
  %v849 = vunpack.c.l.b16 %v123
  %v850 = vunpack.c.h.b16 %v123
  %v851 = vunpack.c.l.b16 %v124
  %v852 = vunpack.c.h.b16 %v124
  %v853 = vunpack.c.l.b16 %v125
  %v854 = vunpack.c.h.b16 %v125
  %v855 = vunpack.c.l.b16 %v126
  %v856 = vunpack.c.h.b16 %v126
  %v857 = vunpack.c.l.b16 %v127
  %v858 = vunpack.c.h.b16 %v127
  %v859 = vunpack.c.l.b16 %v128
  %v860 = vunpack.c.h.b16 %v128
  %v861 = vunpack.c.l.b16 %v129
  %v862 = vunpack.c.h.b16 %v129
  %v863 = vunpack.c.l.b16 %v130
  %v864 = vunpack.c.h.b16 %v130
  %v865 = vunpack.c.l.b16 %v131
  %v866 = vunpack.c.h.b16 %v131
  %v867 = vunpack.c.l.b16 %v132
  %v868 = vunpack.c.h.b16 %v132
  %v869 = vunpack.c.l.b16 %v133
  %v870 = vunpack.c.h.b16 %v133
  %v871 = vunpack.c.l.b16 %v134
  %v872 = vunpack.c.h.b16 %v134
  %v873 = vunpack.c.l.b16 %v135
  %v874 = vunpack.c.h.b16 %v135
  %v875 = vunpack.c.l.b16 %v136
  %v876 = vunpack.c.h.b16 %v136
  %v877 = vunpack.c.l.b16 %v137
  %v878 = vunpack.c.h.b16 %v137
  %v879 = vunpack.c.l.b16 %v138
  %v880 = vunpack.c.h.b16 %v138
  %v881 = vunpack.c.l.b16 %v139
  %v882 = vunpack.c.h.b16 %v139
  %v883 = vunpack.c.l.b16 %v140
  %v884 = vunpack.c.h.b16 %v140
  %v885 = vunpack.c.l.b16 %v141
  %v886 = vunpack.c.h.b16 %v141
  %v887 = vunpack.c.l.b16 %v142
  %v888 = vunpack.c.h.b16 %v142
  %v889 = vunpack.c.l.b16 %v143
  %v890 = vunpack.c.h.b16 %v143
  %v891 = vunpack.c.l.b16 %v144
  %v892 = vunpack.c.h.b16 %v144
  %v893 = vunpack.c.l.b16 %v145
  %v894 = vunpack.c.h.b16 %v145
  %v895 = vunpack.c.l.b16 %v146
  %v896 = vunpack.c.h.b16 %v146
  %v897 = vunpack.c.l.b16 %v147
  %v898 = vunpack.c.h.b16 %v147
  %v899 = vunpack.c.l.b16 %v148
  %v900 = vunpack.c.h.b16 %v148
  %v901 = vunpack.c.l.b16 %v149
  %v902 = vunpack.c.h.b16 %v149
  %v903 = vunpack.c.l.b16 %v150
  %v904 = vunpack.c.h.b16 %v150
  %v905 = vunpack.c.l.b16 %v151
  %v906 = vunpack.c.h.b16 %v151
  %v907 = vunpack.c.l.b16 %v152
  %v908 = vunpack.c.h.b16 %v152
  %v909 = vunpack.c.l.b16 %v153
  %v910 = vunpack.c.h.b16 %v153
  %v911 = vunpack.c.l.b16 %v154
  %v912 = vunpack.c.h.b16 %v154
  %v913 = vunpack.c.l.b16 %v155
  %v914 = vunpack.c.h.b16 %v155
  %v915 = vunpack.c.l.b16 %v156
  %v916 = vunpack.c.h.b16 %v156
  %v917 = vunpack.c.l.b16 %v157
  %v918 = vunpack.c.h.b16 %v157
  %v919 = vunpack.c.l.b16 %v158
  %v920 = vunpack.c.h.b16 %v158
  %v921 = vunpack.c.l.b16 %v159
  %v922 = vunpack.c.h.b16 %v159
  %v923 = vunpack.c.l.b16 %v160
  %v924 = vunpack.c.h.b16 %v160
  %v925 = vunpack.c.l.b16 %v161
  %v926 = vunpack.c.h.b16 %v161
  %v927 = vunpack.c.l.b16 %v162
  %v928 = vunpack.c.h.b16 %v162
  %v929 = vunpack.c.l.b16 %v163
  %v930 = vunpack.c.h.b16 %v163
  %v931 = vunpack.c.l.b16 %v164
  %v932 = vunpack.c.h.b16 %v164
  %v933 = vunpack.c.l.b16 %v165
  %v934 = vunpack.c.h.b16 %v165
  %v935 = vunpack.c.l.b16 %v166
  %v936 = vunpack.c.h.b16 %v166
  %v937 = vunpack.c.l.b16 %v167
  %v938 = vunpack.c.h.b16 %v167
  %v939 = vunpack.c.l.b16 %v168
  %v940 = vunpack.c.h.b16 %v168
  %v941 = vunpack.c.l.b16 %v169
  %v942 = vunpack.c.h.b16 %v169
  %v943 = vunpack.c.l.b16 %v170
  %v944 = vunpack.c.h.b16 %v170
  %v945 = vunpack.c.l.b16 %v171
  %v946 = vunpack.c.h.b16 %v171
  %v947 = vunpack.c.l.b16 %v172
  %v948 = vunpack.c.h.b16 %v172
  %v949 = vunpack.c.l.b16 %v173
  %v950 = vunpack.c.h.b16 %v173
  %v951 = vunpack.c.l.b16 %v174
  %v952 = vunpack.c.h.b16 %v174
  %v953 = vunpack.c.l.b16 %v175
  %v954 = vunpack.c.h.b16 %v175
  %v955 = vunpack.c.l.b16 %v176
  %v956 = vunpack.c.h.b16 %v176
  %v957 = vunpack.c.l.b16 %v177
  %v958 = vunpack.c.h.b16 %v177
  %v959 = vunpack.c.l.b16 %v178
  %v960 = vunpack.c.h.b16 %v178
  %v961 = vunpack.c.l.b16 %v179
  %v962 = vunpack.c.h.b16 %v179
  %v963 = vunpack.c.l.b16 %v180
  %v964 = vunpack.c.h.b16 %v180
  %v965 = vunpack.c.l.b16 %v181
  %v966 = vunpack.c.h.b16 %v181
  %v967 = vunpack.c.l.b16 %v182
  %v968 = vunpack.c.h.b16 %v182
  %v969 = vunpack.c.l.b16 %v183
  %v970 = vunpack.c.h.b16 %v183
  %v971 = vunpack.c.l.b16 %v184
  %v972 = vunpack.c.h.b16 %v184
  %v973 = vunpack.c.l.b16 %v185
  %v974 = vunpack.c.h.b16 %v185
  %v975 = vunpack.c.l.b16 %v186
  %v976 = vunpack.c.h.b16 %v186
  %v977 = vunpack.c.l.b16 %v187
  %v978 = vunpack.c.h.b16 %v187
  %v979 = vunpack.c.l.b16 %v188
  %v980 = vunpack.c.h.b16 %v188
  %v981 = vunpack.c.l.b16 %v189
  %v982 = vunpack.c.h.b16 %v189
  %v983 = vunpack.c.l.b16 %v190
  %v984 = vunpack.c.h.b16 %v190
  %v985 = vunpack.c.l.b16 %v191
  %v986 = vunpack.c.h.b16 %v191
  %v987 = vunpack.c.l.b16 %v192
  %v988 = vunpack.c.h.b16 %v192
  %v989 = vunpack.c.l.b16 %v193
  %v990 = vunpack.c.h.b16 %v193
  %v991 = vunpack.c.l.b16 %v194
  %v992 = vunpack.c.h.b16 %v194
  %v993 = vunpack.c.l.b16 %v195
  %v994 = vunpack.c.h.b16 %v195
  %v995 = vunpack.c.l.b16 %v196
  %v996 = vunpack.c.h.b16 %v196
  %v997 = vunpack.c.l.b16 %v197
  %v998 = vunpack.c.h.b16 %v197
  %v999 = vunpack.c.l.b16 %v198
  %v1000 = vunpack.c.h.b16 %v198
  %v1001 = vunpack.c.l.b16 %v199
  %v1002 = vunpack.c.h.b16 %v199
  %v1003 = vunpack.c.l.b16 %v200
  %v1004 = vunpack.c.h.b16 %v200
  %v1005 = vunpack.c.l.b16 %v201
  %v1006 = vunpack.c.h.b16 %v201
  %v1007 = vunpack.c.l.b16 %v202
  %v1008 = vunpack.c.h.b16 %v202
  %v1009 = vunpack.c.l.b16 %v203
  %v1010 = vunpack.c.h.b16 %v203
  %v1011 = vunpack.c.l.b16 %v204
  %v1012 = vunpack.c.h.b16 %v204
  %v1013 = vunpack.c.l.b16 %v205
  %v1014 = vunpack.c.h.b16 %v205
  %v1015 = vunpack.c.l.b16 %v206
  %v1016 = vunpack.c.h.b16 %v206
  %v1017 = vunpack.c.l.b16 %v207
  %v1018 = vunpack.c.h.b16 %v207
  %v1019 = vunpack.c.l.b16 %v208
  %v1020 = vunpack.c.h.b16 %v208
  %v1021 = vunpack.c.l.b16 %v209
  %v1022 = vunpack.c.h.b16 %v209
  %v1023 = vunpack.c.l.b16 %v210
  %v1024 = vunpack.c.h.b16 %v210
  %v1025 = vunpack.c.l.b16 %v211
  %v1026 = vunpack.c.h.b16 %v211
  %v1027 = vunpack.c.l.b16 %v212
  %v1028 = vunpack.c.h.b16 %v212
  %v1029 = vunpack.c.l.b16 %v213
  %v1030 = vunpack.c.h.b16 %v213
  %v1031 = vunpack.c.l.b16 %v214
  %v1032 = vunpack.c.h.b16 %v214
  %v1033 = vunpack.c.l.b16 %v215
  %v1034 = vunpack.c.h.b16 %v215
  %v1035 = vunpack.c.l.b16 %v216
  %v1036 = vunpack.c.h.b16 %v216
  %v1037 = vunpack.c.l.b16 %v217
  %v1038 = vunpack.c.h.b16 %v217
  %v1039 = vunpack.c.l.b16 %v218
  %v1040 = vunpack.c.h.b16 %v218
  %v1041 = vunpack.c.l.b16 %v219
  %v1042 = vunpack.c.h.b16 %v219
  %v1043 = vunpack.c.l.b16 %v220
  %v1044 = vunpack.c.h.b16 %v220
  %v1045 = vunpack.c.l.b16 %v221
  %v1046 = vunpack.c.h.b16 %v221
  %v1047 = vunpack.c.l.b16 %v222
  %v1048 = vunpack.c.h.b16 %v222
  %v1049 = vunpack.c.l.b16 %v223
  %v1050 = vunpack.c.h.b16 %v223
  %v1051 = vunpack.c.l.b16 %v224
  %v1052 = vunpack.c.h.b16 %v224
  %v1053 = vunpack.c.l.b16 %v225
  %v1054 = vunpack.c.h.b16 %v225
  %v1055 = vunpack.c.l.b16 %v226
  %v1056 = vunpack.c.h.b16 %v226
  %v1057 = vunpack.c.l.b16 %v227
  %v1058 = vunpack.c.h.b16 %v227
  %v1059 = vunpack.c.l.b16 %v228
  %v1060 = vunpack.c.h.b16 %v228
  %v1061 = vunpack.c.l.b16 %v229
  %v1062 = vunpack.c.h.b16 %v229
  %v1063 = vunpack.c.l.b16 %v230
  %v1064 = vunpack.c.h.b16 %v230
  %v1065 = vunpack.c.l.b16 %v231
  %v1066 = vunpack.c.h.b16 %v231
  %v1067 = vunpack.c.l.b16 %v232
  %v1068 = vunpack.c.h.b16 %v232
  %v1069 = vunpack.c.l.b16 %v233
  %v1070 = vunpack.c.h.b16 %v233
  %v1071 = vunpack.c.l.b16 %v234
  %v1072 = vunpack.c.h.b16 %v234
  %v1073 = vunpack.c.l.b16 %v235
  %v1074 = vunpack.c.h.b16 %v235
  %v1075 = vunpack.c.l.b16 %v236
  %v1076 = vunpack.c.h.b16 %v236
  %v1077 = vunpack.c.l.b16 %v237
  %v1078 = vunpack.c.h.b16 %v237
  %v1079 = vunpack.c.l.b16 %v238
  %v1080 = vunpack.c.h.b16 %v238
  %v1081 = vunpack.c.l.b16 %v239
  %v1082 = vunpack.c.h.b16 %v239
  %v1083 = vunpack.c.l.b16 %v240
  %v1084 = vunpack.c.h.b16 %v240
  %v1085 = vunpack.c.l.b16 %v241
  %v1086 = vunpack.c.h.b16 %v241
  %v1087 = vunpack.c.l.b16 %v242
  %v1088 = vunpack.c.h.b16 %v242
  %v1089 = vunpack.c.l.b16 %v243
  %v1090 = vunpack.c.h.b16 %v243
  %v1091 = vunpack.c.l.b16 %v244
  %v1092 = vunpack.c.h.b16 %v244
  %v1093 = vunpack.c.l.b16 %v245
  %v1094 = vunpack.c.h.b16 %v245
  %v1095 = vunpack.c.l.b16 %v246
  %v1096 = vunpack.c.h.b16 %v246
  %v1097 = vunpack.c.l.b16 %v247
  %v1098 = vunpack.c.h.b16 %v247
  %v1099 = vunpack.c.l.b16 %v248
  %v1100 = vunpack.c.h.b16 %v248
  %v1101 = vunpack.c.l.b16 %v249
  %v1102 = vunpack.c.h.b16 %v249
  %v1103 = vunpack.c.l.b16 %v250
  %v1104 = vunpack.c.h.b16 %v250
  %v1105 = vunpack.c.l.b16 %v251
  %v1106 = vunpack.c.h.b16 %v251
  %v1107 = vunpack.c.l.b16 %v252
  %v1108 = vunpack.c.h.b16 %v252
  %v1109 = vunpack.c.l.b16 %v253
  %v1110 = vunpack.c.h.b16 %v253
  %v1111 = vunpack.c.l.b16 %v254
  %v1112 = vunpack.c.h.b16 %v254
  %v1113 = vunpack.c.l.b16 %v255
  %v1114 = vunpack.c.h.b16 %v255
  %v1115 = vunpack.c.l.b16 %v256
  %v1116 = vunpack.c.h.b16 %v256
  %v1117 = vunpack.c.l.b16 %v257
  %v1118 = vunpack.c.h.b16 %v257
  %v1119 = vunpack.c.l.b16 %v258
  %v1120 = vunpack.c.h.b16 %v258
  %v1121 = vunpack.c.l.b16 %v259
  %v1122 = vunpack.c.h.b16 %v259
  %v1123 = vunpack.c.l.b16 %v260
  %v1124 = vunpack.c.h.b16 %v260
  %v1125 = vunpack.c.l.b16 %v261
  %v1126 = vunpack.c.h.b16 %v261
  %v1127 = vunpack.c.l.b16 %v262
  %v1128 = vunpack.c.h.b16 %v262
  %v1129 = vunpack.c.l.b16 %v263
  %v1130 = vunpack.c.h.b16 %v263
  %v1131 = vunpack.c.l.b16 %v264
  %v1132 = vunpack.c.h.b16 %v264
  %v1133 = vunpack.c.l.b16 %v265
  %v1134 = vunpack.c.h.b16 %v265
  %v1135 = vunpack.c.l.b16 %v266
  %v1136 = vunpack.c.h.b16 %v266
  %v1137 = vunpack.c.l.b16 %v267
  %v1138 = vunpack.c.h.b16 %v267
  %v1139 = vunpack.c.l.b16 %v268
  %v1140 = vunpack.c.h.b16 %v268
  %v1141 = vunpack.c.l.b16 %v269
  %v1142 = vunpack.c.h.b16 %v269
  %v1143 = vunpack.c.l.b16 %v270
  %v1144 = vunpack.c.h.b16 %v270
  %v1145 = vunpack.c.l.b16 %v271
  %v1146 = vunpack.c.h.b16 %v271
  %v1147 = vunpack.c.l.b16 %v272
  %v1148 = vunpack.c.h.b16 %v272
  %v1149 = vunpack.c.l.b16 %v273
  %v1150 = vunpack.c.h.b16 %v273
  %v1151 = vunpack.c.l.b16 %v274
  %v1152 = vunpack.c.h.b16 %v274
  %v1153 = vunpack.c.l.b16 %v275
  %v1154 = vunpack.c.h.b16 %v275
  %v1155 = vunpack.c.l.b16 %v276
  %v1156 = vunpack.c.h.b16 %v276
  %v1157 = vunpack.c.l.b16 %v277
  %v1158 = vunpack.c.h.b16 %v277
  %v1159 = vunpack.c.l.b16 %v278
  %v1160 = vunpack.c.h.b16 %v278
  %v1161 = vunpack.c.l.b16 %v279
  %v1162 = vunpack.c.h.b16 %v279
  %v1163 = vunpack.c.l.b16 %v280
  %v1164 = vunpack.c.h.b16 %v280
  %v1165 = vunpack.c.l.b16 %v281
  %v1166 = vunpack.c.h.b16 %v281
  %v1167 = vunpack.c.l.b16 %v282
  %v1168 = vunpack.c.h.b16 %v282
  %v1169 = vunpack.c.l.b16 %v283
  %v1170 = vunpack.c.h.b16 %v283
  %v1171 = vunpack.c.l.b16 %v284
  %v1172 = vunpack.c.h.b16 %v284
  %v1173 = vunpack.c.l.b16 %v285
  %v1174 = vunpack.c.h.b16 %v285
  %v1175 = vunpack.c.l.b16 %v286
  %v1176 = vunpack.c.h.b16 %v286
  %v1177 = vpack.c.b16 %v789, %v785
  %v1178 = vpack.c.b16 %v790, %v786
  %v1179 = vpack.c.b16 %v791, %v787
  %v1180 = vpack.c.b16 %v792, %v788
  %v1181 = vpack.c.b16 %v797, %v793
  %v1182 = vpack.c.b16 %v798, %v794
  %v1183 = vpack.c.b16 %v799, %v795
  %v1184 = vpack.c.b16 %v800, %v796
  %v1185 = vpack.c.b16 %v805, %v801
  %v1186 = vpack.c.b16 %v806, %v802
  %v1187 = vpack.c.b16 %v807, %v803
  %v1188 = vpack.c.b16 %v808, %v804
  %v1189 = vpack.c.b16 %v813, %v809
  %v1190 = vpack.c.b16 %v814, %v810
  %v1191 = vpack.c.b16 %v815, %v811
  %v1192 = vpack.c.b16 %v816, %v812
  %v1193 = vpack.c.b16 %v821, %v817
  %v1194 = vpack.c.b16 %v822, %v818
  %v1195 = vpack.c.b16 %v823, %v819
  %v1196 = vpack.c.b16 %v824, %v820
  %v1197 = vpack.c.b16 %v829, %v825
  %v1198 = vpack.c.b16 %v830, %v826
  %v1199 = vpack.c.b16 %v831, %v827
  %v1200 = vpack.c.b16 %v832, %v828
  %v1201 = vpack.c.b16 %v837, %v833
  %v1202 = vpack.c.b16 %v838, %v834
  %v1203 = vpack.c.b16 %v839, %v835
  %v1204 = vpack.c.b16 %v840, %v836
  %v1205 = vpack.c.b16 %v845, %v841
  %v1206 = vpack.c.b16 %v846, %v842
  %v1207 = vpack.c.b16 %v847, %v843
  %v1208 = vpack.c.b16 %v848, %v844
  %v1209 = vpack.c.b16 %v853, %v849
  %v1210 = vpack.c.b16 %v854, %v850
  %v1211 = vpack.c.b16 %v855, %v851
  %v1212 = vpack.c.b16 %v856, %v852
  %v1213 = vpack.c.b16 %v861, %v857
  %v1214 = vpack.c.b16 %v862, %v858
  %v1215 = vpack.c.b16 %v863, %v859
  %v1216 = vpack.c.b16 %v864, %v860
  %v1217 = vpack.c.b16 %v869, %v865
  %v1218 = vpack.c.b16 %v870, %v866
  %v1219 = vpack.c.b16 %v871, %v867
  %v1220 = vpack.c.b16 %v872, %v868
  %v1221 = vpack.c.b16 %v877, %v873
  %v1222 = vpack.c.b16 %v878, %v874
  %v1223 = vpack.c.b16 %v879, %v875
  %v1224 = vpack.c.b16 %v880, %v876
  %v1225 = vpack.c.b16 %v885, %v881
  %v1226 = vpack.c.b16 %v886, %v882
  %v1227 = vpack.c.b16 %v887, %v883
  %v1228 = vpack.c.b16 %v888, %v884
  %v1229 = vpack.c.b16 %v893, %v889
  %v1230 = vpack.c.b16 %v894, %v890
  %v1231 = vpack.c.b16 %v895, %v891
  %v1232 = vpack.c.b16 %v896, %v892
  %v1233 = vpack.c.b16 %v901, %v897
  %v1234 = vpack.c.b16 %v902, %v898
  %v1235 = vpack.c.b16 %v903, %v899
  %v1236 = vpack.c.b16 %v904, %v900
  %v1237 = vpack.c.b16 %v909, %v905
  %v1238 = vpack.c.b16 %v910, %v906
  %v1239 = vpack.c.b16 %v911, %v907
  %v1240 = vpack.c.b16 %v912, %v908
  %v1241 = vpack.c.b16 %v917, %v913
  %v1242 = vpack.c.b16 %v918, %v914
  %v1243 = vpack.c.b16 %v919, %v915
  %v1244 = vpack.c.b16 %v920, %v916
  %v1245 = vpack.c.b16 %v925, %v921
  %v1246 = vpack.c.b16 %v926, %v922
  %v1247 = vpack.c.b16 %v927, %v923
  %v1248 = vpack.c.b16 %v928, %v924
  %v1249 = vpack.c.b16 %v933, %v929
  %v1250 = vpack.c.b16 %v934, %v930
  %v1251 = vpack.c.b16 %v935, %v931
  %v1252 = vpack.c.b16 %v936, %v932
  %v1253 = vpack.c.b16 %v941, %v937
  %v1254 = vpack.c.b16 %v942, %v938
  %v1255 = vpack.c.b16 %v943, %v939
  %v1256 = vpack.c.b16 %v944, %v940
  %v1257 = vpack.c.b16 %v949, %v945
  %v1258 = vpack.c.b16 %v950, %v946
  %v1259 = vpack.c.b16 %v951, %v947
  %v1260 = vpack.c.b16 %v952, %v948
  %v1261 = vpack.c.b16 %v957, %v953
  %v1262 = vpack.c.b16 %v958, %v954
  %v1263 = vpack.c.b16 %v959, %v955
  %v1264 = vpack.c.b16 %v960, %v956
  %v1265 = vpack.c.b16 %v965, %v961
  %v1266 = vpack.c.b16 %v966, %v962
  %v1267 = vpack.c.b16 %v967, %v963
  %v1268 = vpack.c.b16 %v968, %v964
  %v1269 = vpack.c.b16 %v973, %v969
  %v1270 = vpack.c.b16 %v974, %v970
  %v1271 = vpack.c.b16 %v975, %v971
  %v1272 = vpack.c.b16 %v976, %v972
  %v1273 = vpack.c.b16 %v981, %v977
  %v1274 = vpack.c.b16 %v982, %v978
  %v1275 = vpack.c.b16 %v983, %v979
  %v1276 = vpack.c.b16 %v984, %v980
  %v1277 = vpack.c.b16 %v989, %v985
  %v1278 = vpack.c.b16 %v990, %v986
  %v1279 = vpack.c.b16 %v991, %v987
  %v1280 = vpack.c.b16 %v992, %v988
  %v1281 = vpack.c.b16 %v997, %v993
  %v1282 = vpack.c.b16 %v998, %v994
  %v1283 = vpack.c.b16 %v999, %v995
  %v1284 = vpack.c.b16 %v1000, %v996
  %v1285 = vpack.c.b16 %v1005, %v1001
  %v1286 = vpack.c.b16 %v1006, %v1002
  %v1287 = vpack.c.b16 %v1007, %v1003
  %v1288 = vpack.c.b16 %v1008, %v1004
  %v1289 = vpack.c.b16 %v1013, %v1009
  %v1290 = vpack.c.b16 %v1014, %v1010
  %v1291 = vpack.c.b16 %v1015, %v1011
  %v1292 = vpack.c.b16 %v1016, %v1012
  %v1293 = vpack.c.b16 %v1021, %v1017
  %v1294 = vpack.c.b16 %v1022, %v1018
  %v1295 = vpack.c.b16 %v1023, %v1019
  %v1296 = vpack.c.b16 %v1024, %v1020
  %v1297 = vpack.c.b16 %v1029, %v1025
  %v1298 = vpack.c.b16 %v1030, %v1026
  %v1299 = vpack.c.b16 %v1031, %v1027
  %v1300 = vpack.c.b16 %v1032, %v1028
  %v1301 = vpack.c.b16 %v1037, %v1033
  %v1302 = vpack.c.b16 %v1038, %v1034
  %v1303 = vpack.c.b16 %v1039, %v1035
  %v1304 = vpack.c.b16 %v1040, %v1036
  %v1305 = vpack.c.b16 %v1045, %v1041
  %v1306 = vpack.c.b16 %v1046, %v1042
  %v1307 = vpack.c.b16 %v1047, %v1043
  %v1308 = vpack.c.b16 %v1048, %v1044
  %v1309 = vpack.c.b16 %v1053, %v1049
  %v1310 = vpack.c.b16 %v1054, %v1050
  %v1311 = vpack.c.b16 %v1055, %v1051
  %v1312 = vpack.c.b16 %v1056, %v1052
  %v1313 = vpack.c.b16 %v1061, %v1057
  %v1314 = vpack.c.b16 %v1062, %v1058
  %v1315 = vpack.c.b16 %v1063, %v1059
  %v1316 = vpack.c.b16 %v1064, %v1060
  %v1317 = vpack.c.b16 %v1069, %v1065
  %v1318 = vpack.c.b16 %v1070, %v1066
  %v1319 = vpack.c.b16 %v1071, %v1067
  %v1320 = vpack.c.b16 %v1072, %v1068
  %v1321 = vpack.c.b16 %v1077, %v1073
  %v1322 = vpack.c.b16 %v1078, %v1074
  %v1323 = vpack.c.b16 %v1079, %v1075
  %v1324 = vpack.c.b16 %v1080, %v1076
  %v1325 = vpack.c.b16 %v1085, %v1081
  %v1326 = vpack.c.b16 %v1086, %v1082
  %v1327 = vpack.c.b16 %v1087, %v1083
  %v1328 = vpack.c.b16 %v1088, %v1084
  %v1329 = vpack.c.b16 %v1093, %v1089
  %v1330 = vpack.c.b16 %v1094, %v1090
  %v1331 = vpack.c.b16 %v1095, %v1091
  %v1332 = vpack.c.b16 %v1096, %v1092
  %v1333 = vpack.c.b16 %v1101, %v1097
  %v1334 = vpack.c.b16 %v1102, %v1098
  %v1335 = vpack.c.b16 %v1103, %v1099
  %v1336 = vpack.c.b16 %v1104, %v1100
  %v1337 = vpack.c.b16 %v1109, %v1105
  %v1338 = vpack.c.b16 %v1110, %v1106
  %v1339 = vpack.c.b16 %v1111, %v1107
  %v1340 = vpack.c.b16 %v1112, %v1108
  %v1341 = vpack.c.b16 %v1117, %v1113
  %v1342 = vpack.c.b16 %v1118, %v1114
  %v1343 = vpack.c.b16 %v1119, %v1115
  %v1344 = vpack.c.b16 %v1120, %v1116
  %v1345 = vpack.c.b16 %v1125, %v1121
  %v1346 = vpack.c.b16 %v1126, %v1122
  %v1347 = vpack.c.b16 %v1127, %v1123
  %v1348 = vpack.c.b16 %v1128, %v1124
  %v1349 = vpack.c.b16 %v1133, %v1129
  %v1350 = vpack.c.b16 %v1134, %v1130
  %v1351 = vpack.c.b16 %v1135, %v1131
  %v1352 = vpack.c.b16 %v1136, %v1132
  %v1353 = vpack.c.b16 %v1141, %v1137
  %v1354 = vpack.c.b16 %v1142, %v1138
  %v1355 = vpack.c.b16 %v1143, %v1139
  %v1356 = vpack.c.b16 %v1144, %v1140
  %v1357 = vpack.c.b16 %v1149, %v1145
  %v1358 = vpack.c.b16 %v1150, %v1146
  %v1359 = vpack.c.b16 %v1151, %v1147
  %v1360 = vpack.c.b16 %v1152, %v1148
  %v1361 = vpack.c.b16 %v1157, %v1153
  %v1362 = vpack.c.b16 %v1158, %v1154
  %v1363 = vpack.c.b16 %v1159, %v1155
  %v1364 = vpack.c.b16 %v1160, %v1156
  %v1365 = vpack.c.b16 %v1165, %v1161
  %v1366 = vpack.c.b16 %v1166, %v1162
  %v1367 = vpack.c.b16 %v1167, %v1163
  %v1368 = vpack.c.b16 %v1168, %v1164
  %v1369 = vpack.c.b16 %v1173, %v1169
  %v1370 = vpack.c.b16 %v1174, %v1170
  %v1371 = vpack.c.b16 %v1175, %v1171
  %v1372 = vpack.c.b16 %v1176, %v1172
  %vm1569 = vcmask 130048
  %v1571 = vsel %vm1569, %v491, 0
  %v1574 = vsel %vm1569, %v498, 0
  %v1577 = vsel %vm1569, %v505, 0
  %v1580 = vsel %vm1569, %v512, 0
  %v1583 = vsel %vm1569, %v519, 0
  %v1586 = vsel %vm1569, %v526, 0
  %v1589 = vsel %vm1569, %v533, 0
  %v1592 = vsel %vm1569, %v540, 0
  %1594 = vmatprep.subr.bf16.mxu0 %v1178
  %1595 = vmatpush1.bf16.msra.mxu0 %v1177
  %1596 = vmatprep.subr.bf16.mxu0 %v1182
  %1597 = vmatpush1.bf16.msra.mxu0 %v1181
  %1598 = vmatprep.subr.bf16.mxu0 %v1186
  %1599 = vmatpush1.bf16.msra.mxu0 %v1185
  %1600 = vmatprep.subr.bf16.mxu0 %v1190
  %1601 = vmatpush1.bf16.msra.mxu0 %v1189
  %1602 = vmatprep.subr.bf16.mxu0 %v1194
  %1603 = vmatpush1.bf16.msra.mxu0 %v1193
  %1604 = vmatprep.subr.bf16.mxu0 %v1198
  %1605 = vmatpush1.bf16.msra.mxu0 %v1197
  %1606 = vmatprep.subr.bf16.mxu0 %v1202
  %1607 = vmatpush1.bf16.msra.mxu0 %v1201
  %1608 = vmatprep.subr.bf16.mxu0 %v1206
  %1609 = vmatpush1.bf16.msra.mxu0 %v1205
  %1610 = vmatprep.subr.bf16.mxu0 %v1210
  %1611 = vmatpush1.bf16.msra.mxu0 %v1209
  %1612 = vmatprep.subr.bf16.mxu0 %v1214
  %1613 = vmatpush1.bf16.msra.mxu0 %v1213
  %1614 = vmatprep.subr.bf16.mxu0 %v1218
  %1615 = vmatpush1.bf16.msra.mxu0 %v1217
  %1616 = vmatprep.subr.bf16.mxu0 %v1222
  %1617 = vmatpush1.bf16.msra.mxu0 %v1221
  %1618 = vmatprep.subr.bf16.mxu0 %v1226
  %1619 = vmatpush1.bf16.msra.mxu0 %v1225
  %1620 = vmatprep.subr.bf16.mxu0 %v1230
  %1621 = vmatpush1.bf16.msra.mxu0 %v1229
  %1622 = vmatprep.subr.bf16.mxu0 %v1234
  %1623 = vmatpush1.bf16.msra.mxu0 %v1233
  %1624 = vmatprep.subr.bf16.mxu0 %v1238
  %1625 = vmatpush1.bf16.msra.mxu0 %v1237
  %1626 = vmatprep.mubr.bf16.mxu0 %v486
  %1627 = vmatmul.mubr.bf16.gmra.mrb[0].mxu0 %v485
  %v1628 = vpop.f32.mrb[0].mxu0
  %v1629 = vadd.f32 %v292, %v1628
  %v1630 = vpop.f32.mrb[0].mxu0
  %v1631 = vadd.f32 %v296, %v1630
  %v1632 = vpop.f32.mrb[0].mxu0
  %v1633 = vadd.f32 %v292, %v1632
  %v1634 = vpop.f32.mrb[0].mxu0
  %v1635 = vadd.f32 %v296, %v1634
  %1636 = vmatprep.mubr.bf16.mxu0 %v493
  %1637 = vmatmul.mubr.bf16.gmra.mrb[0].mxu0 %v492
  %v1638 = vpop.f32.mrb[0].mxu0
  %v1639 = vadd.f32 %v292, %v1638
  %v1640 = vpop.f32.mrb[0].mxu0
  %v1641 = vadd.f32 %v296, %v1640
  %v1642 = vpop.f32.mrb[0].mxu0
  %v1643 = vadd.f32 %v292, %v1642
  %v1644 = vpop.f32.mrb[0].mxu0
  %v1645 = vadd.f32 %v296, %v1644
  %1646 = vmatprep.mubr.bf16.mxu0 %v500
  %1647 = vmatmul.mubr.bf16.gmra.mrb[0].mxu0 %v499
  %v1648 = vpop.f32.mrb[0].mxu0
  %v1649 = vadd.f32 %v292, %v1648
  %v1650 = vpop.f32.mrb[0].mxu0
  %v1651 = vadd.f32 %v296, %v1650
  %v1652 = vpop.f32.mrb[0].mxu0
  %v1653 = vadd.f32 %v292, %v1652
  %v1654 = vpop.f32.mrb[0].mxu0
  %v1655 = vadd.f32 %v296, %v1654
  %1656 = vmatprep.mubr.bf16.mxu0 %v507
  %1657 = vmatmul.mubr.bf16.gmra.mrb[0].mxu0 %v506
  %v1658 = vpop.f32.mrb[0].mxu0
  %v1659 = vadd.f32 %v292, %v1658
  %v1660 = vpop.f32.mrb[0].mxu0
  %v1661 = vadd.f32 %v296, %v1660
  %v1662 = vpop.f32.mrb[0].mxu0
  %v1663 = vadd.f32 %v292, %v1662
  %v1664 = vpop.f32.mrb[0].mxu0
  %v1665 = vadd.f32 %v296, %v1664
  %1666 = vmatprep.mubr.bf16.mxu0 %v514
  %1667 = vmatmul.mubr.bf16.gmra.mrb[0].mxu0 %v513
  %v1668 = vpop.f32.mrb[0].mxu0
  %v1669 = vadd.f32 %v292, %v1668
  %v1670 = vpop.f32.mrb[0].mxu0
  %v1671 = vadd.f32 %v296, %v1670
  %v1672 = vpop.f32.mrb[0].mxu0
  %v1673 = vadd.f32 %v292, %v1672
  %v1674 = vpop.f32.mrb[0].mxu0
  %v1675 = vadd.f32 %v296, %v1674
  %1676 = vmatprep.mubr.bf16.mxu0 %v521
  %1677 = vmatmul.mubr.bf16.gmra.mrb[0].mxu0 %v520
  %v1678 = vpop.f32.mrb[0].mxu0
  %v1679 = vadd.f32 %v292, %v1678
  %v1680 = vpop.f32.mrb[0].mxu0
  %v1681 = vadd.f32 %v296, %v1680
  %v1682 = vpop.f32.mrb[0].mxu0
  %v1683 = vadd.f32 %v292, %v1682
  %v1684 = vpop.f32.mrb[0].mxu0
  %v1685 = vadd.f32 %v296, %v1684
  %1686 = vmatprep.mubr.bf16.mxu0 %v528
  %1687 = vmatmul.mubr.bf16.gmra.mrb[0].mxu0 %v527
  %v1688 = vpop.f32.mrb[0].mxu0
  %v1689 = vadd.f32 %v292, %v1688
  %v1690 = vpop.f32.mrb[0].mxu0
  %v1691 = vadd.f32 %v296, %v1690
  %v1692 = vpop.f32.mrb[0].mxu0
  %v1693 = vadd.f32 %v292, %v1692
  %v1694 = vpop.f32.mrb[0].mxu0
  %v1695 = vadd.f32 %v296, %v1694
  %1696 = vmatprep.mubr.bf16.mxu0 %v535
  %1697 = vmatmul.mubr.bf16.gmra.mrb[0].mxu0 %v534
  %v1698 = vpop.f32.mrb[0].mxu0
  %v1699 = vadd.f32 %v292, %v1698
  %v1700 = vpop.f32.mrb[0].mxu0
  %v1701 = vadd.f32 %v296, %v1700
  %v1702 = vpop.f32.mrb[0].mxu0
  %v1703 = vadd.f32 %v292, %v1702
  %v1704 = vpop.f32.mrb[0].mxu0
  %v1705 = vadd.f32 %v296, %v1704
  %1706 = vdwg.mxu0
  %1707 = vmatprep.subr.bf16.mxu0 %v1242
  %1708 = vmatpush1.bf16.msra.mxu0 %v1241
  %1709 = vmatprep.subr.bf16.mxu0 %v1246
  %1710 = vmatpush1.bf16.msra.mxu0 %v1245
  %1711 = vmatprep.subr.bf16.mxu0 %v1250
  %1712 = vmatpush1.bf16.msra.mxu0 %v1249
  %1713 = vmatprep.subr.bf16.mxu0 %v1254
  %1714 = vmatpush1.bf16.msra.mxu0 %v1253
  %1715 = vmatprep.subr.bf16.mxu0 %v1258
  %1716 = vmatpush1.bf16.msra.mxu0 %v1257
  %1717 = vmatprep.subr.bf16.mxu0 %v1262
  %1718 = vmatpush1.bf16.msra.mxu0 %v1261
  %1719 = vmatprep.subr.bf16.mxu0 %v1266
  %1720 = vmatpush1.bf16.msra.mxu0 %v1265
  %1721 = vmatprep.subr.bf16.mxu0 %v1270
  %1722 = vmatpush1.bf16.msra.mxu0 %v1269
  %1723 = vmatprep.subr.bf16.mxu0 %v1274
  %1724 = vmatpush1.bf16.msra.mxu0 %v1273
  %1725 = vmatprep.subr.bf16.mxu0 %v1278
  %1726 = vmatpush1.bf16.msra.mxu0 %v1277
  %1727 = vmatprep.subr.bf16.mxu0 %v1282
  %1728 = vmatpush1.bf16.msra.mxu0 %v1281
  %1729 = vmatprep.subr.bf16.mxu0 %v1286
  %1730 = vmatpush1.bf16.msra.mxu0 %v1285
  %1731 = vmatprep.subr.bf16.mxu0 %v1290
  %1732 = vmatpush1.bf16.msra.mxu0 %v1289
  %1733 = vmatprep.subr.bf16.mxu0 %v1294
  %1734 = vmatpush1.bf16.msra.mxu0 %v1293
  %1735 = vmatprep.subr.bf16.mxu0 %v1298
  %1736 = vmatpush1.bf16.msra.mxu0 %v1297
  %1737 = vmatprep.subr.bf16.mxu0 %v1302
  %1738 = vmatpush1.bf16.msra.mxu0 %v1301
  %1739 = vmatprep.mubr.bf16.mxu0 %v488
  %1740 = vmatmul.mubr.bf16.gmra.mrb[0].mxu0 %v487
  %v1741 = vpop.f32.mrb[0].mxu0
  %v1742 = vadd.f32 %v1629, %v1741
  %v1743 = vpop.f32.mrb[0].mxu0
  %v1744 = vadd.f32 %v1631, %v1743
  %v1745 = vpop.f32.mrb[0].mxu0
  %v1746 = vadd.f32 %v1633, %v1745
  %v1747 = vpop.f32.mrb[0].mxu0
  %v1748 = vadd.f32 %v1635, %v1747
  %1749 = vmatprep.mubr.bf16.mxu0 %v495
  %1750 = vmatmul.mubr.bf16.gmra.mrb[0].mxu0 %v494
  %v1751 = vpop.f32.mrb[0].mxu0
  %v1752 = vadd.f32 %v1639, %v1751
  %v1753 = vpop.f32.mrb[0].mxu0
  %v1754 = vadd.f32 %v1641, %v1753
  %v1755 = vpop.f32.mrb[0].mxu0
  %v1756 = vadd.f32 %v1643, %v1755
  %v1757 = vpop.f32.mrb[0].mxu0
  %v1758 = vadd.f32 %v1645, %v1757
  %1759 = vmatprep.mubr.bf16.mxu0 %v502
  %1760 = vmatmul.mubr.bf16.gmra.mrb[0].mxu0 %v501
  %v1761 = vpop.f32.mrb[0].mxu0
  %v1762 = vadd.f32 %v1649, %v1761
  %v1763 = vpop.f32.mrb[0].mxu0
  %v1764 = vadd.f32 %v1651, %v1763
  %v1765 = vpop.f32.mrb[0].mxu0
  %v1766 = vadd.f32 %v1653, %v1765
  %v1767 = vpop.f32.mrb[0].mxu0
  %v1768 = vadd.f32 %v1655, %v1767
  %1769 = vmatprep.mubr.bf16.mxu0 %v509
  %1770 = vmatmul.mubr.bf16.gmra.mrb[0].mxu0 %v508
  %v1771 = vpop.f32.mrb[0].mxu0
  %v1772 = vadd.f32 %v1659, %v1771
  %v1773 = vpop.f32.mrb[0].mxu0
  %v1774 = vadd.f32 %v1661, %v1773
  %v1775 = vpop.f32.mrb[0].mxu0
  %v1776 = vadd.f32 %v1663, %v1775
  %v1777 = vpop.f32.mrb[0].mxu0
  %v1778 = vadd.f32 %v1665, %v1777
  %1779 = vmatprep.mubr.bf16.mxu0 %v516
  %1780 = vmatmul.mubr.bf16.gmra.mrb[0].mxu0 %v515
  %v1781 = vpop.f32.mrb[0].mxu0
  %v1782 = vadd.f32 %v1669, %v1781
  %v1783 = vpop.f32.mrb[0].mxu0
  %v1784 = vadd.f32 %v1671, %v1783
  %v1785 = vpop.f32.mrb[0].mxu0
  %v1786 = vadd.f32 %v1673, %v1785
  %v1787 = vpop.f32.mrb[0].mxu0
  %v1788 = vadd.f32 %v1675, %v1787
  %1789 = vmatprep.mubr.bf16.mxu0 %v523
  %1790 = vmatmul.mubr.bf16.gmra.mrb[0].mxu0 %v522
  %v1791 = vpop.f32.mrb[0].mxu0
  %v1792 = vadd.f32 %v1679, %v1791
  %v1793 = vpop.f32.mrb[0].mxu0
  %v1794 = vadd.f32 %v1681, %v1793
  %v1795 = vpop.f32.mrb[0].mxu0
  %v1796 = vadd.f32 %v1683, %v1795
  %v1797 = vpop.f32.mrb[0].mxu0
  %v1798 = vadd.f32 %v1685, %v1797
  %1799 = vmatprep.mubr.bf16.mxu0 %v530
  %1800 = vmatmul.mubr.bf16.gmra.mrb[0].mxu0 %v529
  %v1801 = vpop.f32.mrb[0].mxu0
  %v1802 = vadd.f32 %v1689, %v1801
  %v1803 = vpop.f32.mrb[0].mxu0
  %v1804 = vadd.f32 %v1691, %v1803
  %v1805 = vpop.f32.mrb[0].mxu0
  %v1806 = vadd.f32 %v1693, %v1805
  %v1807 = vpop.f32.mrb[0].mxu0
  %v1808 = vadd.f32 %v1695, %v1807
  %1809 = vmatprep.mubr.bf16.mxu0 %v537
  %1810 = vmatmul.mubr.bf16.gmra.mrb[0].mxu0 %v536
  %v1811 = vpop.f32.mrb[0].mxu0
  %v1812 = vadd.f32 %v1699, %v1811
  %v1813 = vpop.f32.mrb[0].mxu0
  %v1814 = vadd.f32 %v1701, %v1813
  %v1815 = vpop.f32.mrb[0].mxu0
  %v1816 = vadd.f32 %v1703, %v1815
  %v1817 = vpop.f32.mrb[0].mxu0
  %v1818 = vadd.f32 %v1705, %v1817
  %1819 = vdwg.mxu0
  %1820 = vmatprep.subr.bf16.mxu0 %v1306
  %1821 = vmatpush1.bf16.msra.mxu0 %v1305
  %1822 = vmatprep.subr.bf16.mxu0 %v1310
  %1823 = vmatpush1.bf16.msra.mxu0 %v1309
  %1824 = vmatprep.subr.bf16.mxu0 %v1314
  %1825 = vmatpush1.bf16.msra.mxu0 %v1313
  %1826 = vmatprep.subr.bf16.mxu0 %v1318
  %1827 = vmatpush1.bf16.msra.mxu0 %v1317
  %1828 = vmatprep.subr.bf16.mxu0 %v1322
  %1829 = vmatpush1.bf16.msra.mxu0 %v1321
  %1830 = vmatprep.subr.bf16.mxu0 %v1326
  %1831 = vmatpush1.bf16.msra.mxu0 %v1325
  %1832 = vmatprep.subr.bf16.mxu0 %v1330
  %1833 = vmatpush1.bf16.msra.mxu0 %v1329
  %1834 = vmatprep.subr.bf16.mxu0 %v1334
  %1835 = vmatpush1.bf16.msra.mxu0 %v1333
  %1836 = vmatprep.subr.bf16.mxu0 %v1338
  %1837 = vmatpush1.bf16.msra.mxu0 %v1337
  %1838 = vmatprep.subr.bf16.mxu0 %v1342
  %1839 = vmatpush1.bf16.msra.mxu0 %v1341
  %1840 = vmatprep.subr.bf16.mxu0 %v1346
  %1841 = vmatpush1.bf16.msra.mxu0 %v1345
  %1842 = vmatprep.subr.bf16.mxu0 %v1350
  %1843 = vmatpush1.bf16.msra.mxu0 %v1349
  %1844 = vmatprep.subr.bf16.mxu0 %v1354
  %1845 = vmatpush1.bf16.msra.mxu0 %v1353
  %1846 = vmatprep.subr.bf16.mxu0 %v1358
  %1847 = vmatpush1.bf16.msra.mxu0 %v1357
  %1848 = vmatprep.subr.bf16.mxu0 %v1362
  %1849 = vmatpush1.bf16.msra.mxu0 %v1361
  %1850 = vmatprep.subr.bf16.mxu0 %v1366
  %1851 = vmatpush1.bf16.msra.mxu0 %v1365
  %1852 = vmatprep.mubr.bf16.mxu0 %v490
  %1853 = vmatmul.mubr.bf16.gmra.mrb[0].mxu0 %v489
  %v1854 = vpop.f32.mrb[0].mxu0
  %v1855 = vadd.f32 %v1742, %v1854
  %v1856 = vpop.f32.mrb[0].mxu0
  %v1857 = vadd.f32 %v1744, %v1856
  %v1858 = vpop.f32.mrb[0].mxu0
  %v1859 = vadd.f32 %v1746, %v1858
  %v1860 = vpop.f32.mrb[0].mxu0
  %v1861 = vadd.f32 %v1748, %v1860
  %1862 = vmatprep.mubr.bf16.mxu0 %v497
  %1863 = vmatmul.mubr.bf16.gmra.mrb[0].mxu0 %v496
  %v1864 = vpop.f32.mrb[0].mxu0
  %v1865 = vadd.f32 %v1752, %v1864
  %v1866 = vpop.f32.mrb[0].mxu0
  %v1867 = vadd.f32 %v1754, %v1866
  %v1868 = vpop.f32.mrb[0].mxu0
  %v1869 = vadd.f32 %v1756, %v1868
  %v1870 = vpop.f32.mrb[0].mxu0
  %v1871 = vadd.f32 %v1758, %v1870
  %1872 = vmatprep.mubr.bf16.mxu0 %v504
  %1873 = vmatmul.mubr.bf16.gmra.mrb[0].mxu0 %v503
  %v1874 = vpop.f32.mrb[0].mxu0
  %v1875 = vadd.f32 %v1762, %v1874
  %v1876 = vpop.f32.mrb[0].mxu0
  %v1877 = vadd.f32 %v1764, %v1876
  %v1878 = vpop.f32.mrb[0].mxu0
  %v1879 = vadd.f32 %v1766, %v1878
  %v1880 = vpop.f32.mrb[0].mxu0
  %v1881 = vadd.f32 %v1768, %v1880
  %1882 = vmatprep.mubr.bf16.mxu0 %v511
  %1883 = vmatmul.mubr.bf16.gmra.mrb[0].mxu0 %v510
  %v1884 = vpop.f32.mrb[0].mxu0
  %v1885 = vadd.f32 %v1772, %v1884
  %v1886 = vpop.f32.mrb[0].mxu0
  %v1887 = vadd.f32 %v1774, %v1886
  %v1888 = vpop.f32.mrb[0].mxu0
  %v1889 = vadd.f32 %v1776, %v1888
  %v1890 = vpop.f32.mrb[0].mxu0
  %v1891 = vadd.f32 %v1778, %v1890
  %1892 = vmatprep.mubr.bf16.mxu0 %v518
  %1893 = vmatmul.mubr.bf16.gmra.mrb[0].mxu0 %v517
  %v1894 = vpop.f32.mrb[0].mxu0
  %v1895 = vadd.f32 %v1782, %v1894
  %v1896 = vpop.f32.mrb[0].mxu0
  %v1897 = vadd.f32 %v1784, %v1896
  %v1898 = vpop.f32.mrb[0].mxu0
  %v1899 = vadd.f32 %v1786, %v1898
  %v1900 = vpop.f32.mrb[0].mxu0
  %v1901 = vadd.f32 %v1788, %v1900
  %1902 = vmatprep.mubr.bf16.mxu0 %v525
  %1903 = vmatmul.mubr.bf16.gmra.mrb[0].mxu0 %v524
  %v1904 = vpop.f32.mrb[0].mxu0
  %v1905 = vadd.f32 %v1792, %v1904
  %v1906 = vpop.f32.mrb[0].mxu0
  %v1907 = vadd.f32 %v1794, %v1906
  %v1908 = vpop.f32.mrb[0].mxu0
  %v1909 = vadd.f32 %v1796, %v1908
  %v1910 = vpop.f32.mrb[0].mxu0
  %v1911 = vadd.f32 %v1798, %v1910
  %1912 = vmatprep.mubr.bf16.mxu0 %v532
  %1913 = vmatmul.mubr.bf16.gmra.mrb[0].mxu0 %v531
  %v1914 = vpop.f32.mrb[0].mxu0
  %v1915 = vadd.f32 %v1802, %v1914
  %v1916 = vpop.f32.mrb[0].mxu0
  %v1917 = vadd.f32 %v1804, %v1916
  %v1918 = vpop.f32.mrb[0].mxu0
  %v1919 = vadd.f32 %v1806, %v1918
  %v1920 = vpop.f32.mrb[0].mxu0
  %v1921 = vadd.f32 %v1808, %v1920
  %1922 = vmatprep.mubr.bf16.mxu0 %v539
  %1923 = vmatmul.mubr.bf16.gmra.mrb[0].mxu0 %v538
  %v1924 = vpop.f32.mrb[0].mxu0
  %v1925 = vadd.f32 %v1812, %v1924
  %v1926 = vpop.f32.mrb[0].mxu0
  %v1927 = vadd.f32 %v1814, %v1926
  %v1928 = vpop.f32.mrb[0].mxu0
  %v1929 = vadd.f32 %v1816, %v1928
  %v1930 = vpop.f32.mrb[0].mxu0
  %v1931 = vadd.f32 %v1818, %v1930
  %1932 = vdwg.mxu0
  %1933 = vmatprep.subr.bf16.mxu0 %v1370
  %1934 = vmatpush1.bf16.msra.mxu0 %v1369
  %1935 = vmatprep.subr.bf16.mxu0 0
  %1936 = vmatpush1.bf16.msra.mxu0 0
  %1937 = vmatprep.subr.bf16.mxu0 0
  %1938 = vmatpush1.bf16.msra.mxu0 0
  %1939 = vmatprep.subr.bf16.mxu0 0
  %1940 = vmatpush1.bf16.msra.mxu0 0
  %1941 = vmatprep.subr.bf16.mxu0 0
  %1942 = vmatpush1.bf16.msra.mxu0 0
  %1943 = vmatprep.subr.bf16.mxu0 0
  %1944 = vmatpush1.bf16.msra.mxu0 0
  %1945 = vmatprep.subr.bf16.mxu0 0
  %1946 = vmatpush1.bf16.msra.mxu0 0
  %1947 = vmatprep.subr.bf16.mxu0 0
  %1948 = vmatpush1.bf16.msra.mxu0 0
  %1949 = vmatprep.subr.bf16.mxu0 0
  %1950 = vmatpush1.bf16.msra.mxu0 0
  %1951 = vmatprep.subr.bf16.mxu0 0
  %1952 = vmatpush1.bf16.msra.mxu0 0
  %1953 = vmatprep.subr.bf16.mxu0 0
  %1954 = vmatpush1.bf16.msra.mxu0 0
  %1955 = vmatprep.subr.bf16.mxu0 0
  %1956 = vmatpush1.bf16.msra.mxu0 0
  %1957 = vmatprep.subr.bf16.mxu0 0
  %1958 = vmatpush1.bf16.msra.mxu0 0
  %1959 = vmatprep.subr.bf16.mxu0 0
  %1960 = vmatpush1.bf16.msra.mxu0 0
  %1961 = vmatprep.subr.bf16.mxu0 0
  %1962 = vmatpush1.bf16.msra.mxu0 0
  %1963 = vmatprep.subr.bf16.mxu0 0
  %1964 = vmatpush1.bf16.msra.mxu0 0
  %1965 = vmatprep.mubr.bf16.mxu0 0
  %1966 = vmatmul.mubr.bf16.gmra.mrb[0].mxu0 %v1571
  %v1967 = vpop.f32.mrb[0].mxu0
  %v1968 = vadd.f32 %v1855, %v1967
  %v1969 = vpop.f32.mrb[0].mxu0
  %v1970 = vadd.f32 %v1857, %v1969
  %v1971 = vpop.f32.mrb[0].mxu0
  %v1972 = vadd.f32 %v1859, %v1971
  %v1973 = vpop.f32.mrb[0].mxu0
  %v1974 = vadd.f32 %v1861, %v1973
  %1975 = vmatprep.mubr.bf16.mxu0 0
  %1976 = vmatmul.mubr.bf16.gmra.mrb[0].mxu0 %v1574
  %v1977 = vpop.f32.mrb[0].mxu0
  %v1978 = vadd.f32 %v1865, %v1977
  %v1979 = vpop.f32.mrb[0].mxu0
  %v1980 = vadd.f32 %v1867, %v1979
  %v1981 = vpop.f32.mrb[0].mxu0
  %v1982 = vadd.f32 %v1869, %v1981
  %v1983 = vpop.f32.mrb[0].mxu0
  %v1984 = vadd.f32 %v1871, %v1983
  %1985 = vmatprep.mubr.bf16.mxu0 0
  %1986 = vmatmul.mubr.bf16.gmra.mrb[0].mxu0 %v1577
  %v1987 = vpop.f32.mrb[0].mxu0
  %v1988 = vadd.f32 %v1875, %v1987
  %v1989 = vpop.f32.mrb[0].mxu0
  %v1990 = vadd.f32 %v1877, %v1989
  %v1991 = vpop.f32.mrb[0].mxu0
  %v1992 = vadd.f32 %v1879, %v1991
  %v1993 = vpop.f32.mrb[0].mxu0
  %v1994 = vadd.f32 %v1881, %v1993
  %1995 = vmatprep.mubr.bf16.mxu0 0
  %1996 = vmatmul.mubr.bf16.gmra.mrb[0].mxu0 %v1580
  %v1997 = vpop.f32.mrb[0].mxu0
  %v1998 = vadd.f32 %v1885, %v1997
  %v1999 = vpop.f32.mrb[0].mxu0
  %v2000 = vadd.f32 %v1887, %v1999
  %v2001 = vpop.f32.mrb[0].mxu0
  %v2002 = vadd.f32 %v1889, %v2001
  %v2003 = vpop.f32.mrb[0].mxu0
  %v2004 = vadd.f32 %v1891, %v2003
  %2005 = vmatprep.mubr.bf16.mxu0 0
  %2006 = vmatmul.mubr.bf16.gmra.mrb[0].mxu0 %v1583
  %v2007 = vpop.f32.mrb[0].mxu0
  %v2008 = vadd.f32 %v1895, %v2007
  %v2009 = vpop.f32.mrb[0].mxu0
  %v2010 = vadd.f32 %v1897, %v2009
  %v2011 = vpop.f32.mrb[0].mxu0
  %v2012 = vadd.f32 %v1899, %v2011
  %v2013 = vpop.f32.mrb[0].mxu0
  %v2014 = vadd.f32 %v1901, %v2013
  %2015 = vmatprep.mubr.bf16.mxu0 0
  %2016 = vmatmul.mubr.bf16.gmra.mrb[0].mxu0 %v1586
  %v2017 = vpop.f32.mrb[0].mxu0
  %v2018 = vadd.f32 %v1905, %v2017
  %v2019 = vpop.f32.mrb[0].mxu0
  %v2020 = vadd.f32 %v1907, %v2019
  %v2021 = vpop.f32.mrb[0].mxu0
  %v2022 = vadd.f32 %v1909, %v2021
  %v2023 = vpop.f32.mrb[0].mxu0
  %v2024 = vadd.f32 %v1911, %v2023
  %2025 = vmatprep.mubr.bf16.mxu0 0
  %2026 = vmatmul.mubr.bf16.gmra.mrb[0].mxu0 %v1589
  %v2027 = vpop.f32.mrb[0].mxu0
  %v2028 = vadd.f32 %v1915, %v2027
  %v2029 = vpop.f32.mrb[0].mxu0
  %v2030 = vadd.f32 %v1917, %v2029
  %v2031 = vpop.f32.mrb[0].mxu0
  %v2032 = vadd.f32 %v1919, %v2031
  %v2033 = vpop.f32.mrb[0].mxu0
  %v2034 = vadd.f32 %v1921, %v2033
  %2035 = vmatprep.mubr.bf16.mxu0 0
  %2036 = vmatmul.mubr.bf16.gmra.mrb[0].mxu0 %v1592
  %v2037 = vpop.f32.mrb[0].mxu0
  %v2038 = vadd.f32 %v1925, %v2037
  %v2039 = vpop.f32.mrb[0].mxu0
  %v2040 = vadd.f32 %v1927, %v2039
  %v2041 = vpop.f32.mrb[0].mxu0
  %v2042 = vadd.f32 %v1929, %v2041
  %v2043 = vpop.f32.mrb[0].mxu0
  %v2044 = vadd.f32 %v1931, %v2043
  %2045 = vdwg.mxu0
  %2046 = vmatprep.subr.bf16.mxu0 %v1180
  %2047 = vmatpush1.bf16.msra.mxu0 %v1179
  %2048 = vmatprep.subr.bf16.mxu0 %v1184
  %2049 = vmatpush1.bf16.msra.mxu0 %v1183
  %2050 = vmatprep.subr.bf16.mxu0 %v1188
  %2051 = vmatpush1.bf16.msra.mxu0 %v1187
  %2052 = vmatprep.subr.bf16.mxu0 %v1192
  %2053 = vmatpush1.bf16.msra.mxu0 %v1191
  %2054 = vmatprep.subr.bf16.mxu0 %v1196
  %2055 = vmatpush1.bf16.msra.mxu0 %v1195
  %2056 = vmatprep.subr.bf16.mxu0 %v1200
  %2057 = vmatpush1.bf16.msra.mxu0 %v1199
  %2058 = vmatprep.subr.bf16.mxu0 %v1204
  %2059 = vmatpush1.bf16.msra.mxu0 %v1203
  %2060 = vmatprep.subr.bf16.mxu0 %v1208
  %2061 = vmatpush1.bf16.msra.mxu0 %v1207
  %2062 = vmatprep.subr.bf16.mxu0 %v1212
  %2063 = vmatpush1.bf16.msra.mxu0 %v1211
  %2064 = vmatprep.subr.bf16.mxu0 %v1216
  %2065 = vmatpush1.bf16.msra.mxu0 %v1215
  %2066 = vmatprep.subr.bf16.mxu0 %v1220
  %2067 = vmatpush1.bf16.msra.mxu0 %v1219
  %2068 = vmatprep.subr.bf16.mxu0 %v1224
  %2069 = vmatpush1.bf16.msra.mxu0 %v1223
  %2070 = vmatprep.subr.bf16.mxu0 %v1228
  %2071 = vmatpush1.bf16.msra.mxu0 %v1227
  %2072 = vmatprep.subr.bf16.mxu0 %v1232
  %2073 = vmatpush1.bf16.msra.mxu0 %v1231
  %2074 = vmatprep.subr.bf16.mxu0 %v1236
  %2075 = vmatpush1.bf16.msra.mxu0 %v1235
  %2076 = vmatprep.subr.bf16.mxu0 %v1240
  %2077 = vmatpush1.bf16.msra.mxu0 %v1239
  %2078 = vmatprep.mubr.bf16.mxu0 %v486
  %2079 = vmatmul.mubr.bf16.gmra.mrb[0].mxu0 %v485
  %v2080 = vpop.f32.mrb[0].mxu0
  %v2081 = vadd.f32 %v300, %v2080
  %v2082 = vpop.f32.mrb[0].mxu0
  %v2083 = vadd.f32 %v304, %v2082
  %v2084 = vpop.f32.mrb[0].mxu0
  %v2085 = vadd.f32 %v300, %v2084
  %v2086 = vpop.f32.mrb[0].mxu0
  %v2087 = vadd.f32 %v304, %v2086
  %2088 = vmatprep.mubr.bf16.mxu0 %v493
  %2089 = vmatmul.mubr.bf16.gmra.mrb[0].mxu0 %v492
  %v2090 = vpop.f32.mrb[0].mxu0
  %v2091 = vadd.f32 %v300, %v2090
  %v2092 = vpop.f32.mrb[0].mxu0
  %v2093 = vadd.f32 %v304, %v2092
  %v2094 = vpop.f32.mrb[0].mxu0
  %v2095 = vadd.f32 %v300, %v2094
  %v2096 = vpop.f32.mrb[0].mxu0
  %v2097 = vadd.f32 %v304, %v2096
  %2098 = vmatprep.mubr.bf16.mxu0 %v500
  %2099 = vmatmul.mubr.bf16.gmra.mrb[0].mxu0 %v499
  %v2100 = vpop.f32.mrb[0].mxu0
  %v2101 = vadd.f32 %v300, %v2100
  %v2102 = vpop.f32.mrb[0].mxu0
  %v2103 = vadd.f32 %v304, %v2102
  %v2104 = vpop.f32.mrb[0].mxu0
  %v2105 = vadd.f32 %v300, %v2104
  %v2106 = vpop.f32.mrb[0].mxu0
  %v2107 = vadd.f32 %v304, %v2106
  %2108 = vmatprep.mubr.bf16.mxu0 %v507
  %2109 = vmatmul.mubr.bf16.gmra.mrb[0].mxu0 %v506
  %v2110 = vpop.f32.mrb[0].mxu0
  %v2111 = vadd.f32 %v300, %v2110
  %v2112 = vpop.f32.mrb[0].mxu0
  %v2113 = vadd.f32 %v304, %v2112
  %v2114 = vpop.f32.mrb[0].mxu0
  %v2115 = vadd.f32 %v300, %v2114
  %v2116 = vpop.f32.mrb[0].mxu0
  %v2117 = vadd.f32 %v304, %v2116
  %2118 = vmatprep.mubr.bf16.mxu0 %v514
  %2119 = vmatmul.mubr.bf16.gmra.mrb[0].mxu0 %v513
  %v2120 = vpop.f32.mrb[0].mxu0
  %v2121 = vadd.f32 %v300, %v2120
  %v2122 = vpop.f32.mrb[0].mxu0
  %v2123 = vadd.f32 %v304, %v2122
  %v2124 = vpop.f32.mrb[0].mxu0
  %v2125 = vadd.f32 %v300, %v2124
  %v2126 = vpop.f32.mrb[0].mxu0
  %v2127 = vadd.f32 %v304, %v2126
  %2128 = vmatprep.mubr.bf16.mxu0 %v521
  %2129 = vmatmul.mubr.bf16.gmra.mrb[0].mxu0 %v520
  %v2130 = vpop.f32.mrb[0].mxu0
  %v2131 = vadd.f32 %v300, %v2130
  %v2132 = vpop.f32.mrb[0].mxu0
  %v2133 = vadd.f32 %v304, %v2132
  %v2134 = vpop.f32.mrb[0].mxu0
  %v2135 = vadd.f32 %v300, %v2134
  %v2136 = vpop.f32.mrb[0].mxu0
  %v2137 = vadd.f32 %v304, %v2136
  %2138 = vmatprep.mubr.bf16.mxu0 %v528
  %2139 = vmatmul.mubr.bf16.gmra.mrb[0].mxu0 %v527
  %v2140 = vpop.f32.mrb[0].mxu0
  %v2141 = vadd.f32 %v300, %v2140
  %v2142 = vpop.f32.mrb[0].mxu0
  %v2143 = vadd.f32 %v304, %v2142
  %v2144 = vpop.f32.mrb[0].mxu0
  %v2145 = vadd.f32 %v300, %v2144
  %v2146 = vpop.f32.mrb[0].mxu0
  %v2147 = vadd.f32 %v304, %v2146
  %2148 = vmatprep.mubr.bf16.mxu0 %v535
  %2149 = vmatmul.mubr.bf16.gmra.mrb[0].mxu0 %v534
  %v2150 = vpop.f32.mrb[0].mxu0
  %v2151 = vadd.f32 %v300, %v2150
  %v2152 = vpop.f32.mrb[0].mxu0
  %v2153 = vadd.f32 %v304, %v2152
  %v2154 = vpop.f32.mrb[0].mxu0
  %v2155 = vadd.f32 %v300, %v2154
  %v2156 = vpop.f32.mrb[0].mxu0
  %v2157 = vadd.f32 %v304, %v2156
  %2158 = vdwg.mxu0
  %2159 = vmatprep.subr.bf16.mxu0 %v1244
  %2160 = vmatpush1.bf16.msra.mxu0 %v1243
  %2161 = vmatprep.subr.bf16.mxu0 %v1248
  %2162 = vmatpush1.bf16.msra.mxu0 %v1247
  %2163 = vmatprep.subr.bf16.mxu0 %v1252
  %2164 = vmatpush1.bf16.msra.mxu0 %v1251
  %2165 = vmatprep.subr.bf16.mxu0 %v1256
  %2166 = vmatpush1.bf16.msra.mxu0 %v1255
  %2167 = vmatprep.subr.bf16.mxu0 %v1260
  %2168 = vmatpush1.bf16.msra.mxu0 %v1259
  %2169 = vmatprep.subr.bf16.mxu0 %v1264
  %2170 = vmatpush1.bf16.msra.mxu0 %v1263
  %2171 = vmatprep.subr.bf16.mxu0 %v1268
  %2172 = vmatpush1.bf16.msra.mxu0 %v1267
  %2173 = vmatprep.subr.bf16.mxu0 %v1272
  %2174 = vmatpush1.bf16.msra.mxu0 %v1271
  %2175 = vmatprep.subr.bf16.mxu0 %v1276
  %2176 = vmatpush1.bf16.msra.mxu0 %v1275
  %2177 = vmatprep.subr.bf16.mxu0 %v1280
  %2178 = vmatpush1.bf16.msra.mxu0 %v1279
  %2179 = vmatprep.subr.bf16.mxu0 %v1284
  %2180 = vmatpush1.bf16.msra.mxu0 %v1283
  %2181 = vmatprep.subr.bf16.mxu0 %v1288
  %2182 = vmatpush1.bf16.msra.mxu0 %v1287
  %2183 = vmatprep.subr.bf16.mxu0 %v1292
  %2184 = vmatpush1.bf16.msra.mxu0 %v1291
  %2185 = vmatprep.subr.bf16.mxu0 %v1296
  %2186 = vmatpush1.bf16.msra.mxu0 %v1295
  %2187 = vmatprep.subr.bf16.mxu0 %v1300
  %2188 = vmatpush1.bf16.msra.mxu0 %v1299
  %2189 = vmatprep.subr.bf16.mxu0 %v1304
  %2190 = vmatpush1.bf16.msra.mxu0 %v1303
  %2191 = vmatprep.mubr.bf16.mxu0 %v488
  %2192 = vmatmul.mubr.bf16.gmra.mrb[0].mxu0 %v487
  %v2193 = vpop.f32.mrb[0].mxu0
  %v2194 = vadd.f32 %v2081, %v2193
  %v2195 = vpop.f32.mrb[0].mxu0
  %v2196 = vadd.f32 %v2083, %v2195
  %v2197 = vpop.f32.mrb[0].mxu0
  %v2198 = vadd.f32 %v2085, %v2197
  %v2199 = vpop.f32.mrb[0].mxu0
  %v2200 = vadd.f32 %v2087, %v2199
  %2201 = vmatprep.mubr.bf16.mxu0 %v495
  %2202 = vmatmul.mubr.bf16.gmra.mrb[0].mxu0 %v494
  %v2203 = vpop.f32.mrb[0].mxu0
  %v2204 = vadd.f32 %v2091, %v2203
  %v2205 = vpop.f32.mrb[0].mxu0
  %v2206 = vadd.f32 %v2093, %v2205
  %v2207 = vpop.f32.mrb[0].mxu0
  %v2208 = vadd.f32 %v2095, %v2207
  %v2209 = vpop.f32.mrb[0].mxu0
  %v2210 = vadd.f32 %v2097, %v2209
  %2211 = vmatprep.mubr.bf16.mxu0 %v502
  %2212 = vmatmul.mubr.bf16.gmra.mrb[0].mxu0 %v501
  %v2213 = vpop.f32.mrb[0].mxu0
  %v2214 = vadd.f32 %v2101, %v2213
  %v2215 = vpop.f32.mrb[0].mxu0
  %v2216 = vadd.f32 %v2103, %v2215
  %v2217 = vpop.f32.mrb[0].mxu0
  %v2218 = vadd.f32 %v2105, %v2217
  %v2219 = vpop.f32.mrb[0].mxu0
  %v2220 = vadd.f32 %v2107, %v2219
  %2221 = vmatprep.mubr.bf16.mxu0 %v509
  %2222 = vmatmul.mubr.bf16.gmra.mrb[0].mxu0 %v508
  %v2223 = vpop.f32.mrb[0].mxu0
  %v2224 = vadd.f32 %v2111, %v2223
  %v2225 = vpop.f32.mrb[0].mxu0
  %v2226 = vadd.f32 %v2113, %v2225
  %v2227 = vpop.f32.mrb[0].mxu0
  %v2228 = vadd.f32 %v2115, %v2227
  %v2229 = vpop.f32.mrb[0].mxu0
  %v2230 = vadd.f32 %v2117, %v2229
  %2231 = vmatprep.mubr.bf16.mxu0 %v516
  %2232 = vmatmul.mubr.bf16.gmra.mrb[0].mxu0 %v515
  %v2233 = vpop.f32.mrb[0].mxu0
  %v2234 = vadd.f32 %v2121, %v2233
  %v2235 = vpop.f32.mrb[0].mxu0
  %v2236 = vadd.f32 %v2123, %v2235
  %v2237 = vpop.f32.mrb[0].mxu0
  %v2238 = vadd.f32 %v2125, %v2237
  %v2239 = vpop.f32.mrb[0].mxu0
  %v2240 = vadd.f32 %v2127, %v2239
  %2241 = vmatprep.mubr.bf16.mxu0 %v523
  %2242 = vmatmul.mubr.bf16.gmra.mrb[0].mxu0 %v522
  %v2243 = vpop.f32.mrb[0].mxu0
  %v2244 = vadd.f32 %v2131, %v2243
  %v2245 = vpop.f32.mrb[0].mxu0
  %v2246 = vadd.f32 %v2133, %v2245
  %v2247 = vpop.f32.mrb[0].mxu0
  %v2248 = vadd.f32 %v2135, %v2247
  %v2249 = vpop.f32.mrb[0].mxu0
  %v2250 = vadd.f32 %v2137, %v2249
  %2251 = vmatprep.mubr.bf16.mxu0 %v530
  %2252 = vmatmul.mubr.bf16.gmra.mrb[0].mxu0 %v529
  %v2253 = vpop.f32.mrb[0].mxu0
  %v2254 = vadd.f32 %v2141, %v2253
  %v2255 = vpop.f32.mrb[0].mxu0
  %v2256 = vadd.f32 %v2143, %v2255
  %v2257 = vpop.f32.mrb[0].mxu0
  %v2258 = vadd.f32 %v2145, %v2257
  %v2259 = vpop.f32.mrb[0].mxu0
  %v2260 = vadd.f32 %v2147, %v2259
  %2261 = vmatprep.mubr.bf16.mxu0 %v537
  %2262 = vmatmul.mubr.bf16.gmra.mrb[0].mxu0 %v536
  %v2263 = vpop.f32.mrb[0].mxu0
  %v2264 = vadd.f32 %v2151, %v2263
  %v2265 = vpop.f32.mrb[0].mxu0
  %v2266 = vadd.f32 %v2153, %v2265
  %v2267 = vpop.f32.mrb[0].mxu0
  %v2268 = vadd.f32 %v2155, %v2267
  %v2269 = vpop.f32.mrb[0].mxu0
  %v2270 = vadd.f32 %v2157, %v2269
  %2271 = vdwg.mxu0
  %2272 = vmatprep.subr.bf16.mxu0 %v1308
  %2273 = vmatpush1.bf16.msra.mxu0 %v1307
  %2274 = vmatprep.subr.bf16.mxu0 %v1312
  %2275 = vmatpush1.bf16.msra.mxu0 %v1311
  %2276 = vmatprep.subr.bf16.mxu0 %v1316
  %2277 = vmatpush1.bf16.msra.mxu0 %v1315
  %2278 = vmatprep.subr.bf16.mxu0 %v1320
  %2279 = vmatpush1.bf16.msra.mxu0 %v1319
  %2280 = vmatprep.subr.bf16.mxu0 %v1324
  %2281 = vmatpush1.bf16.msra.mxu0 %v1323
  %2282 = vmatprep.subr.bf16.mxu0 %v1328
  %2283 = vmatpush1.bf16.msra.mxu0 %v1327
  %2284 = vmatprep.subr.bf16.mxu0 %v1332
  %2285 = vmatpush1.bf16.msra.mxu0 %v1331
  %2286 = vmatprep.subr.bf16.mxu0 %v1336
  %2287 = vmatpush1.bf16.msra.mxu0 %v1335
  %2288 = vmatprep.subr.bf16.mxu0 %v1340
  %2289 = vmatpush1.bf16.msra.mxu0 %v1339
  %2290 = vmatprep.subr.bf16.mxu0 %v1344
  %2291 = vmatpush1.bf16.msra.mxu0 %v1343
  %2292 = vmatprep.subr.bf16.mxu0 %v1348
  %2293 = vmatpush1.bf16.msra.mxu0 %v1347
  %2294 = vmatprep.subr.bf16.mxu0 %v1352
  %2295 = vmatpush1.bf16.msra.mxu0 %v1351
  %2296 = vmatprep.subr.bf16.mxu0 %v1356
  %2297 = vmatpush1.bf16.msra.mxu0 %v1355
  %2298 = vmatprep.subr.bf16.mxu0 %v1360
  %2299 = vmatpush1.bf16.msra.mxu0 %v1359
  %2300 = vmatprep.subr.bf16.mxu0 %v1364
  %2301 = vmatpush1.bf16.msra.mxu0 %v1363
  %2302 = vmatprep.subr.bf16.mxu0 %v1368
  %2303 = vmatpush1.bf16.msra.mxu0 %v1367
  %2304 = vmatprep.mubr.bf16.mxu0 %v490
  %2305 = vmatmul.mubr.bf16.gmra.mrb[0].mxu0 %v489
  %v2306 = vpop.f32.mrb[0].mxu0
  %v2307 = vadd.f32 %v2194, %v2306
  %v2308 = vpop.f32.mrb[0].mxu0
  %v2309 = vadd.f32 %v2196, %v2308
  %v2310 = vpop.f32.mrb[0].mxu0
  %v2311 = vadd.f32 %v2198, %v2310
  %v2312 = vpop.f32.mrb[0].mxu0
  %v2313 = vadd.f32 %v2200, %v2312
  %2314 = vmatprep.mubr.bf16.mxu0 %v497
  %2315 = vmatmul.mubr.bf16.gmra.mrb[0].mxu0 %v496
  %v2316 = vpop.f32.mrb[0].mxu0
  %v2317 = vadd.f32 %v2204, %v2316
  %v2318 = vpop.f32.mrb[0].mxu0
  %v2319 = vadd.f32 %v2206, %v2318
  %v2320 = vpop.f32.mrb[0].mxu0
  %v2321 = vadd.f32 %v2208, %v2320
  %v2322 = vpop.f32.mrb[0].mxu0
  %v2323 = vadd.f32 %v2210, %v2322
  %2324 = vmatprep.mubr.bf16.mxu0 %v504
  %2325 = vmatmul.mubr.bf16.gmra.mrb[0].mxu0 %v503
  %v2326 = vpop.f32.mrb[0].mxu0
  %v2327 = vadd.f32 %v2214, %v2326
  %v2328 = vpop.f32.mrb[0].mxu0
  %v2329 = vadd.f32 %v2216, %v2328
  %v2330 = vpop.f32.mrb[0].mxu0
  %v2331 = vadd.f32 %v2218, %v2330
  %v2332 = vpop.f32.mrb[0].mxu0
  %v2333 = vadd.f32 %v2220, %v2332
  %2334 = vmatprep.mubr.bf16.mxu0 %v511
  %2335 = vmatmul.mubr.bf16.gmra.mrb[0].mxu0 %v510
  %v2336 = vpop.f32.mrb[0].mxu0
  %v2337 = vadd.f32 %v2224, %v2336
  %v2338 = vpop.f32.mrb[0].mxu0
  %v2339 = vadd.f32 %v2226, %v2338
  %v2340 = vpop.f32.mrb[0].mxu0
  %v2341 = vadd.f32 %v2228, %v2340
  %v2342 = vpop.f32.mrb[0].mxu0
  %v2343 = vadd.f32 %v2230, %v2342
  %2344 = vmatprep.mubr.bf16.mxu0 %v518
  %2345 = vmatmul.mubr.bf16.gmra.mrb[0].mxu0 %v517
  %v2346 = vpop.f32.mrb[0].mxu0
  %v2347 = vadd.f32 %v2234, %v2346
  %v2348 = vpop.f32.mrb[0].mxu0
  %v2349 = vadd.f32 %v2236, %v2348
  %v2350 = vpop.f32.mrb[0].mxu0
  %v2351 = vadd.f32 %v2238, %v2350
  %v2352 = vpop.f32.mrb[0].mxu0
  %v2353 = vadd.f32 %v2240, %v2352
  %2354 = vmatprep.mubr.bf16.mxu0 %v525
  %2355 = vmatmul.mubr.bf16.gmra.mrb[0].mxu0 %v524
  %v2356 = vpop.f32.mrb[0].mxu0
  %v2357 = vadd.f32 %v2244, %v2356
  %v2358 = vpop.f32.mrb[0].mxu0
  %v2359 = vadd.f32 %v2246, %v2358
  %v2360 = vpop.f32.mrb[0].mxu0
  %v2361 = vadd.f32 %v2248, %v2360
  %v2362 = vpop.f32.mrb[0].mxu0
  %v2363 = vadd.f32 %v2250, %v2362
  %2364 = vmatprep.mubr.bf16.mxu0 %v532
  %2365 = vmatmul.mubr.bf16.gmra.mrb[0].mxu0 %v531
  %v2366 = vpop.f32.mrb[0].mxu0
  %v2367 = vadd.f32 %v2254, %v2366
  %v2368 = vpop.f32.mrb[0].mxu0
  %v2369 = vadd.f32 %v2256, %v2368
  %v2370 = vpop.f32.mrb[0].mxu0
  %v2371 = vadd.f32 %v2258, %v2370
  %v2372 = vpop.f32.mrb[0].mxu0
  %v2373 = vadd.f32 %v2260, %v2372
  %2374 = vmatprep.mubr.bf16.mxu0 %v539
  %2375 = vmatmul.mubr.bf16.gmra.mrb[0].mxu0 %v538
  %v2376 = vpop.f32.mrb[0].mxu0
  %v2377 = vadd.f32 %v2264, %v2376
  %v2378 = vpop.f32.mrb[0].mxu0
  %v2379 = vadd.f32 %v2266, %v2378
  %v2380 = vpop.f32.mrb[0].mxu0
  %v2381 = vadd.f32 %v2268, %v2380
  %v2382 = vpop.f32.mrb[0].mxu0
  %v2383 = vadd.f32 %v2270, %v2382
  %2384 = vdwg.mxu0
  %2385 = vmatprep.subr.bf16.mxu0 %v1372
  %2386 = vmatpush1.bf16.msra.mxu0 %v1371
  %2387 = vmatprep.subr.bf16.mxu0 0
  %2388 = vmatpush1.bf16.msra.mxu0 0
  %2389 = vmatprep.subr.bf16.mxu0 0
  %2390 = vmatpush1.bf16.msra.mxu0 0
  %2391 = vmatprep.subr.bf16.mxu0 0
  %2392 = vmatpush1.bf16.msra.mxu0 0
  %2393 = vmatprep.subr.bf16.mxu0 0
  %2394 = vmatpush1.bf16.msra.mxu0 0
  %2395 = vmatprep.subr.bf16.mxu0 0
  %2396 = vmatpush1.bf16.msra.mxu0 0
  %2397 = vmatprep.subr.bf16.mxu0 0
  %2398 = vmatpush1.bf16.msra.mxu0 0
  %2399 = vmatprep.subr.bf16.mxu0 0
  %2400 = vmatpush1.bf16.msra.mxu0 0
  %2401 = vmatprep.subr.bf16.mxu0 0
  %2402 = vmatpush1.bf16.msra.mxu0 0
  %2403 = vmatprep.subr.bf16.mxu0 0
  %2404 = vmatpush1.bf16.msra.mxu0 0
  %2405 = vmatprep.subr.bf16.mxu0 0
  %2406 = vmatpush1.bf16.msra.mxu0 0
  %2407 = vmatprep.subr.bf16.mxu0 0
  %2408 = vmatpush1.bf16.msra.mxu0 0
  %2409 = vmatprep.subr.bf16.mxu0 0
  %2410 = vmatpush1.bf16.msra.mxu0 0
  %2411 = vmatprep.subr.bf16.mxu0 0
  %2412 = vmatpush1.bf16.msra.mxu0 0
  %2413 = vmatprep.subr.bf16.mxu0 0
  %2414 = vmatpush1.bf16.msra.mxu0 0
  %2415 = vmatprep.subr.bf16.mxu0 0
  %2416 = vmatpush1.bf16.msra.mxu0 0
  %2417 = vmatprep.mubr.bf16.mxu0 0
  %2418 = vmatmul.mubr.bf16.gmra.mrb[0].mxu0 %v1571
  %v2419 = vpop.f32.mrb[0].mxu0
  %v2420 = vadd.f32 %v2307, %v2419
  %v2421 = vpop.f32.mrb[0].mxu0
  %v2422 = vadd.f32 %v2309, %v2421
  %v2423 = vpop.f32.mrb[0].mxu0
  %v2424 = vadd.f32 %v2311, %v2423
  %v2425 = vpop.f32.mrb[0].mxu0
  %v2426 = vadd.f32 %v2313, %v2425
  %2427 = vmatprep.mubr.bf16.mxu0 0
  %2428 = vmatmul.mubr.bf16.gmra.mrb[0].mxu0 %v1574
  %v2429 = vpop.f32.mrb[0].mxu0
  %v2430 = vadd.f32 %v2317, %v2429
  %v2431 = vpop.f32.mrb[0].mxu0
  %v2432 = vadd.f32 %v2319, %v2431
  %v2433 = vpop.f32.mrb[0].mxu0
  %v2434 = vadd.f32 %v2321, %v2433
  %v2435 = vpop.f32.mrb[0].mxu0
  %v2436 = vadd.f32 %v2323, %v2435
  %2437 = vmatprep.mubr.bf16.mxu0 0
  %2438 = vmatmul.mubr.bf16.gmra.mrb[0].mxu0 %v1577
  %v2439 = vpop.f32.mrb[0].mxu0
  %v2440 = vadd.f32 %v2327, %v2439
  %v2441 = vpop.f32.mrb[0].mxu0
  %v2442 = vadd.f32 %v2329, %v2441
  %v2443 = vpop.f32.mrb[0].mxu0
  %v2444 = vadd.f32 %v2331, %v2443
  %v2445 = vpop.f32.mrb[0].mxu0
  %v2446 = vadd.f32 %v2333, %v2445
  %2447 = vmatprep.mubr.bf16.mxu0 0
  %2448 = vmatmul.mubr.bf16.gmra.mrb[0].mxu0 %v1580
  %v2449 = vpop.f32.mrb[0].mxu0
  %v2450 = vadd.f32 %v2337, %v2449
  %v2451 = vpop.f32.mrb[0].mxu0
  %v2452 = vadd.f32 %v2339, %v2451
  %v2453 = vpop.f32.mrb[0].mxu0
  %v2454 = vadd.f32 %v2341, %v2453
  %v2455 = vpop.f32.mrb[0].mxu0
  %v2456 = vadd.f32 %v2343, %v2455
  %2457 = vmatprep.mubr.bf16.mxu0 0
  %2458 = vmatmul.mubr.bf16.gmra.mrb[0].mxu0 %v1583
  %v2459 = vpop.f32.mrb[0].mxu0
  %v2460 = vadd.f32 %v2347, %v2459
  %v2461 = vpop.f32.mrb[0].mxu0
  %v2462 = vadd.f32 %v2349, %v2461
  %v2463 = vpop.f32.mrb[0].mxu0
  %v2464 = vadd.f32 %v2351, %v2463
  %v2465 = vpop.f32.mrb[0].mxu0
  %v2466 = vadd.f32 %v2353, %v2465
  %2467 = vmatprep.mubr.bf16.mxu0 0
  %2468 = vmatmul.mubr.bf16.gmra.mrb[0].mxu0 %v1586
  %v2469 = vpop.f32.mrb[0].mxu0
  %v2470 = vadd.f32 %v2357, %v2469
  %v2471 = vpop.f32.mrb[0].mxu0
  %v2472 = vadd.f32 %v2359, %v2471
  %v2473 = vpop.f32.mrb[0].mxu0
  %v2474 = vadd.f32 %v2361, %v2473
  %v2475 = vpop.f32.mrb[0].mxu0
  %v2476 = vadd.f32 %v2363, %v2475
  %2477 = vmatprep.mubr.bf16.mxu0 0
  %2478 = vmatmul.mubr.bf16.gmra.mrb[0].mxu0 %v1589
  %v2479 = vpop.f32.mrb[0].mxu0
  %v2480 = vadd.f32 %v2367, %v2479
  %v2481 = vpop.f32.mrb[0].mxu0
  %v2482 = vadd.f32 %v2369, %v2481
  %v2483 = vpop.f32.mrb[0].mxu0
  %v2484 = vadd.f32 %v2371, %v2483
  %v2485 = vpop.f32.mrb[0].mxu0
  %v2486 = vadd.f32 %v2373, %v2485
  %2487 = vmatprep.mubr.bf16.mxu0 0
  %2488 = vmatmul.mubr.bf16.gmra.mrb[0].mxu0 %v1592
  %v2489 = vpop.f32.mrb[0].mxu0
  %v2490 = vadd.f32 %v2377, %v2489
  %v2491 = vpop.f32.mrb[0].mxu0
  %v2492 = vadd.f32 %v2379, %v2491
  %v2493 = vpop.f32.mrb[0].mxu0
  %v2494 = vadd.f32 %v2381, %v2493
  %v2495 = vpop.f32.mrb[0].mxu0
  %v2496 = vadd.f32 %v2383, %v2495
  %2497 = vdwg.mxu0
  %v2498 = vmax.f32 %v1968, 0.0
  %v2499 = vmax.f32 %v1970, 0.0
  %v2500 = vmax.f32 %v2420, 0.0
  %v2501 = vmax.f32 %v2422, 0.0
  %v2502 = vmax.f32 %v1972, 0.0
  %v2503 = vmax.f32 %v1974, 0.0
  %v2504 = vmax.f32 %v2424, 0.0
  %v2505 = vmax.f32 %v2426, 0.0
  %v2506 = vmax.f32 %v1978, 0.0
  %v2507 = vmax.f32 %v1980, 0.0
  %v2508 = vmax.f32 %v2430, 0.0
  %v2509 = vmax.f32 %v2432, 0.0
  %v2510 = vmax.f32 %v1982, 0.0
  %v2511 = vmax.f32 %v1984, 0.0
  %v2512 = vmax.f32 %v2434, 0.0
  %v2513 = vmax.f32 %v2436, 0.0
  %v2514 = vmax.f32 %v1988, 0.0
  %v2515 = vmax.f32 %v1990, 0.0
  %v2516 = vmax.f32 %v2440, 0.0
  %v2517 = vmax.f32 %v2442, 0.0
  %v2518 = vmax.f32 %v1992, 0.0
  %v2519 = vmax.f32 %v1994, 0.0
  %v2520 = vmax.f32 %v2444, 0.0
  %v2521 = vmax.f32 %v2446, 0.0
  %v2522 = vmax.f32 %v1998, 0.0
  %v2523 = vmax.f32 %v2000, 0.0
  %v2524 = vmax.f32 %v2450, 0.0
  %v2525 = vmax.f32 %v2452, 0.0
  %v2526 = vmax.f32 %v2002, 0.0
  %v2527 = vmax.f32 %v2004, 0.0
  %v2528 = vmax.f32 %v2454, 0.0
  %v2529 = vmax.f32 %v2456, 0.0
  %v2530 = vmax.f32 %v2008, 0.0
  %v2531 = vmax.f32 %v2010, 0.0
  %v2532 = vmax.f32 %v2460, 0.0
  %v2533 = vmax.f32 %v2462, 0.0
  %v2534 = vmax.f32 %v2012, 0.0
  %v2535 = vmax.f32 %v2014, 0.0
  %v2536 = vmax.f32 %v2464, 0.0
  %v2537 = vmax.f32 %v2466, 0.0
  %v2538 = vmax.f32 %v2018, 0.0
  %v2539 = vmax.f32 %v2020, 0.0
  %v2540 = vmax.f32 %v2470, 0.0
  %v2541 = vmax.f32 %v2472, 0.0
  %v2542 = vmax.f32 %v2022, 0.0
  %v2543 = vmax.f32 %v2024, 0.0
  %v2544 = vmax.f32 %v2474, 0.0
  %v2545 = vmax.f32 %v2476, 0.0
  %v2546 = vmax.f32 %v2028, 0.0
  %v2547 = vmax.f32 %v2030, 0.0
  %v2548 = vmax.f32 %v2480, 0.0
  %v2549 = vmax.f32 %v2482, 0.0
  %v2550 = vmax.f32 %v2032, 0.0
  %v2551 = vmax.f32 %v2034, 0.0
  %v2552 = vmax.f32 %v2484, 0.0
  %v2553 = vmax.f32 %v2486, 0.0
  %v2554 = vmax.f32 %v2038, 0.0
  %v2555 = vmax.f32 %v2040, 0.0
  %v2556 = vmax.f32 %v2490, 0.0
  %v2557 = vmax.f32 %v2492, 0.0
  %v2558 = vmax.f32 %v2042, 0.0
  %v2559 = vmax.f32 %v2044, 0.0
  %v2560 = vmax.f32 %v2494, 0.0
  %v2561 = vmax.f32 %v2496, 0.0
  %v2562 = vpack.c.bf16 %v2502, %v2498
  %v2563 = vpack.c.bf16 %v2503, %v2499
  %v2564 = vpack.c.bf16 %v2504, %v2500
  %v2565 = vpack.c.bf16 %v2505, %v2501
  %v2566 = vpack.c.bf16 %v2510, %v2506
  %v2567 = vpack.c.bf16 %v2511, %v2507
  %v2568 = vpack.c.bf16 %v2512, %v2508
  %v2569 = vpack.c.bf16 %v2513, %v2509
  %v2570 = vpack.c.bf16 %v2518, %v2514
  %v2571 = vpack.c.bf16 %v2519, %v2515
  %v2572 = vpack.c.bf16 %v2520, %v2516
  %v2573 = vpack.c.bf16 %v2521, %v2517
  %v2574 = vpack.c.bf16 %v2526, %v2522
  %v2575 = vpack.c.bf16 %v2527, %v2523
  %v2576 = vpack.c.bf16 %v2528, %v2524
  %v2577 = vpack.c.bf16 %v2529, %v2525
  %v2578 = vpack.c.bf16 %v2534, %v2530
  %v2579 = vpack.c.bf16 %v2535, %v2531
  %v2580 = vpack.c.bf16 %v2536, %v2532
  %v2581 = vpack.c.bf16 %v2537, %v2533
  %v2582 = vpack.c.bf16 %v2542, %v2538
  %v2583 = vpack.c.bf16 %v2543, %v2539
  %v2584 = vpack.c.bf16 %v2544, %v2540
  %v2585 = vpack.c.bf16 %v2545, %v2541
  %v2586 = vpack.c.bf16 %v2550, %v2546
  %v2587 = vpack.c.bf16 %v2551, %v2547
  %v2588 = vpack.c.bf16 %v2552, %v2548
  %v2589 = vpack.c.bf16 %v2553, %v2549
  %v2590 = vpack.c.bf16 %v2558, %v2554
  %v2591 = vpack.c.bf16 %v2559, %v2555
  %v2592 = vpack.c.bf16 %v2560, %v2556
  %v2593 = vpack.c.bf16 %v2561, %v2557
  %v2594 = vld [vmem:[%s3] sm:$0xff]
  %v2595 = vld [vmem:[%s3 + $0x8] sm:$0xff]
  %v2596 = vld [vmem:[%s3 + $0x10] sm:$0xff]
  %v2597 = vld [vmem:[%s3 + $0x18] sm:$0xff]
  %v2598 = vld [vmem:[%s3 + $0x20] sm:$0xff]
  %v2599 = vld [vmem:[%s3 + $0x28] sm:$0xff]
  %v2600 = vld [vmem:[%s3 + $0x30] sm:$0xff]
  %v2601 = vld [vmem:[%s3 + $0x38] sm:$0xff]
  %v2602 = vld [vmem:[%s3 + $0x40] sm:$0xff]
  %v2603 = vld [vmem:[%s3 + $0x48] sm:$0xff]
  %v2604 = vld [vmem:[%s3 + $0x50] sm:$0xff]
  %v2605 = vld [vmem:[%s3 + $0x58] sm:$0xff]
  %v2606 = vld [vmem:[%s3 + $0x60] sm:$0xff]
  %v2607 = vld [vmem:[%s3 + $0x68] sm:$0xff]
  %v2608 = vld [vmem:[%s3 + $0x70] sm:$0xff]
  %v2609 = vld [vmem:[%s3 + $0x78] sm:$0xff]
  %v2610 = vld [vmem:[%s3 + $0x80] sm:$0xff]
  %v2611 = vld [vmem:[%s3 + $0x88] sm:$0xff]
  %v2612 = vld [vmem:[%s3 + $0x90] sm:$0xff]
  %v2613 = vld [vmem:[%s3 + $0x98] sm:$0xff]
  %v2614 = vld [vmem:[%s3 + $0xa0] sm:$0xff]
  %v2615 = vld [vmem:[%s3 + $0xa8] sm:$0xff]
  %v2616 = vld [vmem:[%s3 + $0xb0] sm:$0xff]
  %v2617 = vld [vmem:[%s3 + $0xb8] sm:$0xff]
  %v2618 = vld [vmem:[%s3 + $0xc0] sm:$0xff]
  %v2619 = vld [vmem:[%s3 + $0xc8] sm:$0xff]
  %v2620 = vld [vmem:[%s3 + $0xd0] sm:$0xff]
  %v2621 = vld [vmem:[%s3 + $0xd8] sm:$0xff]
  %v2622 = vld [vmem:[%s3 + $0xe0] sm:$0xff]
  %v2623 = vld [vmem:[%s3 + $0xe8] sm:$0xff]
  %v2624 = vld [vmem:[%s3 + $0xf0] sm:$0xff]
  %v2625 = vld [vmem:[%s3 + $0xf8] sm:$0xff]
  %v2626 = vld [vmem:[%s3 + $0x100] sm:$0xff]
  %v2627 = vld [vmem:[%s3 + $0x108] sm:$0xff]
  %v2628 = vld [vmem:[%s3 + $0x110] sm:$0xff]
  %v2629 = vld [vmem:[%s3 + $0x118] sm:$0xff]
  %v2630 = vld [vmem:[%s3 + $0x120] sm:$0xff]
  %v2631 = vld [vmem:[%s3 + $0x128] sm:$0xff]
  %v2632 = vld [vmem:[%s3 + $0x130] sm:$0xff]
  %v2633 = vld [vmem:[%s3 + $0x138] sm:$0xff]
  %v2634 = vld [vmem:[%s3 + $0x140] sm:$0xff]
  %v2635 = vld [vmem:[%s3 + $0x148] sm:$0xff]
  %v2636 = vld [vmem:[%s3 + $0x150] sm:$0xff]
  %v2637 = vld [vmem:[%s3 + $0x158] sm:$0xff]
  %v2638 = vld [vmem:[%s3 + $0x160] sm:$0xff]
  %v2639 = vld [vmem:[%s3 + $0x168] sm:$0xff]
  %v2640 = vld [vmem:[%s3 + $0x170] sm:$0xff]
  %v2641 = vld [vmem:[%s3 + $0x178] sm:$0xff]
  %v2642 = vld [vmem:[%s3 + $0x180] sm:$0xff]
  %v2643 = vld [vmem:[%s3 + $0x188] sm:$0xff]
  %v2644 = vld [vmem:[%s3 + $0x190] sm:$0xff]
  %v2645 = vld [vmem:[%s3 + $0x198] sm:$0xff]
  %v2646 = vld [vmem:[%s3 + $0x1a0] sm:$0xff]
  %v2647 = vld [vmem:[%s3 + $0x1a8] sm:$0xff]
  %v2648 = vld [vmem:[%s3 + $0x1b0] sm:$0xff]
  %v2649 = vld [vmem:[%s3 + $0x1b8] sm:$0xff]
  %v2650 = vld [vmem:[%s3 + $0x1c0] sm:$0xff]
  %v2651 = vld [vmem:[%s3 + $0x1c8] sm:$0xff]
  %v2652 = vld [vmem:[%s3 + $0x1d0] sm:$0xff]
  %v2653 = vld [vmem:[%s3 + $0x1d8] sm:$0xff]
  %v2654 = vld [vmem:[%s3 + $0x1e0] sm:$0xff]
  %v2655 = vld [vmem:[%s3 + $0x1e8] sm:$0xff]
  %v2656 = vld [vmem:[%s3 + $0x1f0] sm:$0xff]
  %v2657 = vld [vmem:[%s3 + $0x1f8] sm:$0xff]
  %v2658 = vld [vmem:[%s3 + $0x200] sm:$0xff]
  %v2659 = vld [vmem:[%s3 + $0x208] sm:$0xff]
  %v2660 = vld [vmem:[%s3 + $0x210] sm:$0xff]
  %v2661 = vld [vmem:[%s3 + $0x218] sm:$0xff]
  %v2662 = vld [vmem:[%s3 + $0x220] sm:$0xff]
  %v2663 = vld [vmem:[%s3 + $0x228] sm:$0xff]
  %v2664 = vld [vmem:[%s3 + $0x230] sm:$0xff]
  %v2665 = vld [vmem:[%s3 + $0x238] sm:$0xff]
  %v2666 = vld [vmem:[%s3 + $0x240] sm:$0xff]
  %v2667 = vld [vmem:[%s3 + $0x248] sm:$0xff]
  %v2668 = vld [vmem:[%s3 + $0x250] sm:$0xff]
  %v2669 = vld [vmem:[%s3 + $0x258] sm:$0xff]
  %v2670 = vld [vmem:[%s3 + $0x260] sm:$0xff]
  %v2671 = vld [vmem:[%s3 + $0x268] sm:$0xff]
  %v2672 = vld [vmem:[%s3 + $0x270] sm:$0xff]
  %v2673 = vld [vmem:[%s3 + $0x278] sm:$0xff]
  %v2674 = vld [vmem:[%s3 + $0x280] sm:$0xff]
  %v2675 = vld [vmem:[%s3 + $0x288] sm:$0xff]
  %v2676 = vld [vmem:[%s3 + $0x290] sm:$0xff]
  %v2677 = vld [vmem:[%s3 + $0x298] sm:$0xff]
  %v2678 = vld [vmem:[%s3 + $0x2a0] sm:$0xff]
  %v2679 = vld [vmem:[%s3 + $0x2a8] sm:$0xff]
  %v2680 = vld [vmem:[%s3 + $0x2b0] sm:$0xff]
  %v2681 = vld [vmem:[%s3 + $0x2b8] sm:$0xff]
  %v2682 = vld [vmem:[%s3 + $0x2c0] sm:$0xff]
  %v2683 = vld [vmem:[%s3 + $0x2c8] sm:$0xff]
  %v2684 = vld [vmem:[%s3 + $0x2d0] sm:$0xff]
  %v2685 = vld [vmem:[%s3 + $0x2d8] sm:$0xff]
  %v2686 = vld [vmem:[%s3 + $0x2e0] sm:$0xff]
  %v2687 = vld [vmem:[%s3 + $0x2e8] sm:$0xff]
  %v2688 = vld [vmem:[%s3 + $0x2f0] sm:$0xff]
  %v2689 = vld [vmem:[%s3 + $0x2f8] sm:$0xff]
  %v2690 = vld [vmem:[%s3 + $0x300] sm:$0xff]
  %v2691 = vld [vmem:[%s3 + $0x308] sm:$0xff]
  %v2692 = vld [vmem:[%s3 + $0x310] sm:$0xff]
  %v2693 = vld [vmem:[%s3 + $0x318] sm:$0xff]
  %v2694 = vld [vmem:[%s3 + $0x320] sm:$0xff]
  %v2695 = vld [vmem:[%s3 + $0x328] sm:$0xff]
  %v2696 = vld [vmem:[%s3 + $0x330] sm:$0xff]
  %v2697 = vld [vmem:[%s3 + $0x338] sm:$0xff]
  %v2698 = vld [vmem:[%s3 + $0x340] sm:$0xff]
  %v2699 = vld [vmem:[%s3 + $0x348] sm:$0xff]
  %v2700 = vld [vmem:[%s3 + $0x350] sm:$0xff]
  %v2701 = vld [vmem:[%s3 + $0x358] sm:$0xff]
  %v2702 = vld [vmem:[%s3 + $0x360] sm:$0xff]
  %v2703 = vld [vmem:[%s3 + $0x368] sm:$0xff]
  %v2704 = vld [vmem:[%s3 + $0x370] sm:$0xff]
  %v2705 = vld [vmem:[%s3 + $0x378] sm:$0xff]
  %v2706 = vld [vmem:[%s3 + $0x380] sm:$0xff]
  %v2707 = vld [vmem:[%s3 + $0x388] sm:$0xff]
  %v2708 = vld [vmem:[%s3 + $0x390] sm:$0xff]
  %v2709 = vld [vmem:[%s3 + $0x398] sm:$0xff]
  %v2710 = vld [vmem:[%s3 + $0x3a0] sm:$0xff]
  %v2711 = vld [vmem:[%s3 + $0x3a8] sm:$0xff]
  %v2712 = vld [vmem:[%s3 + $0x3b0] sm:$0xff]
  %v2713 = vld [vmem:[%s3 + $0x3b8] sm:$0xff]
  %v2714 = vld [vmem:[%s3 + $0x3c0] sm:$0xff]
  %v2715 = vld [vmem:[%s3 + $0x3c8] sm:$0xff]
  %v2716 = vld [vmem:[%s3 + $0x3d0] sm:$0xff]
  %v2717 = vld [vmem:[%s3 + $0x3d8] sm:$0xff]
  %v2718 = vld [vmem:[%s3 + $0x3e0] sm:$0xff]
  %v2719 = vld [vmem:[%s3 + $0x3e8] sm:$0xff]
  %v2720 = vld [vmem:[%s3 + $0x3f0] sm:$0xff]
  %v2721 = vld [vmem:[%s3 + $0x3f8] sm:$0xff]
  %v2722 = vld [vmem:[%s4] sm:$0xf]
  %v2724 = vlaneseq
  %v2725 = vshrl.u32 %v2724, 7
  %v2726 = vsub.s32 0, %v2725
  %v2727 = vrot.slane %v2722, %v2726
  %v2728 = vlaneseq
  %v2729 = vshrl.u32 %v2728, 7
  %v2730 = vsub.s32 1, %v2729
  %v2731 = vrot.slane %v2722, %v2730
  %v2732 = vlaneseq
  %v2733 = vshrl.u32 %v2732, 7
  %v2734 = vsub.s32 2, %v2733
  %v2735 = vrot.slane %v2722, %v2734
  %v2736 = vlaneseq
  %v2737 = vshrl.u32 %v2736, 7
  %v2738 = vsub.s32 3, %v2737
  %v2739 = vrot.slane %v2722, %v2738
  %v2872 = vunpack.c.l.b16 %v2594
  %v2873 = vunpack.c.h.b16 %v2594
  %v2874 = vunpack.c.l.b16 %v2595
  %v2875 = vunpack.c.h.b16 %v2595
  %v2876 = vunpack.c.l.b16 %v2596
  %v2877 = vunpack.c.h.b16 %v2596
  %v2878 = vunpack.c.l.b16 %v2597
  %v2879 = vunpack.c.h.b16 %v2597
  %v2880 = vunpack.c.l.b16 %v2598
  %v2881 = vunpack.c.h.b16 %v2598
  %v2882 = vunpack.c.l.b16 %v2599
  %v2883 = vunpack.c.h.b16 %v2599
  %v2884 = vunpack.c.l.b16 %v2600
  %v2885 = vunpack.c.h.b16 %v2600
  %v2886 = vunpack.c.l.b16 %v2601
  %v2887 = vunpack.c.h.b16 %v2601
  %v2888 = vunpack.c.l.b16 %v2602
  %v2889 = vunpack.c.h.b16 %v2602
  %v2890 = vunpack.c.l.b16 %v2603
  %v2891 = vunpack.c.h.b16 %v2603
  %v2892 = vunpack.c.l.b16 %v2604
  %v2893 = vunpack.c.h.b16 %v2604
  %v2894 = vunpack.c.l.b16 %v2605
  %v2895 = vunpack.c.h.b16 %v2605
  %v2896 = vunpack.c.l.b16 %v2606
  %v2897 = vunpack.c.h.b16 %v2606
  %v2898 = vunpack.c.l.b16 %v2607
  %v2899 = vunpack.c.h.b16 %v2607
  %v2900 = vunpack.c.l.b16 %v2608
  %v2901 = vunpack.c.h.b16 %v2608
  %v2902 = vunpack.c.l.b16 %v2609
  %v2903 = vunpack.c.h.b16 %v2609
  %v2904 = vunpack.c.l.b16 %v2610
  %v2905 = vunpack.c.h.b16 %v2610
  %v2906 = vunpack.c.l.b16 %v2611
  %v2907 = vunpack.c.h.b16 %v2611
  %v2908 = vunpack.c.l.b16 %v2612
  %v2909 = vunpack.c.h.b16 %v2612
  %v2910 = vunpack.c.l.b16 %v2613
  %v2911 = vunpack.c.h.b16 %v2613
  %v2912 = vunpack.c.l.b16 %v2614
  %v2913 = vunpack.c.h.b16 %v2614
  %v2914 = vunpack.c.l.b16 %v2615
  %v2915 = vunpack.c.h.b16 %v2615
  %v2916 = vunpack.c.l.b16 %v2616
  %v2917 = vunpack.c.h.b16 %v2616
  %v2918 = vunpack.c.l.b16 %v2617
  %v2919 = vunpack.c.h.b16 %v2617
  %v2920 = vunpack.c.l.b16 %v2618
  %v2921 = vunpack.c.h.b16 %v2618
  %v2922 = vunpack.c.l.b16 %v2619
  %v2923 = vunpack.c.h.b16 %v2619
  %v2924 = vunpack.c.l.b16 %v2620
  %v2925 = vunpack.c.h.b16 %v2620
  %v2926 = vunpack.c.l.b16 %v2621
  %v2927 = vunpack.c.h.b16 %v2621
  %v2928 = vunpack.c.l.b16 %v2622
  %v2929 = vunpack.c.h.b16 %v2622
  %v2930 = vunpack.c.l.b16 %v2623
  %v2931 = vunpack.c.h.b16 %v2623
  %v2932 = vunpack.c.l.b16 %v2624
  %v2933 = vunpack.c.h.b16 %v2624
  %v2934 = vunpack.c.l.b16 %v2625
  %v2935 = vunpack.c.h.b16 %v2625
  %v2936 = vunpack.c.l.b16 %v2626
  %v2937 = vunpack.c.h.b16 %v2626
  %v2938 = vunpack.c.l.b16 %v2627
  %v2939 = vunpack.c.h.b16 %v2627
  %v2940 = vunpack.c.l.b16 %v2628
  %v2941 = vunpack.c.h.b16 %v2628
  %v2942 = vunpack.c.l.b16 %v2629
  %v2943 = vunpack.c.h.b16 %v2629
  %v2944 = vunpack.c.l.b16 %v2630
  %v2945 = vunpack.c.h.b16 %v2630
  %v2946 = vunpack.c.l.b16 %v2631
  %v2947 = vunpack.c.h.b16 %v2631
  %v2948 = vunpack.c.l.b16 %v2632
  %v2949 = vunpack.c.h.b16 %v2632
  %v2950 = vunpack.c.l.b16 %v2633
  %v2951 = vunpack.c.h.b16 %v2633
  %v2952 = vunpack.c.l.b16 %v2634
  %v2953 = vunpack.c.h.b16 %v2634
  %v2954 = vunpack.c.l.b16 %v2635
  %v2955 = vunpack.c.h.b16 %v2635
  %v2956 = vunpack.c.l.b16 %v2636
  %v2957 = vunpack.c.h.b16 %v2636
  %v2958 = vunpack.c.l.b16 %v2637
  %v2959 = vunpack.c.h.b16 %v2637
  %v2960 = vunpack.c.l.b16 %v2638
  %v2961 = vunpack.c.h.b16 %v2638
  %v2962 = vunpack.c.l.b16 %v2639
  %v2963 = vunpack.c.h.b16 %v2639
  %v2964 = vunpack.c.l.b16 %v2640
  %v2965 = vunpack.c.h.b16 %v2640
  %v2966 = vunpack.c.l.b16 %v2641
  %v2967 = vunpack.c.h.b16 %v2641
  %v2968 = vunpack.c.l.b16 %v2642
  %v2969 = vunpack.c.h.b16 %v2642
  %v2970 = vunpack.c.l.b16 %v2643
  %v2971 = vunpack.c.h.b16 %v2643
  %v2972 = vunpack.c.l.b16 %v2644
  %v2973 = vunpack.c.h.b16 %v2644
  %v2974 = vunpack.c.l.b16 %v2645
  %v2975 = vunpack.c.h.b16 %v2645
  %v2976 = vunpack.c.l.b16 %v2646
  %v2977 = vunpack.c.h.b16 %v2646
  %v2978 = vunpack.c.l.b16 %v2647
  %v2979 = vunpack.c.h.b16 %v2647
  %v2980 = vunpack.c.l.b16 %v2648
  %v2981 = vunpack.c.h.b16 %v2648
  %v2982 = vunpack.c.l.b16 %v2649
  %v2983 = vunpack.c.h.b16 %v2649
  %v2984 = vunpack.c.l.b16 %v2650
  %v2985 = vunpack.c.h.b16 %v2650
  %v2986 = vunpack.c.l.b16 %v2651
  %v2987 = vunpack.c.h.b16 %v2651
  %v2988 = vunpack.c.l.b16 %v2652
  %v2989 = vunpack.c.h.b16 %v2652
  %v2990 = vunpack.c.l.b16 %v2653
  %v2991 = vunpack.c.h.b16 %v2653
  %v2992 = vunpack.c.l.b16 %v2654
  %v2993 = vunpack.c.h.b16 %v2654
  %v2994 = vunpack.c.l.b16 %v2655
  %v2995 = vunpack.c.h.b16 %v2655
  %v2996 = vunpack.c.l.b16 %v2656
  %v2997 = vunpack.c.h.b16 %v2656
  %v2998 = vunpack.c.l.b16 %v2657
  %v2999 = vunpack.c.h.b16 %v2657
  %v3000 = vunpack.c.l.b16 %v2658
  %v3001 = vunpack.c.h.b16 %v2658
  %v3002 = vunpack.c.l.b16 %v2659
  %v3003 = vunpack.c.h.b16 %v2659
  %v3004 = vunpack.c.l.b16 %v2660
  %v3005 = vunpack.c.h.b16 %v2660
  %v3006 = vunpack.c.l.b16 %v2661
  %v3007 = vunpack.c.h.b16 %v2661
  %v3008 = vunpack.c.l.b16 %v2662
  %v3009 = vunpack.c.h.b16 %v2662
  %v3010 = vunpack.c.l.b16 %v2663
  %v3011 = vunpack.c.h.b16 %v2663
  %v3012 = vunpack.c.l.b16 %v2664
  %v3013 = vunpack.c.h.b16 %v2664
  %v3014 = vunpack.c.l.b16 %v2665
  %v3015 = vunpack.c.h.b16 %v2665
  %v3016 = vunpack.c.l.b16 %v2666
  %v3017 = vunpack.c.h.b16 %v2666
  %v3018 = vunpack.c.l.b16 %v2667
  %v3019 = vunpack.c.h.b16 %v2667
  %v3020 = vunpack.c.l.b16 %v2668
  %v3021 = vunpack.c.h.b16 %v2668
  %v3022 = vunpack.c.l.b16 %v2669
  %v3023 = vunpack.c.h.b16 %v2669
  %v3024 = vunpack.c.l.b16 %v2670
  %v3025 = vunpack.c.h.b16 %v2670
  %v3026 = vunpack.c.l.b16 %v2671
  %v3027 = vunpack.c.h.b16 %v2671
  %v3028 = vunpack.c.l.b16 %v2672
  %v3029 = vunpack.c.h.b16 %v2672
  %v3030 = vunpack.c.l.b16 %v2673
  %v3031 = vunpack.c.h.b16 %v2673
  %v3032 = vunpack.c.l.b16 %v2674
  %v3033 = vunpack.c.h.b16 %v2674
  %v3034 = vunpack.c.l.b16 %v2675
  %v3035 = vunpack.c.h.b16 %v2675
  %v3036 = vunpack.c.l.b16 %v2676
  %v3037 = vunpack.c.h.b16 %v2676
  %v3038 = vunpack.c.l.b16 %v2677
  %v3039 = vunpack.c.h.b16 %v2677
  %v3040 = vunpack.c.l.b16 %v2678
  %v3041 = vunpack.c.h.b16 %v2678
  %v3042 = vunpack.c.l.b16 %v2679
  %v3043 = vunpack.c.h.b16 %v2679
  %v3044 = vunpack.c.l.b16 %v2680
  %v3045 = vunpack.c.h.b16 %v2680
  %v3046 = vunpack.c.l.b16 %v2681
  %v3047 = vunpack.c.h.b16 %v2681
  %v3048 = vunpack.c.l.b16 %v2682
  %v3049 = vunpack.c.h.b16 %v2682
  %v3050 = vunpack.c.l.b16 %v2683
  %v3051 = vunpack.c.h.b16 %v2683
  %v3052 = vunpack.c.l.b16 %v2684
  %v3053 = vunpack.c.h.b16 %v2684
  %v3054 = vunpack.c.l.b16 %v2685
  %v3055 = vunpack.c.h.b16 %v2685
  %v3056 = vunpack.c.l.b16 %v2686
  %v3057 = vunpack.c.h.b16 %v2686
  %v3058 = vunpack.c.l.b16 %v2687
  %v3059 = vunpack.c.h.b16 %v2687
  %v3060 = vunpack.c.l.b16 %v2688
  %v3061 = vunpack.c.h.b16 %v2688
  %v3062 = vunpack.c.l.b16 %v2689
  %v3063 = vunpack.c.h.b16 %v2689
  %v3064 = vunpack.c.l.b16 %v2690
  %v3065 = vunpack.c.h.b16 %v2690
  %v3066 = vunpack.c.l.b16 %v2691
  %v3067 = vunpack.c.h.b16 %v2691
  %v3068 = vunpack.c.l.b16 %v2692
  %v3069 = vunpack.c.h.b16 %v2692
  %v3070 = vunpack.c.l.b16 %v2693
  %v3071 = vunpack.c.h.b16 %v2693
  %v3072 = vunpack.c.l.b16 %v2694
  %v3073 = vunpack.c.h.b16 %v2694
  %v3074 = vunpack.c.l.b16 %v2695
  %v3075 = vunpack.c.h.b16 %v2695
  %v3076 = vunpack.c.l.b16 %v2696
  %v3077 = vunpack.c.h.b16 %v2696
  %v3078 = vunpack.c.l.b16 %v2697
  %v3079 = vunpack.c.h.b16 %v2697
  %v3080 = vunpack.c.l.b16 %v2698
  %v3081 = vunpack.c.h.b16 %v2698
  %v3082 = vunpack.c.l.b16 %v2699
  %v3083 = vunpack.c.h.b16 %v2699
  %v3084 = vunpack.c.l.b16 %v2700
  %v3085 = vunpack.c.h.b16 %v2700
  %v3086 = vunpack.c.l.b16 %v2701
  %v3087 = vunpack.c.h.b16 %v2701
  %v3088 = vunpack.c.l.b16 %v2702
  %v3089 = vunpack.c.h.b16 %v2702
  %v3090 = vunpack.c.l.b16 %v2703
  %v3091 = vunpack.c.h.b16 %v2703
  %v3092 = vunpack.c.l.b16 %v2704
  %v3093 = vunpack.c.h.b16 %v2704
  %v3094 = vunpack.c.l.b16 %v2705
  %v3095 = vunpack.c.h.b16 %v2705
  %v3096 = vunpack.c.l.b16 %v2706
  %v3097 = vunpack.c.h.b16 %v2706
  %v3098 = vunpack.c.l.b16 %v2707
  %v3099 = vunpack.c.h.b16 %v2707
  %v3100 = vunpack.c.l.b16 %v2708
  %v3101 = vunpack.c.h.b16 %v2708
  %v3102 = vunpack.c.l.b16 %v2709
  %v3103 = vunpack.c.h.b16 %v2709
  %v3104 = vunpack.c.l.b16 %v2710
  %v3105 = vunpack.c.h.b16 %v2710
  %v3106 = vunpack.c.l.b16 %v2711
  %v3107 = vunpack.c.h.b16 %v2711
  %v3108 = vunpack.c.l.b16 %v2712
  %v3109 = vunpack.c.h.b16 %v2712
  %v3110 = vunpack.c.l.b16 %v2713
  %v3111 = vunpack.c.h.b16 %v2713
  %v3112 = vunpack.c.l.b16 %v2714
  %v3113 = vunpack.c.h.b16 %v2714
  %v3114 = vunpack.c.l.b16 %v2715
  %v3115 = vunpack.c.h.b16 %v2715
  %v3116 = vunpack.c.l.b16 %v2716
  %v3117 = vunpack.c.h.b16 %v2716
  %v3118 = vunpack.c.l.b16 %v2717
  %v3119 = vunpack.c.h.b16 %v2717
  %v3120 = vunpack.c.l.b16 %v2718
  %v3121 = vunpack.c.h.b16 %v2718
  %v3122 = vunpack.c.l.b16 %v2719
  %v3123 = vunpack.c.h.b16 %v2719
  %v3124 = vunpack.c.l.b16 %v2720
  %v3125 = vunpack.c.h.b16 %v2720
  %v3126 = vunpack.c.l.b16 %v2721
  %v3127 = vunpack.c.h.b16 %v2721
  %v3128 = vpack.c.b16 %v2876, %v2872
  %v3129 = vpack.c.b16 %v2877, %v2873
  %v3130 = vpack.c.b16 %v2878, %v2874
  %v3131 = vpack.c.b16 %v2879, %v2875
  %v3132 = vpack.c.b16 %v2884, %v2880
  %v3133 = vpack.c.b16 %v2885, %v2881
  %v3134 = vpack.c.b16 %v2886, %v2882
  %v3135 = vpack.c.b16 %v2887, %v2883
  %v3136 = vpack.c.b16 %v2892, %v2888
  %v3137 = vpack.c.b16 %v2893, %v2889
  %v3138 = vpack.c.b16 %v2894, %v2890
  %v3139 = vpack.c.b16 %v2895, %v2891
  %v3140 = vpack.c.b16 %v2900, %v2896
  %v3141 = vpack.c.b16 %v2901, %v2897
  %v3142 = vpack.c.b16 %v2902, %v2898
  %v3143 = vpack.c.b16 %v2903, %v2899
  %v3144 = vpack.c.b16 %v2908, %v2904
  %v3145 = vpack.c.b16 %v2909, %v2905
  %v3146 = vpack.c.b16 %v2910, %v2906
  %v3147 = vpack.c.b16 %v2911, %v2907
  %v3148 = vpack.c.b16 %v2916, %v2912
  %v3149 = vpack.c.b16 %v2917, %v2913
  %v3150 = vpack.c.b16 %v2918, %v2914
  %v3151 = vpack.c.b16 %v2919, %v2915
  %v3152 = vpack.c.b16 %v2924, %v2920
  %v3153 = vpack.c.b16 %v2925, %v2921
  %v3154 = vpack.c.b16 %v2926, %v2922
  %v3155 = vpack.c.b16 %v2927, %v2923
  %v3156 = vpack.c.b16 %v2932, %v2928
  %v3157 = vpack.c.b16 %v2933, %v2929
  %v3158 = vpack.c.b16 %v2934, %v2930
  %v3159 = vpack.c.b16 %v2935, %v2931
  %v3160 = vpack.c.b16 %v2940, %v2936
  %v3161 = vpack.c.b16 %v2941, %v2937
  %v3162 = vpack.c.b16 %v2942, %v2938
  %v3163 = vpack.c.b16 %v2943, %v2939
  %v3164 = vpack.c.b16 %v2948, %v2944
  %v3165 = vpack.c.b16 %v2949, %v2945
  %v3166 = vpack.c.b16 %v2950, %v2946
  %v3167 = vpack.c.b16 %v2951, %v2947
  %v3168 = vpack.c.b16 %v2956, %v2952
  %v3169 = vpack.c.b16 %v2957, %v2953
  %v3170 = vpack.c.b16 %v2958, %v2954
  %v3171 = vpack.c.b16 %v2959, %v2955
  %v3172 = vpack.c.b16 %v2964, %v2960
  %v3173 = vpack.c.b16 %v2965, %v2961
  %v3174 = vpack.c.b16 %v2966, %v2962
  %v3175 = vpack.c.b16 %v2967, %v2963
  %v3176 = vpack.c.b16 %v2972, %v2968
  %v3177 = vpack.c.b16 %v2973, %v2969
  %v3178 = vpack.c.b16 %v2974, %v2970
  %v3179 = vpack.c.b16 %v2975, %v2971
  %v3180 = vpack.c.b16 %v2980, %v2976
  %v3181 = vpack.c.b16 %v2981, %v2977
  %v3182 = vpack.c.b16 %v2982, %v2978
  %v3183 = vpack.c.b16 %v2983, %v2979
  %v3184 = vpack.c.b16 %v2988, %v2984
  %v3185 = vpack.c.b16 %v2989, %v2985
  %v3186 = vpack.c.b16 %v2990, %v2986
  %v3187 = vpack.c.b16 %v2991, %v2987
  %v3188 = vpack.c.b16 %v2996, %v2992
  %v3189 = vpack.c.b16 %v2997, %v2993
  %v3190 = vpack.c.b16 %v2998, %v2994
  %v3191 = vpack.c.b16 %v2999, %v2995
  %v3192 = vpack.c.b16 %v3004, %v3000
  %v3193 = vpack.c.b16 %v3005, %v3001
  %v3194 = vpack.c.b16 %v3006, %v3002
  %v3195 = vpack.c.b16 %v3007, %v3003
  %v3196 = vpack.c.b16 %v3012, %v3008
  %v3197 = vpack.c.b16 %v3013, %v3009
  %v3198 = vpack.c.b16 %v3014, %v3010
  %v3199 = vpack.c.b16 %v3015, %v3011
  %v3200 = vpack.c.b16 %v3020, %v3016
  %v3201 = vpack.c.b16 %v3021, %v3017
  %v3202 = vpack.c.b16 %v3022, %v3018
  %v3203 = vpack.c.b16 %v3023, %v3019
  %v3204 = vpack.c.b16 %v3028, %v3024
  %v3205 = vpack.c.b16 %v3029, %v3025
  %v3206 = vpack.c.b16 %v3030, %v3026
  %v3207 = vpack.c.b16 %v3031, %v3027
  %v3208 = vpack.c.b16 %v3036, %v3032
  %v3209 = vpack.c.b16 %v3037, %v3033
  %v3210 = vpack.c.b16 %v3038, %v3034
  %v3211 = vpack.c.b16 %v3039, %v3035
  %v3212 = vpack.c.b16 %v3044, %v3040
  %v3213 = vpack.c.b16 %v3045, %v3041
  %v3214 = vpack.c.b16 %v3046, %v3042
  %v3215 = vpack.c.b16 %v3047, %v3043
  %v3216 = vpack.c.b16 %v3052, %v3048
  %v3217 = vpack.c.b16 %v3053, %v3049
  %v3218 = vpack.c.b16 %v3054, %v3050
  %v3219 = vpack.c.b16 %v3055, %v3051
  %v3220 = vpack.c.b16 %v3060, %v3056
  %v3221 = vpack.c.b16 %v3061, %v3057
  %v3222 = vpack.c.b16 %v3062, %v3058
  %v3223 = vpack.c.b16 %v3063, %v3059
  %v3224 = vpack.c.b16 %v3068, %v3064
  %v3225 = vpack.c.b16 %v3069, %v3065
  %v3226 = vpack.c.b16 %v3070, %v3066
  %v3227 = vpack.c.b16 %v3071, %v3067
  %v3228 = vpack.c.b16 %v3076, %v3072
  %v3229 = vpack.c.b16 %v3077, %v3073
  %v3230 = vpack.c.b16 %v3078, %v3074
  %v3231 = vpack.c.b16 %v3079, %v3075
  %v3232 = vpack.c.b16 %v3084, %v3080
  %v3233 = vpack.c.b16 %v3085, %v3081
  %v3234 = vpack.c.b16 %v3086, %v3082
  %v3235 = vpack.c.b16 %v3087, %v3083
  %v3236 = vpack.c.b16 %v3092, %v3088
  %v3237 = vpack.c.b16 %v3093, %v3089
  %v3238 = vpack.c.b16 %v3094, %v3090
  %v3239 = vpack.c.b16 %v3095, %v3091
  %v3240 = vpack.c.b16 %v3100, %v3096
  %v3241 = vpack.c.b16 %v3101, %v3097
  %v3242 = vpack.c.b16 %v3102, %v3098
  %v3243 = vpack.c.b16 %v3103, %v3099
  %v3244 = vpack.c.b16 %v3108, %v3104
  %v3245 = vpack.c.b16 %v3109, %v3105
  %v3246 = vpack.c.b16 %v3110, %v3106
  %v3247 = vpack.c.b16 %v3111, %v3107
  %v3248 = vpack.c.b16 %v3116, %v3112
  %v3249 = vpack.c.b16 %v3117, %v3113
  %v3250 = vpack.c.b16 %v3118, %v3114
  %v3251 = vpack.c.b16 %v3119, %v3115
  %v3252 = vpack.c.b16 %v3124, %v3120
  %v3253 = vpack.c.b16 %v3125, %v3121
  %v3254 = vpack.c.b16 %v3126, %v3122
  %v3255 = vpack.c.b16 %v3127, %v3123
  %3384 = vmatprep.subr.bf16.mxu0 %v3129
  %3385 = vmatpush1.bf16.msra.mxu0 %v3128
  %3386 = vmatprep.subr.bf16.mxu0 %v3133
  %3387 = vmatpush1.bf16.msra.mxu0 %v3132
  %3388 = vmatprep.subr.bf16.mxu0 %v3137
  %3389 = vmatpush1.bf16.msra.mxu0 %v3136
  %3390 = vmatprep.subr.bf16.mxu0 %v3141
  %3391 = vmatpush1.bf16.msra.mxu0 %v3140
  %3392 = vmatprep.subr.bf16.mxu0 %v3145
  %3393 = vmatpush1.bf16.msra.mxu0 %v3144
  %3394 = vmatprep.subr.bf16.mxu0 %v3149
  %3395 = vmatpush1.bf16.msra.mxu0 %v3148
  %3396 = vmatprep.subr.bf16.mxu0 %v3153
  %3397 = vmatpush1.bf16.msra.mxu0 %v3152
  %3398 = vmatprep.subr.bf16.mxu0 %v3157
  %3399 = vmatpush1.bf16.msra.mxu0 %v3156
  %3400 = vmatprep.subr.bf16.mxu0 %v3161
  %3401 = vmatpush1.bf16.msra.mxu0 %v3160
  %3402 = vmatprep.subr.bf16.mxu0 %v3165
  %3403 = vmatpush1.bf16.msra.mxu0 %v3164
  %3404 = vmatprep.subr.bf16.mxu0 %v3169
  %3405 = vmatpush1.bf16.msra.mxu0 %v3168
  %3406 = vmatprep.subr.bf16.mxu0 %v3173
  %3407 = vmatpush1.bf16.msra.mxu0 %v3172
  %3408 = vmatprep.subr.bf16.mxu0 %v3177
  %3409 = vmatpush1.bf16.msra.mxu0 %v3176
  %3410 = vmatprep.subr.bf16.mxu0 %v3181
  %3411 = vmatpush1.bf16.msra.mxu0 %v3180
  %3412 = vmatprep.subr.bf16.mxu0 %v3185
  %3413 = vmatpush1.bf16.msra.mxu0 %v3184
  %3414 = vmatprep.subr.bf16.mxu0 %v3189
  %3415 = vmatpush1.bf16.msra.mxu0 %v3188
  %3416 = vmatprep.mubr.bf16.mxu0 %v2563
  %3417 = vmatmul.mubr.bf16.gmra.mrb[0].mxu0 %v2562
  %v3418 = vpop.f32.mrb[0].mxu0
  %v3419 = vadd.f32 %v2727, %v3418
  %v3420 = vpop.f32.mrb[0].mxu0
  %v3421 = vadd.f32 %v2731, %v3420
  %v3422 = vpop.f32.mrb[0].mxu0
  %v3423 = vadd.f32 %v2727, %v3422
  %v3424 = vpop.f32.mrb[0].mxu0
  %v3425 = vadd.f32 %v2731, %v3424
  %3426 = vmatprep.mubr.bf16.mxu0 %v2567
  %3427 = vmatmul.mubr.bf16.gmra.mrb[0].mxu0 %v2566
  %v3428 = vpop.f32.mrb[0].mxu0
  %v3429 = vadd.f32 %v2727, %v3428
  %v3430 = vpop.f32.mrb[0].mxu0
  %v3431 = vadd.f32 %v2731, %v3430
  %v3432 = vpop.f32.mrb[0].mxu0
  %v3433 = vadd.f32 %v2727, %v3432
  %v3434 = vpop.f32.mrb[0].mxu0
  %v3435 = vadd.f32 %v2731, %v3434
  %3436 = vmatprep.mubr.bf16.mxu0 %v2571
  %3437 = vmatmul.mubr.bf16.gmra.mrb[0].mxu0 %v2570
  %v3438 = vpop.f32.mrb[0].mxu0
  %v3439 = vadd.f32 %v2727, %v3438
  %v3440 = vpop.f32.mrb[0].mxu0
  %v3441 = vadd.f32 %v2731, %v3440
  %v3442 = vpop.f32.mrb[0].mxu0
  %v3443 = vadd.f32 %v2727, %v3442
  %v3444 = vpop.f32.mrb[0].mxu0
  %v3445 = vadd.f32 %v2731, %v3444
  %3446 = vmatprep.mubr.bf16.mxu0 %v2575
  %3447 = vmatmul.mubr.bf16.gmra.mrb[0].mxu0 %v2574
  %v3448 = vpop.f32.mrb[0].mxu0
  %v3449 = vadd.f32 %v2727, %v3448
  %v3450 = vpop.f32.mrb[0].mxu0
  %v3451 = vadd.f32 %v2731, %v3450
  %v3452 = vpop.f32.mrb[0].mxu0
  %v3453 = vadd.f32 %v2727, %v3452
  %v3454 = vpop.f32.mrb[0].mxu0
  %v3455 = vadd.f32 %v2731, %v3454
  %3456 = vmatprep.mubr.bf16.mxu0 %v2579
  %3457 = vmatmul.mubr.bf16.gmra.mrb[0].mxu0 %v2578
  %v3458 = vpop.f32.mrb[0].mxu0
  %v3459 = vadd.f32 %v2727, %v3458
  %v3460 = vpop.f32.mrb[0].mxu0
  %v3461 = vadd.f32 %v2731, %v3460
  %v3462 = vpop.f32.mrb[0].mxu0
  %v3463 = vadd.f32 %v2727, %v3462
  %v3464 = vpop.f32.mrb[0].mxu0
  %v3465 = vadd.f32 %v2731, %v3464
  %3466 = vmatprep.mubr.bf16.mxu0 %v2583
  %3467 = vmatmul.mubr.bf16.gmra.mrb[0].mxu0 %v2582
  %v3468 = vpop.f32.mrb[0].mxu0
  %v3469 = vadd.f32 %v2727, %v3468
  %v3470 = vpop.f32.mrb[0].mxu0
  %v3471 = vadd.f32 %v2731, %v3470
  %v3472 = vpop.f32.mrb[0].mxu0
  %v3473 = vadd.f32 %v2727, %v3472
  %v3474 = vpop.f32.mrb[0].mxu0
  %v3475 = vadd.f32 %v2731, %v3474
  %3476 = vmatprep.mubr.bf16.mxu0 %v2587
  %3477 = vmatmul.mubr.bf16.gmra.mrb[0].mxu0 %v2586
  %v3478 = vpop.f32.mrb[0].mxu0
  %v3479 = vadd.f32 %v2727, %v3478
  %v3480 = vpop.f32.mrb[0].mxu0
  %v3481 = vadd.f32 %v2731, %v3480
  %v3482 = vpop.f32.mrb[0].mxu0
  %v3483 = vadd.f32 %v2727, %v3482
  %v3484 = vpop.f32.mrb[0].mxu0
  %v3485 = vadd.f32 %v2731, %v3484
  %3486 = vmatprep.mubr.bf16.mxu0 %v2591
  %3487 = vmatmul.mubr.bf16.gmra.mrb[0].mxu0 %v2590
  %v3488 = vpop.f32.mrb[0].mxu0
  %v3489 = vadd.f32 %v2727, %v3488
  %v3490 = vpop.f32.mrb[0].mxu0
  %v3491 = vadd.f32 %v2731, %v3490
  %v3492 = vpop.f32.mrb[0].mxu0
  %v3493 = vadd.f32 %v2727, %v3492
  %v3494 = vpop.f32.mrb[0].mxu0
  %v3495 = vadd.f32 %v2731, %v3494
  %3496 = vdwg.mxu0
  %3497 = vmatprep.subr.bf16.mxu0 %v3193
  %3498 = vmatpush1.bf16.msra.mxu0 %v3192
  %3499 = vmatprep.subr.bf16.mxu0 %v3197
  %3500 = vmatpush1.bf16.msra.mxu0 %v3196
  %3501 = vmatprep.subr.bf16.mxu0 %v3201
  %3502 = vmatpush1.bf16.msra.mxu0 %v3200
  %3503 = vmatprep.subr.bf16.mxu0 %v3205
  %3504 = vmatpush1.bf16.msra.mxu0 %v3204
  %3505 = vmatprep.subr.bf16.mxu0 %v3209
  %3506 = vmatpush1.bf16.msra.mxu0 %v3208
  %3507 = vmatprep.subr.bf16.mxu0 %v3213
  %3508 = vmatpush1.bf16.msra.mxu0 %v3212
  %3509 = vmatprep.subr.bf16.mxu0 %v3217
  %3510 = vmatpush1.bf16.msra.mxu0 %v3216
  %3511 = vmatprep.subr.bf16.mxu0 %v3221
  %3512 = vmatpush1.bf16.msra.mxu0 %v3220
  %3513 = vmatprep.subr.bf16.mxu0 %v3225
  %3514 = vmatpush1.bf16.msra.mxu0 %v3224
  %3515 = vmatprep.subr.bf16.mxu0 %v3229
  %3516 = vmatpush1.bf16.msra.mxu0 %v3228
  %3517 = vmatprep.subr.bf16.mxu0 %v3233
  %3518 = vmatpush1.bf16.msra.mxu0 %v3232
  %3519 = vmatprep.subr.bf16.mxu0 %v3237
  %3520 = vmatpush1.bf16.msra.mxu0 %v3236
  %3521 = vmatprep.subr.bf16.mxu0 %v3241
  %3522 = vmatpush1.bf16.msra.mxu0 %v3240
  %3523 = vmatprep.subr.bf16.mxu0 %v3245
  %3524 = vmatpush1.bf16.msra.mxu0 %v3244
  %3525 = vmatprep.subr.bf16.mxu0 %v3249
  %3526 = vmatpush1.bf16.msra.mxu0 %v3248
  %3527 = vmatprep.subr.bf16.mxu0 %v3253
  %3528 = vmatpush1.bf16.msra.mxu0 %v3252
  %3529 = vmatprep.mubr.bf16.mxu0 %v2565
  %3530 = vmatmul.mubr.bf16.gmra.mrb[0].mxu0 %v2564
  %v3531 = vpop.f32.mrb[0].mxu0
  %v3532 = vadd.f32 %v3419, %v3531
  %v3533 = vpop.f32.mrb[0].mxu0
  %v3534 = vadd.f32 %v3421, %v3533
  %v3535 = vpop.f32.mrb[0].mxu0
  %v3536 = vadd.f32 %v3423, %v3535
  %v3537 = vpop.f32.mrb[0].mxu0
  %v3538 = vadd.f32 %v3425, %v3537
  %3539 = vmatprep.mubr.bf16.mxu0 %v2569
  %3540 = vmatmul.mubr.bf16.gmra.mrb[0].mxu0 %v2568
  %v3541 = vpop.f32.mrb[0].mxu0
  %v3542 = vadd.f32 %v3429, %v3541
  %v3543 = vpop.f32.mrb[0].mxu0
  %v3544 = vadd.f32 %v3431, %v3543
  %v3545 = vpop.f32.mrb[0].mxu0
  %v3546 = vadd.f32 %v3433, %v3545
  %v3547 = vpop.f32.mrb[0].mxu0
  %v3548 = vadd.f32 %v3435, %v3547
  %3549 = vmatprep.mubr.bf16.mxu0 %v2573
  %3550 = vmatmul.mubr.bf16.gmra.mrb[0].mxu0 %v2572
  %v3551 = vpop.f32.mrb[0].mxu0
  %v3552 = vadd.f32 %v3439, %v3551
  %v3553 = vpop.f32.mrb[0].mxu0
  %v3554 = vadd.f32 %v3441, %v3553
  %v3555 = vpop.f32.mrb[0].mxu0
  %v3556 = vadd.f32 %v3443, %v3555
  %v3557 = vpop.f32.mrb[0].mxu0
  %v3558 = vadd.f32 %v3445, %v3557
  %3559 = vmatprep.mubr.bf16.mxu0 %v2577
  %3560 = vmatmul.mubr.bf16.gmra.mrb[0].mxu0 %v2576
  %v3561 = vpop.f32.mrb[0].mxu0
  %v3562 = vadd.f32 %v3449, %v3561
  %v3563 = vpop.f32.mrb[0].mxu0
  %v3564 = vadd.f32 %v3451, %v3563
  %v3565 = vpop.f32.mrb[0].mxu0
  %v3566 = vadd.f32 %v3453, %v3565
  %v3567 = vpop.f32.mrb[0].mxu0
  %v3568 = vadd.f32 %v3455, %v3567
  %3569 = vmatprep.mubr.bf16.mxu0 %v2581
  %3570 = vmatmul.mubr.bf16.gmra.mrb[0].mxu0 %v2580
  %v3571 = vpop.f32.mrb[0].mxu0
  %v3572 = vadd.f32 %v3459, %v3571
  %v3573 = vpop.f32.mrb[0].mxu0
  %v3574 = vadd.f32 %v3461, %v3573
  %v3575 = vpop.f32.mrb[0].mxu0
  %v3576 = vadd.f32 %v3463, %v3575
  %v3577 = vpop.f32.mrb[0].mxu0
  %v3578 = vadd.f32 %v3465, %v3577
  %3579 = vmatprep.mubr.bf16.mxu0 %v2585
  %3580 = vmatmul.mubr.bf16.gmra.mrb[0].mxu0 %v2584
  %v3581 = vpop.f32.mrb[0].mxu0
  %v3582 = vadd.f32 %v3469, %v3581
  %v3583 = vpop.f32.mrb[0].mxu0
  %v3584 = vadd.f32 %v3471, %v3583
  %v3585 = vpop.f32.mrb[0].mxu0
  %v3586 = vadd.f32 %v3473, %v3585
  %v3587 = vpop.f32.mrb[0].mxu0
  %v3588 = vadd.f32 %v3475, %v3587
  %3589 = vmatprep.mubr.bf16.mxu0 %v2589
  %3590 = vmatmul.mubr.bf16.gmra.mrb[0].mxu0 %v2588
  %v3591 = vpop.f32.mrb[0].mxu0
  %v3592 = vadd.f32 %v3479, %v3591
  %v3593 = vpop.f32.mrb[0].mxu0
  %v3594 = vadd.f32 %v3481, %v3593
  %v3595 = vpop.f32.mrb[0].mxu0
  %v3596 = vadd.f32 %v3483, %v3595
  %v3597 = vpop.f32.mrb[0].mxu0
  %v3598 = vadd.f32 %v3485, %v3597
  %3599 = vmatprep.mubr.bf16.mxu0 %v2593
  %3600 = vmatmul.mubr.bf16.gmra.mrb[0].mxu0 %v2592
  %v3601 = vpop.f32.mrb[0].mxu0
  %v3602 = vadd.f32 %v3489, %v3601
  %v3603 = vpop.f32.mrb[0].mxu0
  %v3604 = vadd.f32 %v3491, %v3603
  %v3605 = vpop.f32.mrb[0].mxu0
  %v3606 = vadd.f32 %v3493, %v3605
  %v3607 = vpop.f32.mrb[0].mxu0
  %v3608 = vadd.f32 %v3495, %v3607
  %3609 = vdwg.mxu0
  %3610 = vmatprep.subr.bf16.mxu0 %v3131
  %3611 = vmatpush1.bf16.msra.mxu0 %v3130
  %3612 = vmatprep.subr.bf16.mxu0 %v3135
  %3613 = vmatpush1.bf16.msra.mxu0 %v3134
  %3614 = vmatprep.subr.bf16.mxu0 %v3139
  %3615 = vmatpush1.bf16.msra.mxu0 %v3138
  %3616 = vmatprep.subr.bf16.mxu0 %v3143
  %3617 = vmatpush1.bf16.msra.mxu0 %v3142
  %3618 = vmatprep.subr.bf16.mxu0 %v3147
  %3619 = vmatpush1.bf16.msra.mxu0 %v3146
  %3620 = vmatprep.subr.bf16.mxu0 %v3151
  %3621 = vmatpush1.bf16.msra.mxu0 %v3150
  %3622 = vmatprep.subr.bf16.mxu0 %v3155
  %3623 = vmatpush1.bf16.msra.mxu0 %v3154
  %3624 = vmatprep.subr.bf16.mxu0 %v3159
  %3625 = vmatpush1.bf16.msra.mxu0 %v3158
  %3626 = vmatprep.subr.bf16.mxu0 %v3163
  %3627 = vmatpush1.bf16.msra.mxu0 %v3162
  %3628 = vmatprep.subr.bf16.mxu0 %v3167
  %3629 = vmatpush1.bf16.msra.mxu0 %v3166
  %3630 = vmatprep.subr.bf16.mxu0 %v3171
  %3631 = vmatpush1.bf16.msra.mxu0 %v3170
  %3632 = vmatprep.subr.bf16.mxu0 %v3175
  %3633 = vmatpush1.bf16.msra.mxu0 %v3174
  %3634 = vmatprep.subr.bf16.mxu0 %v3179
  %3635 = vmatpush1.bf16.msra.mxu0 %v3178
  %3636 = vmatprep.subr.bf16.mxu0 %v3183
  %3637 = vmatpush1.bf16.msra.mxu0 %v3182
  %3638 = vmatprep.subr.bf16.mxu0 %v3187
  %3639 = vmatpush1.bf16.msra.mxu0 %v3186
  %3640 = vmatprep.subr.bf16.mxu0 %v3191
  %3641 = vmatpush1.bf16.msra.mxu0 %v3190
  %3642 = vmatprep.mubr.bf16.mxu0 %v2563
  %3643 = vmatmul.mubr.bf16.gmra.mrb[0].mxu0 %v2562
  %v3644 = vpop.f32.mrb[0].mxu0
  %v3645 = vadd.f32 %v2735, %v3644
  %v3646 = vpop.f32.mrb[0].mxu0
  %v3647 = vadd.f32 %v2739, %v3646
  %v3648 = vpop.f32.mrb[0].mxu0
  %v3649 = vadd.f32 %v2735, %v3648
  %v3650 = vpop.f32.mrb[0].mxu0
  %v3651 = vadd.f32 %v2739, %v3650
  %3652 = vmatprep.mubr.bf16.mxu0 %v2567
  %3653 = vmatmul.mubr.bf16.gmra.mrb[0].mxu0 %v2566
  %v3654 = vpop.f32.mrb[0].mxu0
  %v3655 = vadd.f32 %v2735, %v3654
  %v3656 = vpop.f32.mrb[0].mxu0
  %v3657 = vadd.f32 %v2739, %v3656
  %v3658 = vpop.f32.mrb[0].mxu0
  %v3659 = vadd.f32 %v2735, %v3658
  %v3660 = vpop.f32.mrb[0].mxu0
  %v3661 = vadd.f32 %v2739, %v3660
  %3662 = vmatprep.mubr.bf16.mxu0 %v2571
  %3663 = vmatmul.mubr.bf16.gmra.mrb[0].mxu0 %v2570
  %v3664 = vpop.f32.mrb[0].mxu0
  %v3665 = vadd.f32 %v2735, %v3664
  %v3666 = vpop.f32.mrb[0].mxu0
  %v3667 = vadd.f32 %v2739, %v3666
  %v3668 = vpop.f32.mrb[0].mxu0
  %v3669 = vadd.f32 %v2735, %v3668
  %v3670 = vpop.f32.mrb[0].mxu0
  %v3671 = vadd.f32 %v2739, %v3670
  %3672 = vmatprep.mubr.bf16.mxu0 %v2575
  %3673 = vmatmul.mubr.bf16.gmra.mrb[0].mxu0 %v2574
  %v3674 = vpop.f32.mrb[0].mxu0
  %v3675 = vadd.f32 %v2735, %v3674
  %v3676 = vpop.f32.mrb[0].mxu0
  %v3677 = vadd.f32 %v2739, %v3676
  %v3678 = vpop.f32.mrb[0].mxu0
  %v3679 = vadd.f32 %v2735, %v3678
  %v3680 = vpop.f32.mrb[0].mxu0
  %v3681 = vadd.f32 %v2739, %v3680
  %3682 = vmatprep.mubr.bf16.mxu0 %v2579
  %3683 = vmatmul.mubr.bf16.gmra.mrb[0].mxu0 %v2578
  %v3684 = vpop.f32.mrb[0].mxu0
  %v3685 = vadd.f32 %v2735, %v3684
  %v3686 = vpop.f32.mrb[0].mxu0
  %v3687 = vadd.f32 %v2739, %v3686
  %v3688 = vpop.f32.mrb[0].mxu0
  %v3689 = vadd.f32 %v2735, %v3688
  %v3690 = vpop.f32.mrb[0].mxu0
  %v3691 = vadd.f32 %v2739, %v3690
  %3692 = vmatprep.mubr.bf16.mxu0 %v2583
  %3693 = vmatmul.mubr.bf16.gmra.mrb[0].mxu0 %v2582
  %v3694 = vpop.f32.mrb[0].mxu0
  %v3695 = vadd.f32 %v2735, %v3694
  %v3696 = vpop.f32.mrb[0].mxu0
  %v3697 = vadd.f32 %v2739, %v3696
  %v3698 = vpop.f32.mrb[0].mxu0
  %v3699 = vadd.f32 %v2735, %v3698
  %v3700 = vpop.f32.mrb[0].mxu0
  %v3701 = vadd.f32 %v2739, %v3700
  %3702 = vmatprep.mubr.bf16.mxu0 %v2587
  %3703 = vmatmul.mubr.bf16.gmra.mrb[0].mxu0 %v2586
  %v3704 = vpop.f32.mrb[0].mxu0
  %v3705 = vadd.f32 %v2735, %v3704
  %v3706 = vpop.f32.mrb[0].mxu0
  %v3707 = vadd.f32 %v2739, %v3706
  %v3708 = vpop.f32.mrb[0].mxu0
  %v3709 = vadd.f32 %v2735, %v3708
  %v3710 = vpop.f32.mrb[0].mxu0
  %v3711 = vadd.f32 %v2739, %v3710
  %3712 = vmatprep.mubr.bf16.mxu0 %v2591
  %3713 = vmatmul.mubr.bf16.gmra.mrb[0].mxu0 %v2590
  %v3714 = vpop.f32.mrb[0].mxu0
  %v3715 = vadd.f32 %v2735, %v3714
  %v3716 = vpop.f32.mrb[0].mxu0
  %v3717 = vadd.f32 %v2739, %v3716
  %v3718 = vpop.f32.mrb[0].mxu0
  %v3719 = vadd.f32 %v2735, %v3718
  %v3720 = vpop.f32.mrb[0].mxu0
  %v3721 = vadd.f32 %v2739, %v3720
  %3722 = vdwg.mxu0
  %3723 = vmatprep.subr.bf16.mxu0 %v3195
  %3724 = vmatpush1.bf16.msra.mxu0 %v3194
  %3725 = vmatprep.subr.bf16.mxu0 %v3199
  %3726 = vmatpush1.bf16.msra.mxu0 %v3198
  %3727 = vmatprep.subr.bf16.mxu0 %v3203
  %3728 = vmatpush1.bf16.msra.mxu0 %v3202
  %3729 = vmatprep.subr.bf16.mxu0 %v3207
  %3730 = vmatpush1.bf16.msra.mxu0 %v3206
  %3731 = vmatprep.subr.bf16.mxu0 %v3211
  %3732 = vmatpush1.bf16.msra.mxu0 %v3210
  %3733 = vmatprep.subr.bf16.mxu0 %v3215
  %3734 = vmatpush1.bf16.msra.mxu0 %v3214
  %3735 = vmatprep.subr.bf16.mxu0 %v3219
  %3736 = vmatpush1.bf16.msra.mxu0 %v3218
  %3737 = vmatprep.subr.bf16.mxu0 %v3223
  %3738 = vmatpush1.bf16.msra.mxu0 %v3222
  %3739 = vmatprep.subr.bf16.mxu0 %v3227
  %3740 = vmatpush1.bf16.msra.mxu0 %v3226
  %3741 = vmatprep.subr.bf16.mxu0 %v3231
  %3742 = vmatpush1.bf16.msra.mxu0 %v3230
  %3743 = vmatprep.subr.bf16.mxu0 %v3235
  %3744 = vmatpush1.bf16.msra.mxu0 %v3234
  %3745 = vmatprep.subr.bf16.mxu0 %v3239
  %3746 = vmatpush1.bf16.msra.mxu0 %v3238
  %3747 = vmatprep.subr.bf16.mxu0 %v3243
  %3748 = vmatpush1.bf16.msra.mxu0 %v3242
  %3749 = vmatprep.subr.bf16.mxu0 %v3247
  %3750 = vmatpush1.bf16.msra.mxu0 %v3246
  %3751 = vmatprep.subr.bf16.mxu0 %v3251
  %3752 = vmatpush1.bf16.msra.mxu0 %v3250
  %3753 = vmatprep.subr.bf16.mxu0 %v3255
  %3754 = vmatpush1.bf16.msra.mxu0 %v3254
  %3755 = vmatprep.mubr.bf16.mxu0 %v2565
  %3756 = vmatmul.mubr.bf16.gmra.mrb[0].mxu0 %v2564
  %v3757 = vpop.f32.mrb[0].mxu0
  %v3758 = vadd.f32 %v3645, %v3757
  %v3759 = vpop.f32.mrb[0].mxu0
  %v3760 = vadd.f32 %v3647, %v3759
  %v3761 = vpop.f32.mrb[0].mxu0
  %v3762 = vadd.f32 %v3649, %v3761
  %v3763 = vpop.f32.mrb[0].mxu0
  %v3764 = vadd.f32 %v3651, %v3763
  %3765 = vmatprep.mubr.bf16.mxu0 %v2569
  %3766 = vmatmul.mubr.bf16.gmra.mrb[0].mxu0 %v2568
  %v3767 = vpop.f32.mrb[0].mxu0
  %v3768 = vadd.f32 %v3655, %v3767
  %v3769 = vpop.f32.mrb[0].mxu0
  %v3770 = vadd.f32 %v3657, %v3769
  %v3771 = vpop.f32.mrb[0].mxu0
  %v3772 = vadd.f32 %v3659, %v3771
  %v3773 = vpop.f32.mrb[0].mxu0
  %v3774 = vadd.f32 %v3661, %v3773
  %3775 = vmatprep.mubr.bf16.mxu0 %v2573
  %3776 = vmatmul.mubr.bf16.gmra.mrb[0].mxu0 %v2572
  %v3777 = vpop.f32.mrb[0].mxu0
  %v3778 = vadd.f32 %v3665, %v3777
  %v3779 = vpop.f32.mrb[0].mxu0
  %v3780 = vadd.f32 %v3667, %v3779
  %v3781 = vpop.f32.mrb[0].mxu0
  %v3782 = vadd.f32 %v3669, %v3781
  %v3783 = vpop.f32.mrb[0].mxu0
  %v3784 = vadd.f32 %v3671, %v3783
  %3785 = vmatprep.mubr.bf16.mxu0 %v2577
  %3786 = vmatmul.mubr.bf16.gmra.mrb[0].mxu0 %v2576
  %v3787 = vpop.f32.mrb[0].mxu0
  %v3788 = vadd.f32 %v3675, %v3787
  %v3789 = vpop.f32.mrb[0].mxu0
  %v3790 = vadd.f32 %v3677, %v3789
  %v3791 = vpop.f32.mrb[0].mxu0
  %v3792 = vadd.f32 %v3679, %v3791
  %v3793 = vpop.f32.mrb[0].mxu0
  %v3794 = vadd.f32 %v3681, %v3793
  %3795 = vmatprep.mubr.bf16.mxu0 %v2581
  %3796 = vmatmul.mubr.bf16.gmra.mrb[0].mxu0 %v2580
  %v3797 = vpop.f32.mrb[0].mxu0
  %v3798 = vadd.f32 %v3685, %v3797
  %v3799 = vpop.f32.mrb[0].mxu0
  %v3800 = vadd.f32 %v3687, %v3799
  %v3801 = vpop.f32.mrb[0].mxu0
  %v3802 = vadd.f32 %v3689, %v3801
  %v3803 = vpop.f32.mrb[0].mxu0
  %v3804 = vadd.f32 %v3691, %v3803
  %3805 = vmatprep.mubr.bf16.mxu0 %v2585
  %3806 = vmatmul.mubr.bf16.gmra.mrb[0].mxu0 %v2584
  %v3807 = vpop.f32.mrb[0].mxu0
  %v3808 = vadd.f32 %v3695, %v3807
  %v3809 = vpop.f32.mrb[0].mxu0
  %v3810 = vadd.f32 %v3697, %v3809
  %v3811 = vpop.f32.mrb[0].mxu0
  %v3812 = vadd.f32 %v3699, %v3811
  %v3813 = vpop.f32.mrb[0].mxu0
  %v3814 = vadd.f32 %v3701, %v3813
  %3815 = vmatprep.mubr.bf16.mxu0 %v2589
  %3816 = vmatmul.mubr.bf16.gmra.mrb[0].mxu0 %v2588
  %v3817 = vpop.f32.mrb[0].mxu0
  %v3818 = vadd.f32 %v3705, %v3817
  %v3819 = vpop.f32.mrb[0].mxu0
  %v3820 = vadd.f32 %v3707, %v3819
  %v3821 = vpop.f32.mrb[0].mxu0
  %v3822 = vadd.f32 %v3709, %v3821
  %v3823 = vpop.f32.mrb[0].mxu0
  %v3824 = vadd.f32 %v3711, %v3823
  %3825 = vmatprep.mubr.bf16.mxu0 %v2593
  %3826 = vmatmul.mubr.bf16.gmra.mrb[0].mxu0 %v2592
  %v3827 = vpop.f32.mrb[0].mxu0
  %v3828 = vadd.f32 %v3715, %v3827
  %v3829 = vpop.f32.mrb[0].mxu0
  %v3830 = vadd.f32 %v3717, %v3829
  %v3831 = vpop.f32.mrb[0].mxu0
  %v3832 = vadd.f32 %v3719, %v3831
  %v3833 = vpop.f32.mrb[0].mxu0
  %v3834 = vadd.f32 %v3721, %v3833
  %3835 = vdwg.mxu0
  %v3836 = vmax.f32 %v3532, 0.0
  %v3837 = vmax.f32 %v3534, 0.0
  %v3838 = vmax.f32 %v3758, 0.0
  %v3839 = vmax.f32 %v3760, 0.0
  %v3840 = vmax.f32 %v3536, 0.0
  %v3841 = vmax.f32 %v3538, 0.0
  %v3842 = vmax.f32 %v3762, 0.0
  %v3843 = vmax.f32 %v3764, 0.0
  %v3844 = vmax.f32 %v3542, 0.0
  %v3845 = vmax.f32 %v3544, 0.0
  %v3846 = vmax.f32 %v3768, 0.0
  %v3847 = vmax.f32 %v3770, 0.0
  %v3848 = vmax.f32 %v3546, 0.0
  %v3849 = vmax.f32 %v3548, 0.0
  %v3850 = vmax.f32 %v3772, 0.0
  %v3851 = vmax.f32 %v3774, 0.0
  %v3852 = vmax.f32 %v3552, 0.0
  %v3853 = vmax.f32 %v3554, 0.0
  %v3854 = vmax.f32 %v3778, 0.0
  %v3855 = vmax.f32 %v3780, 0.0
  %v3856 = vmax.f32 %v3556, 0.0
  %v3857 = vmax.f32 %v3558, 0.0
  %v3858 = vmax.f32 %v3782, 0.0
  %v3859 = vmax.f32 %v3784, 0.0
  %v3860 = vmax.f32 %v3562, 0.0
  %v3861 = vmax.f32 %v3564, 0.0
  %v3862 = vmax.f32 %v3788, 0.0
  %v3863 = vmax.f32 %v3790, 0.0
  %v3864 = vmax.f32 %v3566, 0.0
  %v3865 = vmax.f32 %v3568, 0.0
  %v3866 = vmax.f32 %v3792, 0.0
  %v3867 = vmax.f32 %v3794, 0.0
  %v3868 = vmax.f32 %v3572, 0.0
  %v3869 = vmax.f32 %v3574, 0.0
  %v3870 = vmax.f32 %v3798, 0.0
  %v3871 = vmax.f32 %v3800, 0.0
  %v3872 = vmax.f32 %v3576, 0.0
  %v3873 = vmax.f32 %v3578, 0.0
  %v3874 = vmax.f32 %v3802, 0.0
  %v3875 = vmax.f32 %v3804, 0.0
  %v3876 = vmax.f32 %v3582, 0.0
  %v3877 = vmax.f32 %v3584, 0.0
  %v3878 = vmax.f32 %v3808, 0.0
  %v3879 = vmax.f32 %v3810, 0.0
  %v3880 = vmax.f32 %v3586, 0.0
  %v3881 = vmax.f32 %v3588, 0.0
  %v3882 = vmax.f32 %v3812, 0.0
  %v3883 = vmax.f32 %v3814, 0.0
  %v3884 = vmax.f32 %v3592, 0.0
  %v3885 = vmax.f32 %v3594, 0.0
  %v3886 = vmax.f32 %v3818, 0.0
  %v3887 = vmax.f32 %v3820, 0.0
  %v3888 = vmax.f32 %v3596, 0.0
  %v3889 = vmax.f32 %v3598, 0.0
  %v3890 = vmax.f32 %v3822, 0.0
  %v3891 = vmax.f32 %v3824, 0.0
  %v3892 = vmax.f32 %v3602, 0.0
  %v3893 = vmax.f32 %v3604, 0.0
  %v3894 = vmax.f32 %v3828, 0.0
  %v3895 = vmax.f32 %v3830, 0.0
  %v3896 = vmax.f32 %v3606, 0.0
  %v3897 = vmax.f32 %v3608, 0.0
  %v3898 = vmax.f32 %v3832, 0.0
  %v3899 = vmax.f32 %v3834, 0.0
  %v3900 = vpack.c.bf16 %v3840, %v3836
  %v3901 = vpack.c.bf16 %v3841, %v3837
  %v3902 = vpack.c.bf16 %v3842, %v3838
  %v3903 = vpack.c.bf16 %v3843, %v3839
  %v3904 = vpack.c.bf16 %v3848, %v3844
  %v3905 = vpack.c.bf16 %v3849, %v3845
  %v3906 = vpack.c.bf16 %v3850, %v3846
  %v3907 = vpack.c.bf16 %v3851, %v3847
  %v3908 = vpack.c.bf16 %v3856, %v3852
  %v3909 = vpack.c.bf16 %v3857, %v3853
  %v3910 = vpack.c.bf16 %v3858, %v3854
  %v3911 = vpack.c.bf16 %v3859, %v3855
  %v3912 = vpack.c.bf16 %v3864, %v3860
  %v3913 = vpack.c.bf16 %v3865, %v3861
  %v3914 = vpack.c.bf16 %v3866, %v3862
  %v3915 = vpack.c.bf16 %v3867, %v3863
  %v3916 = vpack.c.bf16 %v3872, %v3868
  %v3917 = vpack.c.bf16 %v3873, %v3869
  %v3918 = vpack.c.bf16 %v3874, %v3870
  %v3919 = vpack.c.bf16 %v3875, %v3871
  %v3920 = vpack.c.bf16 %v3880, %v3876
  %v3921 = vpack.c.bf16 %v3881, %v3877
  %v3922 = vpack.c.bf16 %v3882, %v3878
  %v3923 = vpack.c.bf16 %v3883, %v3879
  %v3924 = vpack.c.bf16 %v3888, %v3884
  %v3925 = vpack.c.bf16 %v3889, %v3885
  %v3926 = vpack.c.bf16 %v3890, %v3886
  %v3927 = vpack.c.bf16 %v3891, %v3887
  %v3928 = vpack.c.bf16 %v3896, %v3892
  %v3929 = vpack.c.bf16 %v3897, %v3893
  %v3930 = vpack.c.bf16 %v3898, %v3894
  %v3931 = vpack.c.bf16 %v3899, %v3895
  %v3932 = vld [vmem:[%s5] sm:$0xf]
  %v3933 = vld [vmem:[%s5 + $0x4] sm:$0xf]
  %v3934 = vld [vmem:[%s5 + $0x8] sm:$0xf]
  %v3935 = vld [vmem:[%s5 + $0xc] sm:$0xf]
  %v3936 = vld [vmem:[%s5 + $0x10] sm:$0xf]
  %v3937 = vld [vmem:[%s5 + $0x14] sm:$0xf]
  %v3938 = vld [vmem:[%s5 + $0x18] sm:$0xf]
  %v3939 = vld [vmem:[%s5 + $0x1c] sm:$0xf]
  %v3940 = vld [vmem:[%s5 + $0x20] sm:$0xf]
  %v3941 = vld [vmem:[%s5 + $0x24] sm:$0xf]
  %v3942 = vld [vmem:[%s5 + $0x28] sm:$0xf]
  %v3943 = vld [vmem:[%s5 + $0x2c] sm:$0xf]
  %v3944 = vld [vmem:[%s5 + $0x30] sm:$0xf]
  %v3945 = vld [vmem:[%s5 + $0x34] sm:$0xf]
  %v3946 = vld [vmem:[%s5 + $0x38] sm:$0xf]
  %v3947 = vld [vmem:[%s5 + $0x3c] sm:$0xf]
  %v3948 = vld [vmem:[%s5 + $0x40] sm:$0xf]
  %v3949 = vld [vmem:[%s5 + $0x44] sm:$0xf]
  %v3950 = vld [vmem:[%s5 + $0x48] sm:$0xf]
  %v3951 = vld [vmem:[%s5 + $0x4c] sm:$0xf]
  %v3952 = vld [vmem:[%s5 + $0x50] sm:$0xf]
  %v3953 = vld [vmem:[%s5 + $0x54] sm:$0xf]
  %v3954 = vld [vmem:[%s5 + $0x58] sm:$0xf]
  %v3955 = vld [vmem:[%s5 + $0x5c] sm:$0xf]
  %v3956 = vld [vmem:[%s5 + $0x60] sm:$0xf]
  %v3957 = vld [vmem:[%s5 + $0x64] sm:$0xf]
  %v3958 = vld [vmem:[%s5 + $0x68] sm:$0xf]
  %v3959 = vld [vmem:[%s5 + $0x6c] sm:$0xf]
  %v3960 = vld [vmem:[%s5 + $0x70] sm:$0xf]
  %v3961 = vld [vmem:[%s5 + $0x74] sm:$0xf]
  %v3962 = vld [vmem:[%s5 + $0x78] sm:$0xf]
  %v3963 = vld [vmem:[%s5 + $0x7c] sm:$0xf]
  %v3964 = vld [vmem:[%s5 + $0x80] sm:$0xf]
  %v3965 = vld [vmem:[%s5 + $0x84] sm:$0xf]
  %v3966 = vld [vmem:[%s5 + $0x88] sm:$0xf]
  %v3967 = vld [vmem:[%s5 + $0x8c] sm:$0xf]
  %v3968 = vld [vmem:[%s5 + $0x90] sm:$0xf]
  %v3969 = vld [vmem:[%s5 + $0x94] sm:$0xf]
  %v3970 = vld [vmem:[%s5 + $0x98] sm:$0xf]
  %v3971 = vld [vmem:[%s5 + $0x9c] sm:$0xf]
  %v3972 = vld [vmem:[%s5 + $0xa0] sm:$0xf]
  %v3973 = vld [vmem:[%s5 + $0xa4] sm:$0xf]
  %v3974 = vld [vmem:[%s5 + $0xa8] sm:$0xf]
  %v3975 = vld [vmem:[%s5 + $0xac] sm:$0xf]
  %v3976 = vld [vmem:[%s5 + $0xb0] sm:$0xf]
  %v3977 = vld [vmem:[%s5 + $0xb4] sm:$0xf]
  %v3978 = vld [vmem:[%s5 + $0xb8] sm:$0xf]
  %v3979 = vld [vmem:[%s5 + $0xbc] sm:$0xf]
  %v3980 = vld [vmem:[%s5 + $0xc0] sm:$0xf]
  %v3981 = vld [vmem:[%s5 + $0xc4] sm:$0xf]
  %v3982 = vld [vmem:[%s5 + $0xc8] sm:$0xf]
  %v3983 = vld [vmem:[%s5 + $0xcc] sm:$0xf]
  %v3984 = vld [vmem:[%s5 + $0xd0] sm:$0xf]
  %v3985 = vld [vmem:[%s5 + $0xd4] sm:$0xf]
  %v3986 = vld [vmem:[%s5 + $0xd8] sm:$0xf]
  %v3987 = vld [vmem:[%s5 + $0xdc] sm:$0xf]
  %v3988 = vld [vmem:[%s5 + $0xe0] sm:$0xf]
  %v3989 = vld [vmem:[%s5 + $0xe4] sm:$0xf]
  %v3990 = vld [vmem:[%s5 + $0xe8] sm:$0xf]
  %v3991 = vld [vmem:[%s5 + $0xec] sm:$0xf]
  %v3992 = vld [vmem:[%s5 + $0xf0] sm:$0xf]
  %v3993 = vld [vmem:[%s5 + $0xf4] sm:$0xf]
  %v3994 = vld [vmem:[%s5 + $0xf8] sm:$0xf]
  %v3995 = vld [vmem:[%s5 + $0xfc] sm:$0xf]
  %v3996 = vld [vmem:[%s6] sm:$0x1]
  %v3998 = vlaneseq
  %v3999 = vshrl.u32 %v3998, 7
  %v4000 = vsub.s32 0, %v3999
  %v4001 = vrot.slane %v3996, %v4000
  %v4067 = vunpack.c.l.b16 %v3932
  %v4068 = vunpack.c.l.b16 %v3933
  %v4069 = vunpack.c.l.b16 %v3934
  %v4070 = vunpack.c.l.b16 %v3935
  %v4071 = vunpack.c.l.b16 %v3936
  %v4072 = vunpack.c.l.b16 %v3937
  %v4073 = vunpack.c.l.b16 %v3938
  %v4074 = vunpack.c.l.b16 %v3939
  %v4075 = vunpack.c.l.b16 %v3940
  %v4076 = vunpack.c.l.b16 %v3941
  %v4077 = vunpack.c.l.b16 %v3942
  %v4078 = vunpack.c.l.b16 %v3943
  %v4079 = vunpack.c.l.b16 %v3944
  %v4080 = vunpack.c.l.b16 %v3945
  %v4081 = vunpack.c.l.b16 %v3946
  %v4082 = vunpack.c.l.b16 %v3947
  %v4083 = vunpack.c.l.b16 %v3948
  %v4084 = vunpack.c.l.b16 %v3949
  %v4085 = vunpack.c.l.b16 %v3950
  %v4086 = vunpack.c.l.b16 %v3951
  %v4087 = vunpack.c.l.b16 %v3952
  %v4088 = vunpack.c.l.b16 %v3953
  %v4089 = vunpack.c.l.b16 %v3954
  %v4090 = vunpack.c.l.b16 %v3955
  %v4091 = vunpack.c.l.b16 %v3956
  %v4092 = vunpack.c.l.b16 %v3957
  %v4093 = vunpack.c.l.b16 %v3958
  %v4094 = vunpack.c.l.b16 %v3959
  %v4095 = vunpack.c.l.b16 %v3960
  %v4096 = vunpack.c.l.b16 %v3961
  %v4097 = vunpack.c.l.b16 %v3962
  %v4098 = vunpack.c.l.b16 %v3963
  %v4099 = vunpack.c.l.b16 %v3964
  %v4100 = vunpack.c.l.b16 %v3965
  %v4101 = vunpack.c.l.b16 %v3966
  %v4102 = vunpack.c.l.b16 %v3967
  %v4103 = vunpack.c.l.b16 %v3968
  %v4104 = vunpack.c.l.b16 %v3969
  %v4105 = vunpack.c.l.b16 %v3970
  %v4106 = vunpack.c.l.b16 %v3971
  %v4107 = vunpack.c.l.b16 %v3972
  %v4108 = vunpack.c.l.b16 %v3973
  %v4109 = vunpack.c.l.b16 %v3974
  %v4110 = vunpack.c.l.b16 %v3975
  %v4111 = vunpack.c.l.b16 %v3976
  %v4112 = vunpack.c.l.b16 %v3977
  %v4113 = vunpack.c.l.b16 %v3978
  %v4114 = vunpack.c.l.b16 %v3979
  %v4115 = vunpack.c.l.b16 %v3980
  %v4116 = vunpack.c.l.b16 %v3981
  %v4117 = vunpack.c.l.b16 %v3982
  %v4118 = vunpack.c.l.b16 %v3983
  %v4119 = vunpack.c.l.b16 %v3984
  %v4120 = vunpack.c.l.b16 %v3985
  %v4121 = vunpack.c.l.b16 %v3986
  %v4122 = vunpack.c.l.b16 %v3987
  %v4123 = vunpack.c.l.b16 %v3988
  %v4124 = vunpack.c.l.b16 %v3989
  %v4125 = vunpack.c.l.b16 %v3990
  %v4126 = vunpack.c.l.b16 %v3991
  %v4127 = vunpack.c.l.b16 %v3992
  %v4128 = vunpack.c.l.b16 %v3993
  %v4129 = vunpack.c.l.b16 %v3994
  %v4130 = vunpack.c.l.b16 %v3995
  %v4131 = vpack.c.b16 %v4068, %v4067
  %v4132 = vpack.c.b16 %v4070, %v4069
  %v4133 = vpack.c.b16 %v4072, %v4071
  %v4134 = vpack.c.b16 %v4074, %v4073
  %v4135 = vpack.c.b16 %v4076, %v4075
  %v4136 = vpack.c.b16 %v4078, %v4077
  %v4137 = vpack.c.b16 %v4080, %v4079
  %v4138 = vpack.c.b16 %v4082, %v4081
  %v4139 = vpack.c.b16 %v4084, %v4083
  %v4140 = vpack.c.b16 %v4086, %v4085
  %v4141 = vpack.c.b16 %v4088, %v4087
  %v4142 = vpack.c.b16 %v4090, %v4089
  %v4143 = vpack.c.b16 %v4092, %v4091
  %v4144 = vpack.c.b16 %v4094, %v4093
  %v4145 = vpack.c.b16 %v4096, %v4095
  %v4146 = vpack.c.b16 %v4098, %v4097
  %v4147 = vpack.c.b16 %v4100, %v4099
  %v4148 = vpack.c.b16 %v4102, %v4101
  %v4149 = vpack.c.b16 %v4104, %v4103
  %v4150 = vpack.c.b16 %v4106, %v4105
  %v4151 = vpack.c.b16 %v4108, %v4107
  %v4152 = vpack.c.b16 %v4110, %v4109
  %v4153 = vpack.c.b16 %v4112, %v4111
  %v4154 = vpack.c.b16 %v4114, %v4113
  %v4155 = vpack.c.b16 %v4116, %v4115
  %v4156 = vpack.c.b16 %v4118, %v4117
  %v4157 = vpack.c.b16 %v4120, %v4119
  %v4158 = vpack.c.b16 %v4122, %v4121
  %v4159 = vpack.c.b16 %v4124, %v4123
  %v4160 = vpack.c.b16 %v4126, %v4125
  %v4161 = vpack.c.b16 %v4128, %v4127
  %v4162 = vpack.c.b16 %v4130, %v4129
  %4195 = vmatprep.subr.bf16.mxu0 0
  %4196 = vmatpush1.bf16.msra.mxu0 %v4131
  %4197 = vmatprep.subr.bf16.mxu0 0
  %4198 = vmatpush1.bf16.msra.mxu0 %v4132
  %4199 = vmatprep.subr.bf16.mxu0 0
  %4200 = vmatpush1.bf16.msra.mxu0 %v4133
  %4201 = vmatprep.subr.bf16.mxu0 0
  %4202 = vmatpush1.bf16.msra.mxu0 %v4134
  %4203 = vmatprep.subr.bf16.mxu0 0
  %4204 = vmatpush1.bf16.msra.mxu0 %v4135
  %4205 = vmatprep.subr.bf16.mxu0 0
  %4206 = vmatpush1.bf16.msra.mxu0 %v4136
  %4207 = vmatprep.subr.bf16.mxu0 0
  %4208 = vmatpush1.bf16.msra.mxu0 %v4137
  %4209 = vmatprep.subr.bf16.mxu0 0
  %4210 = vmatpush1.bf16.msra.mxu0 %v4138
  %4211 = vmatprep.subr.bf16.mxu0 0
  %4212 = vmatpush1.bf16.msra.mxu0 %v4139
  %4213 = vmatprep.subr.bf16.mxu0 0
  %4214 = vmatpush1.bf16.msra.mxu0 %v4140
  %4215 = vmatprep.subr.bf16.mxu0 0
  %4216 = vmatpush1.bf16.msra.mxu0 %v4141
  %4217 = vmatprep.subr.bf16.mxu0 0
  %4218 = vmatpush1.bf16.msra.mxu0 %v4142
  %4219 = vmatprep.subr.bf16.mxu0 0
  %4220 = vmatpush1.bf16.msra.mxu0 %v4143
  %4221 = vmatprep.subr.bf16.mxu0 0
  %4222 = vmatpush1.bf16.msra.mxu0 %v4144
  %4223 = vmatprep.subr.bf16.mxu0 0
  %4224 = vmatpush1.bf16.msra.mxu0 %v4145
  %4225 = vmatprep.subr.bf16.mxu0 0
  %4226 = vmatpush1.bf16.msra.mxu0 %v4146
  %4227 = vmatprep.mubr.bf16.mxu0 %v3901
  %4228 = vmatmul.mubr.bf16.gmra.mrb[0].mxu0 %v3900
  %v4229 = vpop.f32.mrb[0].mxu0
  %v4230 = vadd.f32 %v4001, %v4229
  %v4231 = vpop.f32.mrb[0].mxu0
  %v4232 = vpop.f32.mrb[0].mxu0
  %v4233 = vadd.f32 %v4001, %v4232
  %v4234 = vpop.f32.mrb[0].mxu0
  %4235 = vmatprep.mubr.bf16.mxu0 %v3905
  %4236 = vmatmul.mubr.bf16.gmra.mrb[0].mxu0 %v3904
  %v4237 = vpop.f32.mrb[0].mxu0
  %v4238 = vadd.f32 %v4001, %v4237
  %v4239 = vpop.f32.mrb[0].mxu0
  %v4240 = vpop.f32.mrb[0].mxu0
  %v4241 = vadd.f32 %v4001, %v4240
  %v4242 = vpop.f32.mrb[0].mxu0
  %4243 = vmatprep.mubr.bf16.mxu0 %v3909
  %4244 = vmatmul.mubr.bf16.gmra.mrb[0].mxu0 %v3908
  %v4245 = vpop.f32.mrb[0].mxu0
  %v4246 = vadd.f32 %v4001, %v4245
  %v4247 = vpop.f32.mrb[0].mxu0
  %v4248 = vpop.f32.mrb[0].mxu0
  %v4249 = vadd.f32 %v4001, %v4248
  %v4250 = vpop.f32.mrb[0].mxu0
  %4251 = vmatprep.mubr.bf16.mxu0 %v3913
  %4252 = vmatmul.mubr.bf16.gmra.mrb[0].mxu0 %v3912
  %v4253 = vpop.f32.mrb[0].mxu0
  %v4254 = vadd.f32 %v4001, %v4253
  %v4255 = vpop.f32.mrb[0].mxu0
  %v4256 = vpop.f32.mrb[0].mxu0
  %v4257 = vadd.f32 %v4001, %v4256
  %v4258 = vpop.f32.mrb[0].mxu0
  %4259 = vmatprep.mubr.bf16.mxu0 %v3917
  %4260 = vmatmul.mubr.bf16.gmra.mrb[0].mxu0 %v3916
  %v4261 = vpop.f32.mrb[0].mxu0
  %v4262 = vadd.f32 %v4001, %v4261
  %v4263 = vpop.f32.mrb[0].mxu0
  %v4264 = vpop.f32.mrb[0].mxu0
  %v4265 = vadd.f32 %v4001, %v4264
  %v4266 = vpop.f32.mrb[0].mxu0
  %4267 = vmatprep.mubr.bf16.mxu0 %v3921
  %4268 = vmatmul.mubr.bf16.gmra.mrb[0].mxu0 %v3920
  %v4269 = vpop.f32.mrb[0].mxu0
  %v4270 = vadd.f32 %v4001, %v4269
  %v4271 = vpop.f32.mrb[0].mxu0
  %v4272 = vpop.f32.mrb[0].mxu0
  %v4273 = vadd.f32 %v4001, %v4272
  %v4274 = vpop.f32.mrb[0].mxu0
  %4275 = vmatprep.mubr.bf16.mxu0 %v3925
  %4276 = vmatmul.mubr.bf16.gmra.mrb[0].mxu0 %v3924
  %v4277 = vpop.f32.mrb[0].mxu0
  %v4278 = vadd.f32 %v4001, %v4277
  %v4279 = vpop.f32.mrb[0].mxu0
  %v4280 = vpop.f32.mrb[0].mxu0
  %v4281 = vadd.f32 %v4001, %v4280
  %v4282 = vpop.f32.mrb[0].mxu0
  %4283 = vmatprep.mubr.bf16.mxu0 %v3929
  %4284 = vmatmul.mubr.bf16.gmra.mrb[0].mxu0 %v3928
  %v4285 = vpop.f32.mrb[0].mxu0
  %v4286 = vadd.f32 %v4001, %v4285
  %v4287 = vpop.f32.mrb[0].mxu0
  %v4288 = vpop.f32.mrb[0].mxu0
  %v4289 = vadd.f32 %v4001, %v4288
  %v4290 = vpop.f32.mrb[0].mxu0
  %4291 = vdwg.mxu0
  %4292 = vmatprep.subr.bf16.mxu0 0
  %4293 = vmatpush1.bf16.msra.mxu0 %v4147
  %4294 = vmatprep.subr.bf16.mxu0 0
  %4295 = vmatpush1.bf16.msra.mxu0 %v4148
  %4296 = vmatprep.subr.bf16.mxu0 0
  %4297 = vmatpush1.bf16.msra.mxu0 %v4149
  %4298 = vmatprep.subr.bf16.mxu0 0
  %4299 = vmatpush1.bf16.msra.mxu0 %v4150
  %4300 = vmatprep.subr.bf16.mxu0 0
  %4301 = vmatpush1.bf16.msra.mxu0 %v4151
  %4302 = vmatprep.subr.bf16.mxu0 0
  %4303 = vmatpush1.bf16.msra.mxu0 %v4152
  %4304 = vmatprep.subr.bf16.mxu0 0
  %4305 = vmatpush1.bf16.msra.mxu0 %v4153
  %4306 = vmatprep.subr.bf16.mxu0 0
  %4307 = vmatpush1.bf16.msra.mxu0 %v4154
  %4308 = vmatprep.subr.bf16.mxu0 0
  %4309 = vmatpush1.bf16.msra.mxu0 %v4155
  %4310 = vmatprep.subr.bf16.mxu0 0
  %4311 = vmatpush1.bf16.msra.mxu0 %v4156
  %4312 = vmatprep.subr.bf16.mxu0 0
  %4313 = vmatpush1.bf16.msra.mxu0 %v4157
  %4314 = vmatprep.subr.bf16.mxu0 0
  %4315 = vmatpush1.bf16.msra.mxu0 %v4158
  %4316 = vmatprep.subr.bf16.mxu0 0
  %4317 = vmatpush1.bf16.msra.mxu0 %v4159
  %4318 = vmatprep.subr.bf16.mxu0 0
  %4319 = vmatpush1.bf16.msra.mxu0 %v4160
  %4320 = vmatprep.subr.bf16.mxu0 0
  %4321 = vmatpush1.bf16.msra.mxu0 %v4161
  %4322 = vmatprep.subr.bf16.mxu0 0
  %4323 = vmatpush1.bf16.msra.mxu0 %v4162
  %4324 = vmatprep.mubr.bf16.mxu0 %v3903
  %4325 = vmatmul.mubr.bf16.gmra.mrb[0].mxu0 %v3902
  %v4326 = vpop.f32.mrb[0].mxu0
  %v4327 = vadd.f32 %v4230, %v4326
  %v4328 = vpop.f32.mrb[0].mxu0
  %v4329 = vpop.f32.mrb[0].mxu0
  %v4330 = vadd.f32 %v4233, %v4329
  %v4331 = vpop.f32.mrb[0].mxu0
  %4332 = vmatprep.mubr.bf16.mxu0 %v3907
  %4333 = vmatmul.mubr.bf16.gmra.mrb[0].mxu0 %v3906
  %v4334 = vpop.f32.mrb[0].mxu0
  %v4335 = vadd.f32 %v4238, %v4334
  %v4336 = vpop.f32.mrb[0].mxu0
  %v4337 = vpop.f32.mrb[0].mxu0
  %v4338 = vadd.f32 %v4241, %v4337
  %v4339 = vpop.f32.mrb[0].mxu0
  %4340 = vmatprep.mubr.bf16.mxu0 %v3911
  %4341 = vmatmul.mubr.bf16.gmra.mrb[0].mxu0 %v3910
  %v4342 = vpop.f32.mrb[0].mxu0
  %v4343 = vadd.f32 %v4246, %v4342
  %v4344 = vpop.f32.mrb[0].mxu0
  %v4345 = vpop.f32.mrb[0].mxu0
  %v4346 = vadd.f32 %v4249, %v4345
  %v4347 = vpop.f32.mrb[0].mxu0
  %4348 = vmatprep.mubr.bf16.mxu0 %v3915
  %4349 = vmatmul.mubr.bf16.gmra.mrb[0].mxu0 %v3914
  %v4350 = vpop.f32.mrb[0].mxu0
  %v4351 = vadd.f32 %v4254, %v4350
  %v4352 = vpop.f32.mrb[0].mxu0
  %v4353 = vpop.f32.mrb[0].mxu0
  %v4354 = vadd.f32 %v4257, %v4353
  %v4355 = vpop.f32.mrb[0].mxu0
  %4356 = vmatprep.mubr.bf16.mxu0 %v3919
  %4357 = vmatmul.mubr.bf16.gmra.mrb[0].mxu0 %v3918
  %v4358 = vpop.f32.mrb[0].mxu0
  %v4359 = vadd.f32 %v4262, %v4358
  %v4360 = vpop.f32.mrb[0].mxu0
  %v4361 = vpop.f32.mrb[0].mxu0
  %v4362 = vadd.f32 %v4265, %v4361
  %v4363 = vpop.f32.mrb[0].mxu0
  %4364 = vmatprep.mubr.bf16.mxu0 %v3923
  %4365 = vmatmul.mubr.bf16.gmra.mrb[0].mxu0 %v3922
  %v4366 = vpop.f32.mrb[0].mxu0
  %v4367 = vadd.f32 %v4270, %v4366
  %v4368 = vpop.f32.mrb[0].mxu0
  %v4369 = vpop.f32.mrb[0].mxu0
  %v4370 = vadd.f32 %v4273, %v4369
  %v4371 = vpop.f32.mrb[0].mxu0
  %4372 = vmatprep.mubr.bf16.mxu0 %v3927
  %4373 = vmatmul.mubr.bf16.gmra.mrb[0].mxu0 %v3926
  %v4374 = vpop.f32.mrb[0].mxu0
  %v4375 = vadd.f32 %v4278, %v4374
  %v4376 = vpop.f32.mrb[0].mxu0
  %v4377 = vpop.f32.mrb[0].mxu0
  %v4378 = vadd.f32 %v4281, %v4377
  %v4379 = vpop.f32.mrb[0].mxu0
  %4380 = vmatprep.mubr.bf16.mxu0 %v3931
  %4381 = vmatmul.mubr.bf16.gmra.mrb[0].mxu0 %v3930
  %v4382 = vpop.f32.mrb[0].mxu0
  %v4383 = vadd.f32 %v4286, %v4382
  %v4384 = vpop.f32.mrb[0].mxu0
  %v4385 = vpop.f32.mrb[0].mxu0
  %v4386 = vadd.f32 %v4289, %v4385
  %v4387 = vpop.f32.mrb[0].mxu0
  %4388 = vdwg.mxu0
  %4389 = vmax.xlane.f32.xlu0 %v4327
  %v4390 = vpop.xlane.xlu0 %4389
  %4391 = vmax.xlane.f32.xlu0 %v4330
  %v4392 = vpop.xlane.xlu0 %4391
  %4393 = vmax.xlane.f32.xlu0 %v4335
  %v4394 = vpop.xlane.xlu0 %4393
  %4395 = vmax.xlane.f32.xlu0 %v4338
  %v4396 = vpop.xlane.xlu0 %4395
  %4397 = vmax.xlane.f32.xlu0 %v4343
  %v4398 = vpop.xlane.xlu0 %4397
  %4399 = vmax.xlane.f32.xlu0 %v4346
  %v4400 = vpop.xlane.xlu0 %4399
  %4401 = vmax.xlane.f32.xlu0 %v4351
  %v4402 = vpop.xlane.xlu0 %4401
  %4403 = vmax.xlane.f32.xlu0 %v4354
  %v4404 = vpop.xlane.xlu0 %4403
  %4405 = vmax.xlane.f32.xlu0 %v4359
  %v4406 = vpop.xlane.xlu0 %4405
  %4407 = vmax.xlane.f32.xlu0 %v4362
  %v4408 = vpop.xlane.xlu0 %4407
  %4409 = vmax.xlane.f32.xlu0 %v4367
  %v4410 = vpop.xlane.xlu0 %4409
  %4411 = vmax.xlane.f32.xlu0 %v4370
  %v4412 = vpop.xlane.xlu0 %4411
  %4413 = vmax.xlane.f32.xlu0 %v4375
  %v4414 = vpop.xlane.xlu0 %4413
  %4415 = vmax.xlane.f32.xlu0 %v4378
  %v4416 = vpop.xlane.xlu0 %4415
  %4417 = vmax.xlane.f32.xlu0 %v4383
  %v4418 = vpop.xlane.xlu0 %4417
  %4419 = vmax.xlane.f32.xlu0 %v4386
  %v4420 = vpop.xlane.xlu0 %4419
  %v4421 = vsub.f32 %v4327, %v4390
  %v4422 = vsub.f32 %v4330, %v4392
  %v4423 = vsub.f32 %v4335, %v4394
  %v4424 = vsub.f32 %v4338, %v4396
  %v4425 = vsub.f32 %v4343, %v4398
  %v4426 = vsub.f32 %v4346, %v4400
  %v4427 = vsub.f32 %v4351, %v4402
  %v4428 = vsub.f32 %v4354, %v4404
  %v4429 = vsub.f32 %v4359, %v4406
  %v4430 = vsub.f32 %v4362, %v4408
  %v4431 = vsub.f32 %v4367, %v4410
  %v4432 = vsub.f32 %v4370, %v4412
  %v4433 = vsub.f32 %v4375, %v4414
  %v4434 = vsub.f32 %v4378, %v4416
  %v4435 = vsub.f32 %v4383, %v4418
  %v4436 = vsub.f32 %v4386, %v4420
  %v4437 = vmul.f32 %v4421, 1.442695
  %v4438 = vpow.pop %v4437
  %v4439 = vmul.f32 %v4422, 1.442695
  %v4440 = vpow.pop %v4439
  %v4441 = vmul.f32 %v4423, 1.442695
  %v4442 = vpow.pop %v4441
  %v4443 = vmul.f32 %v4424, 1.442695
  %v4444 = vpow.pop %v4443
  %v4445 = vmul.f32 %v4425, 1.442695
  %v4446 = vpow.pop %v4445
  %v4447 = vmul.f32 %v4426, 1.442695
  %v4448 = vpow.pop %v4447
  %v4449 = vmul.f32 %v4427, 1.442695
  %v4450 = vpow.pop %v4449
  %v4451 = vmul.f32 %v4428, 1.442695
  %v4452 = vpow.pop %v4451
  %v4453 = vmul.f32 %v4429, 1.442695
  %v4454 = vpow.pop %v4453
  %v4455 = vmul.f32 %v4430, 1.442695
  %v4456 = vpow.pop %v4455
  %v4457 = vmul.f32 %v4431, 1.442695
  %v4458 = vpow.pop %v4457
  %v4459 = vmul.f32 %v4432, 1.442695
  %v4460 = vpow.pop %v4459
  %v4461 = vmul.f32 %v4433, 1.442695
  %v4462 = vpow.pop %v4461
  %v4463 = vmul.f32 %v4434, 1.442695
  %v4464 = vpow.pop %v4463
  %v4465 = vmul.f32 %v4435, 1.442695
  %v4466 = vpow.pop %v4465
  %v4467 = vmul.f32 %v4436, 1.442695
  %v4468 = vpow.pop %v4467
  %4469 = vadd.xlane.f32.xlu0 %v4438
  %v4470 = vpop.xlane.xlu0 %4469
  %4471 = vadd.xlane.f32.xlu0 %v4440
  %v4472 = vpop.xlane.xlu0 %4471
  %4473 = vadd.xlane.f32.xlu0 %v4442
  %v4474 = vpop.xlane.xlu0 %4473
  %4475 = vadd.xlane.f32.xlu0 %v4444
  %v4476 = vpop.xlane.xlu0 %4475
  %4477 = vadd.xlane.f32.xlu0 %v4446
  %v4478 = vpop.xlane.xlu0 %4477
  %4479 = vadd.xlane.f32.xlu0 %v4448
  %v4480 = vpop.xlane.xlu0 %4479
  %4481 = vadd.xlane.f32.xlu0 %v4450
  %v4482 = vpop.xlane.xlu0 %4481
  %4483 = vadd.xlane.f32.xlu0 %v4452
  %v4484 = vpop.xlane.xlu0 %4483
  %4485 = vadd.xlane.f32.xlu0 %v4454
  %v4486 = vpop.xlane.xlu0 %4485
  %4487 = vadd.xlane.f32.xlu0 %v4456
  %v4488 = vpop.xlane.xlu0 %4487
  %4489 = vadd.xlane.f32.xlu0 %v4458
  %v4490 = vpop.xlane.xlu0 %4489
  %4491 = vadd.xlane.f32.xlu0 %v4460
  %v4492 = vpop.xlane.xlu0 %4491
  %4493 = vadd.xlane.f32.xlu0 %v4462
  %v4494 = vpop.xlane.xlu0 %4493
  %4495 = vadd.xlane.f32.xlu0 %v4464
  %v4496 = vpop.xlane.xlu0 %4495
  %4497 = vadd.xlane.f32.xlu0 %v4466
  %v4498 = vpop.xlane.xlu0 %4497
  %4499 = vadd.xlane.f32.xlu0 %v4468
  %v4500 = vpop.xlane.xlu0 %4499
  %v4501 = vlog2.pop %v4470
  %v4502 = vmul.f32 %v4501, 0.6931472
  %v4503 = vlog2.pop %v4472
  %v4504 = vmul.f32 %v4503, 0.6931472
  %v4505 = vlog2.pop %v4474
  %v4506 = vmul.f32 %v4505, 0.6931472
  %v4507 = vlog2.pop %v4476
  %v4508 = vmul.f32 %v4507, 0.6931472
  %v4509 = vlog2.pop %v4478
  %v4510 = vmul.f32 %v4509, 0.6931472
  %v4511 = vlog2.pop %v4480
  %v4512 = vmul.f32 %v4511, 0.6931472
  %v4513 = vlog2.pop %v4482
  %v4514 = vmul.f32 %v4513, 0.6931472
  %v4515 = vlog2.pop %v4484
  %v4516 = vmul.f32 %v4515, 0.6931472
  %v4517 = vlog2.pop %v4486
  %v4518 = vmul.f32 %v4517, 0.6931472
  %v4519 = vlog2.pop %v4488
  %v4520 = vmul.f32 %v4519, 0.6931472
  %v4521 = vlog2.pop %v4490
  %v4522 = vmul.f32 %v4521, 0.6931472
  %v4523 = vlog2.pop %v4492
  %v4524 = vmul.f32 %v4523, 0.6931472
  %v4525 = vlog2.pop %v4494
  %v4526 = vmul.f32 %v4525, 0.6931472
  %v4527 = vlog2.pop %v4496
  %v4528 = vmul.f32 %v4527, 0.6931472
  %v4529 = vlog2.pop %v4498
  %v4530 = vmul.f32 %v4529, 0.6931472
  %v4531 = vlog2.pop %v4500
  %v4532 = vmul.f32 %v4531, 0.6931472
  %v4533 = vsub.f32 %v4421, %v4502
  %v4534 = vsub.f32 %v4422, %v4504
  %v4535 = vsub.f32 %v4423, %v4506
  %v4536 = vsub.f32 %v4424, %v4508
  %v4537 = vsub.f32 %v4425, %v4510
  %v4538 = vsub.f32 %v4426, %v4512
  %v4539 = vsub.f32 %v4427, %v4514
  %v4540 = vsub.f32 %v4428, %v4516
  %v4541 = vsub.f32 %v4429, %v4518
  %v4542 = vsub.f32 %v4430, %v4520
  %v4543 = vsub.f32 %v4431, %v4522
  %v4544 = vsub.f32 %v4432, %v4524
  %v4545 = vsub.f32 %v4433, %v4526
  %v4546 = vsub.f32 %v4434, %v4528
  %v4547 = vsub.f32 %v4435, %v4530
  %v4548 = vsub.f32 %v4436, %v4532
  %4549 = vst [vmem:[%s7] sm:$0xff] %v4533
  %4550 = vst [vmem:[%s7 + $0x8] sm:$0xff] %v4534
  %4551 = vst [vmem:[%s7 + $0x10] sm:$0xff] %v4535
  %4552 = vst [vmem:[%s7 + $0x18] sm:$0xff] %v4536
  %4553 = vst [vmem:[%s7 + $0x20] sm:$0xff] %v4537
  %4554 = vst [vmem:[%s7 + $0x28] sm:$0xff] %v4538
  %4555 = vst [vmem:[%s7 + $0x30] sm:$0xff] %v4539
  %4556 = vst [vmem:[%s7 + $0x38] sm:$0xff] %v4540
  %4557 = vst [vmem:[%s7 + $0x40] sm:$0xff] %v4541
  %4558 = vst [vmem:[%s7 + $0x48] sm:$0xff] %v4542
  %4559 = vst [vmem:[%s7 + $0x50] sm:$0xff] %v4543
  %4560 = vst [vmem:[%s7 + $0x58] sm:$0xff] %v4544
  %4561 = vst [vmem:[%s7 + $0x60] sm:$0xff] %v4545
  %4562 = vst [vmem:[%s7 + $0x68] sm:$0xff] %v4546
  %4563 = vst [vmem:[%s7 + $0x70] sm:$0xff] %v4547
  %4564 = vst [vmem:[%s7 + $0x78] sm:$0xff] %v4548
  // Predicated region
  $region30: #{mlp_forward.1} parent=0 // pred_check
    _
  $region31: #{mlp_forward.1} parent=0 // pred_check_branch
    %4566 = sbr.rel (0) target = $region33
  $region32: #{mlp_forward.1} parent=0 // pred_region
    _
  $region33: #{mlp_forward.1} parent=0 // pred_fallthru
    _
  // Predicated region
  $region34: #{mlp_forward.1} parent=0 // pred_check
    _
  $region35: #{mlp_forward.1} parent=0 // pred_check_branch
    %4568 = sbr.rel (0) target = $region37
  $region36: #{mlp_forward.1} parent=0 // pred_region
    _
  $region37: #{mlp_forward.1} parent=0 // pred_fallthru
    _

</llo_original>
